<compile_context>
chip_gen: v6e
topology: v6e:2x2x1
jax: 0.10.0
libtpu: 0.0.40
codegen_flags: <defaults>
</compile_context>

<pallas_src>
import numpy as np
import jax
import jax.numpy as jnp
from jax import lax
from jax.experimental import pallas as pl
from jax.experimental.pallas import tpu as pltpu


LANE = 128      # pad hidden/gate feature dims to a multiple of this
SUBLANE = 8     # pad batch to a multiple of this
MAX_UNROLL = 8  # fori_loop unroll cap (bounded live ranges)


def _round_up(x, m):
    return ((x + m - 1) // m) * m


def _vmem_capacity_bytes():
    """Queried per generation: 128 MiB (v5e/v6e), 64 MiB per core (v7x)."""
    try:
        cap = int(getattr(pltpu.get_tpu_info(), "vmem_capacity_bytes", 0))
        if cap > 0:
            return cap
    except Exception:
        pass
    return 64 << 20   # conservative default (v7x per-core VMEM)


def _pick_t_chunk(T, per_step_bytes, fixed_bytes, budget, cap=None):
    """Largest divisor of T whose VMEM footprint fits the budget (bigger is
    better: fewer grid steps, and on v5e the per-chunk projection GEMM must
    dominate the gates writeback / pipeline overhead)."""
    best = 1
    for d in range(1, T + 1):
        if T % d != 0:
            continue
        if cap is not None and d > cap:
            continue
        if fixed_bytes + d * per_step_bytes <= budget:
            best = d
    return best


# ----------------------------- Pallas kernel ------------------------------- #

def _make_fused_lstm_kernel(num_layers, Tc, Bp, Hp, cdtype):
    """Fused kernel: all LSTM layers + FC head; grid = time chunks.

    Argument order (inputs, outputs, scratch):
      x_ref                     (Tc*Bp, D)    layer-0 input chunk, time-major
      wih_0..wih_{L-1}          (Din, 4Hp)    W_ih^T, gate-slot padded, cdtype
      whh_0..whh_{L-1}          (Hp,  4Hp)    W_hh^T, gate-slot padded, cdtype
      b_0 .. b_{L-1}            (1,   4Hp)    b_ih + b_hh, f32
      wfc                       (Hp, LANE)    fc weight (col 0 real), f32
      bfc                       (1,  LANE)    fc bias   (col 0 real), f32
      out_ref                   (Bp, LANE)    output (col 0 real), f32
      hseq_ref  [VMEM scratch]  (Tc*Bp, Hp)   this chunk's hidden seq, cdtype
      gates_ref [VMEM scratch]  (Tc*Bp, 4Hp)  hoisted input projection, f32
      h_st, c_st [VMEM scratch] (L, Bp, Hp)   per-layer carry across chunks, f32
    """
    unroll = max(1, min(Tc, MAX_UNROLL))

    def kernel(x_ref, *args):
        L = num_layers
        wih_refs = args[0:L]
        whh_refs = args[L:2 * L]
        b_refs = args[2 * L:3 * L]
        wfc_ref = args[3 * L]
        bfc_ref = args[3 * L + 1]
        out_ref = args[3 * L + 2]
        hseq_ref = args[3 * L + 3]
        gates_ref = args[3 * L + 4]
        h_st = args[3 * L + 5]
        c_st = args[3 * L + 6]

        g = pl.program_id(0)
        last = pl.num_programs(0) - 1

        @pl.when(g == 0)
        def _():
            h_st[...] = jnp.zeros_like(h_st)
            c_st[...] = jnp.zeros_like(c_st)

        h_out = None
        for layer in range(L):
            # Hoisted input projection: one MXU GEMM per layer per chunk
            # (bias folded in once, outside the recurrence).
            src = x_ref[...].astype(cdtype) if layer == 0 else hseq_ref[...]
            gates_ref[...] = (
                jnp.dot(src, wih_refs[layer][...],
                        preferred_element_type=jnp.float32)
                + b_refs[layer][...])

            whh_ref = whh_refs[layer]
            write_seq = layer != L - 1      # last layer: only h_T is needed

            def step(t, carry, whh_ref=whh_ref, write_seq=write_seq):
                h, c = carry                # f32 state (VPU/EUP stays f32)
                row0 = pl.multiple_of(t * Bp, Bp)
                pre = (gates_ref[pl.ds(row0, Bp), :]
                       + jnp.dot(h.astype(cdtype), whh_ref[...],
                                 preferred_element_type=jnp.float32))
                i_g = jax.nn.sigmoid(pre[:, 0 * Hp:1 * Hp])
                f_g = jax.nn.sigmoid(pre[:, 1 * Hp:2 * Hp])
                g_g = jnp.tanh(pre[:, 2 * Hp:3 * Hp])
                o_g = jax.nn.sigmoid(pre[:, 3 * Hp:4 * Hp])
                c_new = f_g * c + i_g * g_g
                h_new = o_g * jnp.tanh(c_new)
                if write_seq:
                    hseq_ref[pl.ds(row0, Bp), :] = h_new.astype(cdtype)
                return (h_new, c_new)

            carry0 = (h_st[layer], c_st[layer])        # carried across chunks
            h_f, c_f = lax.fori_loop(0, Tc, step, carry0, unroll=unroll)
            h_st[layer] = h_f
            c_st[layer] = c_f
            h_out = h_f

        # Fused FC head on the final hidden state (lane-dense store), last
        # chunk only; the output block is VMEM-resident across the grid.
        @pl.when(g == last)
        def _():
            out_ref[...] = (jnp.dot(h_out, wfc_ref[...],
                                    preferred_element_type=jnp.float32)
                            + bfc_ref[...])

    return kernel


# ------------------------------ Wrapper ------------------------------------ #

def _pad_gate_cols(m, H, Hp, rows):
    """(rows, 4H) -> (rows, 4Hp); gate k's H columns land at [k*Hp, k*Hp+H)."""
    m = jnp.asarray(m, jnp.float32)
    out = jnp.zeros((rows, 4 * Hp), jnp.float32)
    R = m.shape[0]
    for k in range(4):
        out = out.at[:R, k * Hp:k * Hp + H].set(m[:, k * H:(k + 1) * H])
    return out


def lstm_forward(x, params, *, matmul_dtype=jnp.bfloat16, t_chunk_cap=None):
    """x: (B, T, input_size) -> (B, 1); same semantics as the PyTorch module."""
    B, T, D = x.shape
    H = params["layers"][0][1].shape[1]
    L = len(params["layers"])
    Bp = _round_up(B, SUBLANE)
    Hp = _round_up(H, LANE)
    Np = LANE                          # padded FC-output width (lane-dense)
    csize = jnp.dtype(matmul_dtype).itemsize

    # ---- explicit VMEM budgeting: pick T_chunk + vmem_limit per generation --
    cap = _vmem_capacity_bytes()
    fixed = 0
    for l in range(L):
        din = D if l == 0 else Hp
        fixed += (din + Hp) * 4 * Hp * csize      # W_ih^T + W_hh^T
        fixed += 4 * Hp * 4                       # fused bias (f32)
    fixed += Hp * Np * 4 + Np * 4                 # fc weight + bias (f32)
    fixed += 2 * L * Bp * Hp * 4                  # h/c carry scratch (f32)
    fixed += 2 * Bp * Np * 4                      # output block
    per_step = Bp * (2 * D * 4            # streamed x chunk, double-buffered
                     + Hp * csize         # hseq scratch
                     + 4 * Hp * 4)        # hoisted gates scratch (f32)
    budget = int(0.70 * cap)
    Tc = _pick_t_chunk(T, per_step, fixed, budget, cap=t_chunk_cap)
    needed = fixed + Tc * per_step
    vmem_limit = int(min(cap, max(2 * needed, 32 << 20)))
    num_chunks = T // Tc

    # ---- layer-0 input: time-major, batch-padded, feature dim UNPADDED ------
    # (full-array last dim is legal; only W_ih is gate-slot padded)
    x_tm = jnp.zeros((T, Bp, D), jnp.float32)
    x_tm = x_tm.at[:, :B, :].set(jnp.transpose(x.astype(jnp.float32), (1, 0, 2)))
    x_flat = x_tm.reshape(T * Bp, D)
    # TODO(synk): fold this transpose into the layer-0 BlockSpec index_map once
    # a batch grid axis exists (v7x megacore split).

    wih_list, whh_list, b_list = [], [], []
    for l, (w_ih, w_hh, b_ih, b_hh) in enumerate(params["layers"]):
        din = D if l == 0 else Hp
        wih_list.append(_pad_gate_cols(w_ih.T, H, Hp, din).astype(matmul_dtype))
        whh_list.append(_pad_gate_cols(w_hh.T, H, Hp, Hp).astype(matmul_dtype))
        b_list.append(_pad_gate_cols((b_ih + b_hh)[None, :], H, Hp, 1))  # f32
    wfc = jnp.zeros((Hp, Np), jnp.float32).at[:H, 0].set(params["fc_w"][0, :])
    bfc = jnp.zeros((1, Np), jnp.float32).at[0, 0].set(params["fc_b"][0])

    kernel = _make_fused_lstm_kernel(L, Tc, Bp, Hp, matmul_dtype)
    vmem = pltpu.MemorySpace.VMEM
    weight_specs = [pl.BlockSpec(memory_space=vmem)] * (3 * L + 2)

    out_p = pl.pallas_call(
        kernel,
        out_shape=jax.ShapeDtypeStruct((Bp, Np), jnp.float32),
        grid=(num_chunks,),
        in_specs=[pl.BlockSpec((Tc * Bp, D), lambda g: (g, 0))] + weight_specs,
        out_specs=pl.BlockSpec((Bp, Np), lambda g: (0, 0)),
        scratch_shapes=[
            pltpu.VMEM((Tc * Bp, Hp), matmul_dtype),     # hseq (per chunk)
            pltpu.VMEM((Tc * Bp, 4 * Hp), jnp.float32),  # hoisted gates
            pltpu.VMEM((L, Bp, Hp), jnp.float32),        # h carry across chunks
            pltpu.VMEM((L, Bp, Hp), jnp.float32),        # c carry across chunks
        ],
        compiler_params=pltpu.CompilerParams(
            dimension_semantics=("arbitrary",),          # chunks are sequential
            vmem_limit_bytes=vmem_limit),
    )(x_flat, *wih_list, *whh_list, *b_list, wfc, bfc)
    return out_p[:B, :1]


lstm_forward_jit = jax.jit(lstm_forward,
                           static_argnames=("matmul_dtype", "t_chunk_cap"))


# --------------------------- Parameter init -------------------------------- #

def init_params(key, input_size, hidden_size, num_layers):
    """Deterministic init matching PyTorch shapes: U(-1/sqrt(H), 1/sqrt(H))."""
    bound = 1.0 / np.sqrt(hidden_size)
    layers = []
    for l in range(num_layers):
        d_in = input_size if l == 0 else hidden_size
        key, k1, k2, k3, k4 = jax.random.split(key, 5)
        w_ih = jax.random.uniform(k1, (4 * hidden_size, d_in), jnp.float32, -bound, bound)
        w_hh = jax.random.uniform(k2, (4 * hidden_size, hidden_size), jnp.float32, -bound, bound)
        b_ih = jax.random.uniform(k3, (4 * hidden_size,), jnp.float32, -bound, bound)
        b_hh = jax.random.uniform(k4, (4 * hidden_size,), jnp.float32, -bound, bound)
        layers.append((w_ih, w_hh, b_ih, b_hh))
    key, k5, k6 = jax.random.split(key, 3)
    fc_w = jax.random.uniform(k5, (1, hidden_size), jnp.float32, -bound, bound)
    fc_b = jax.random.uniform(k6, (1,), jnp.float32, -bound, bound)
    return {"layers": layers, "fc_w": fc_w, "fc_b": fc_b}


# ------------------------- Pure-JAX reference ------------------------------ #

def lstm_reference(x, params):
    B = x.shape[0]
    H = params["layers"][0][1].shape[1]
    out = x.astype(jnp.float32)
    for (w_ih, w_hh, b_ih, b_hh) in params["layers"]:
        h = jnp.zeros((B, H), jnp.float32)
        c = jnp.zeros((B, H), jnp.float32)
        hs = []
        for t in range(out.shape[1]):
            g = out[:, t, :] @ w_ih.T + b_ih + h @ w_hh.T + b_hh
            i = jax.nn.sigmoid(g[:, :H])
            f = jax.nn.sigmoid(g[:, H:2 * H])
            gg = jnp.tanh(g[:, 2 * H:3 * H])
            o = jax.nn.sigmoid(g[:, 3 * H:])
            c = f * c + i * gg
            h = o * jnp.tanh(c)
            hs.append(h)
        out = jnp.stack(hs, axis=1)
    return out[:, -1, :] @ params["fc_w"].T + params["fc_b"]


# --------------------------------- Main ------------------------------------ #

if __name__ == "__main__":
    input_size = 4
    hidden_size = 32
    num_layers = 2
    batch = 2
    seq = 8

    key = jax.random.PRNGKey(0)
    key, kx, kp = jax.random.split(key, 3)
    x = jax.random.normal(kx, (batch, seq, input_size), jnp.float32)
    params = init_params(kp, input_size, hidden_size, num_layers)
    ref = lstm_reference(x, params)

    # 1) exact-precision path, forced multi-chunk grid: exercises the
    #    cross-chunk h/c carry + pl.when init/finalize. Tight tolerance.
    out_f32 = lstm_forward_jit(x, params, matmul_dtype=jnp.float32,
                               t_chunk_cap=4)
    out_f32 = jax.block_until_ready(out_f32)
    np.testing.assert_allclose(np.asarray(out_f32), np.asarray(ref),
                               rtol=1e-5, atol=1e-5)

    # 2) default path: bf16 matmul operands (f32 accumulation, f32 state /
    #    elementwise). Looser tolerance from bf16 weight/operand rounding.
    out_bf16 = jax.block_until_ready(lstm_forward_jit(x, params))
    np.testing.assert_allclose(np.asarray(out_bf16), np.asarray(ref),
                               rtol=5e-2, atol=5e-2)

    assert out_f32.shape == (batch, 1) and out_bf16.shape == (batch, 1)
    print("KERNEL_OK")
</pallas_src>

<mosaic_0001>
module attributes {stable_mosaic.version = 11 : i64} {
  func.func @kernel(%arg0: i32, %arg1: memref<32x4xf32, #tpu.memory_space<vmem>>, %arg2: memref<4x512xf32, #tpu.memory_space<vmem>>, %arg3: memref<128x512xf32, #tpu.memory_space<vmem>>, %arg4: memref<128x512xf32, #tpu.memory_space<vmem>>, %arg5: memref<128x512xf32, #tpu.memory_space<vmem>>, %arg6: memref<1x512xf32, #tpu.memory_space<vmem>>, %arg7: memref<1x512xf32, #tpu.memory_space<vmem>>, %arg8: memref<128x128xf32, #tpu.memory_space<vmem>>, %arg9: memref<1x128xf32, #tpu.memory_space<vmem>>, %arg10: memref<8x128xf32, #tpu.memory_space<vmem>>, %arg11: memref<32x128xf32, #tpu.memory_space<vmem>>, %arg12: memref<32x512xf32, #tpu.memory_space<vmem>>, %arg13: memref<2x8x128xf32, #tpu.memory_space<vmem>>, %arg14: memref<2x8x128xf32, #tpu.memory_space<vmem>>) attributes {dimension_semantics = [#tpu.dimension_semantics<arbitrary>], iteration_bounds = array<i64: 2>, scalar_prefetch = 0 : i64, scratch_operands = 4 : i64, tpu.core_type = #tpu.core_type<tc>, window_params = [{transform_indices = @transform_0, window_bounds = array<i64: 32, 4>}, {pipeline_mode = #tpu.pipeline_mode<synchronous>, transform_indices = @transform_1, window_bounds = array<i64: 4, 512>}, {pipeline_mode = #tpu.pipeline_mode<synchronous>, transform_indices = @transform_2, window_bounds = array<i64: 128, 512>}, {pipeline_mode = #tpu.pipeline_mode<synchronous>, transform_indices = @transform_3, window_bounds = array<i64: 128, 512>}, {pipeline_mode = #tpu.pipeline_mode<synchronous>, transform_indices = @transform_4, window_bounds = array<i64: 128, 512>}, {pipeline_mode = #tpu.pipeline_mode<synchronous>, transform_indices = @transform_5, window_bounds = array<i64: 1, 512>}, {pipeline_mode = #tpu.pipeline_mode<synchronous>, transform_indices = @transform_6, window_bounds = array<i64: 1, 512>}, {pipeline_mode = #tpu.pipeline_mode<synchronous>, transform_indices = @transform_7, window_bounds = array<i64: 128, 128>}, {pipeline_mode = #tpu.pipeline_mode<synchronous>, transform_indices = @transform_8, window_bounds = array<i64: 1, 128>}, {pipeline_mode = #tpu.pipeline_mode<synchronous>, transform_indices = @transform_9, window_bounds = array<i64: 8, 128>}]} {
    %c0_i32 = arith.constant 0 : i32
    %0 = arith.cmpi eq, %arg0, %c0_i32 : i32
    %1 = arith.extui %0 : i1 to i32
    %c0_i32_0 = arith.constant 0 : i32
    %2 = arith.cmpi ne, %1, %c0_i32_0 : i32
    scf.if %2 {
      %cst_115 = arith.constant 0.000000e+00 : f32
      %304 = vector.broadcast %cst_115 : f32 to vector<2x8x128xf32>
      %c0_116 = arith.constant 0 : index
      %c0_117 = arith.constant 0 : index
      %c0_118 = arith.constant 0 : index
      %305 = vector.load %arg13[%c0_116, %c0_117, %c0_118] : memref<2x8x128xf32, #tpu.memory_space<vmem>>, vector<2x8x128xf32>
      tpu.vector_store %arg13[%c0_116, %c0_117, %c0_118], %304 {strides = array<i32>} : memref<2x8x128xf32, #tpu.memory_space<vmem>>, vector<2x8x128xf32>,
      %cst_119 = arith.constant 0.000000e+00 : f32
      %306 = vector.broadcast %cst_119 : f32 to vector<2x8x128xf32>
      %c0_120 = arith.constant 0 : index
      %c0_121 = arith.constant 0 : index
      %c0_122 = arith.constant 0 : index
      %307 = vector.load %arg14[%c0_120, %c0_121, %c0_122] : memref<2x8x128xf32, #tpu.memory_space<vmem>>, vector<2x8x128xf32>
      tpu.vector_store %arg14[%c0_120, %c0_121, %c0_122], %306 {strides = array<i32>} : memref<2x8x128xf32, #tpu.memory_space<vmem>>, vector<2x8x128xf32>,
    } else {
    }
    %c0 = arith.constant 0 : index
    %c0_1 = arith.constant 0 : index
    %3 = vector.load %arg1[%c0, %c0_1] : memref<32x4xf32, #tpu.memory_space<vmem>>, vector<32x4xf32>
    %c0_2 = arith.constant 0 : index
    %c0_3 = arith.constant 0 : index
    %4 = vector.load %arg2[%c0_2, %c0_3] : memref<4x512xf32, #tpu.memory_space<vmem>>, vector<4x512xf32>
    %cst = arith.constant dense<0.000000e+00> : vector<32x512xf32>
    %5 = tpu.matmul %3, %4, %cst {dimension_numbers = #tpu.dot_dimension_numbers<[1], [0], [0], [1], [0, 0, 1, 1], [], []>} : vector<32x4xf32>, vector<4x512xf32>, vector<32x512xf32> -> vector<32x512xf32>
    %c0_4 = arith.constant 0 : index
    %c0_5 = arith.constant 0 : index
    %6 = vector.load %arg6[%c0_4, %c0_5] : memref<1x512xf32, #tpu.memory_space<vmem>>, vector<1x512xf32>
    %7 = vector.broadcast %6 : vector<1x512xf32> to vector<32x512xf32>
    %8 = arith.addf %5, %7 : vector<32x512xf32>
    %c0_6 = arith.constant 0 : index
    %c0_7 = arith.constant 0 : index
    %9 = vector.load %arg12[%c0_6, %c0_7] : memref<32x512xf32, #tpu.memory_space<vmem>>, vector<32x512xf32>
    tpu.vector_store %arg12[%c0_6, %c0_7], %8 {strides = array<i32>} : memref<32x512xf32, #tpu.memory_space<vmem>>, vector<32x512xf32>,
    %c0_8 = arith.constant 0 : index
    %c0_9 = arith.constant 0 : index
    %c0_10 = arith.constant 0 : index
    %10 = vector.load %arg13[%c0_8, %c0_9, %c0_10] : memref<2x8x128xf32, #tpu.memory_space<vmem>>, vector<1x8x128xf32>
    %11 = vector.shape_cast %10 : vector<1x8x128xf32> to vector<8x128xf32>
    %c0_11 = arith.constant 0 : index
    %c0_12 = arith.constant 0 : index
    %c0_13 = arith.constant 0 : index
    %12 = vector.load %arg14[%c0_11, %c0_12, %c0_13] : memref<2x8x128xf32, #tpu.memory_space<vmem>>, vector<1x8x128xf32>
    %13 = vector.shape_cast %12 : vector<1x8x128xf32> to vector<8x128xf32>
    %c0_i32_14 = arith.constant 0 : i32
    %c8_i32 = arith.constant 8 : i32
    %14 = arith.muli %c0_i32_14, %c8_i32 : i32
    %15 = tpu.assume_multiple %14, 8 : i32
    %16 = arith.index_cast %15 : i32 to index
    %c0_15 = arith.constant 0 : index
    %17 = vector.load %arg12[%16, %c0_15] : memref<32x512xf32, #tpu.memory_space<vmem>>, vector<8x512xf32>
    %c0_16 = arith.constant 0 : index
    %c0_17 = arith.constant 0 : index
    %18 = vector.load %arg4[%c0_16, %c0_17] : memref<128x512xf32, #tpu.memory_space<vmem>>, vector<128x512xf32>
    %cst_18 = arith.constant dense<0.000000e+00> : vector<8x512xf32>
    %19 = tpu.matmul %11, %18, %cst_18 {dimension_numbers = #tpu.dot_dimension_numbers<[1], [0], [0], [1], [0, 0, 1, 1], [], []>} : vector<8x128xf32>, vector<128x512xf32>, vector<8x512xf32> -> vector<8x512xf32>
    %20 = arith.addf %17, %19 : vector<8x512xf32>
    %21 = vector.extract_strided_slice %20 {offsets = [0, 0], sizes = [8, 128], strides = [1, 1]} : vector<8x512xf32> to vector<8x128xf32>
    %22 = arith.negf %21 : vector<8x128xf32>
    %23 = math.exp %22 : vector<8x128xf32>
    %cst_19 = arith.constant 1.000000e+00 : f32
    %24 = vector.broadcast %cst_19 : f32 to vector<8x128xf32>
    %25 = arith.addf %24, %23 : vector<8x128xf32>
    %26 = arith.divf %24, %25 : vector<8x128xf32>
    %27 = vector.extract_strided_slice %20 {offsets = [0, 128], sizes = [8, 128], strides = [1, 1]} : vector<8x512xf32> to vector<8x128xf32>
    %28 = arith.negf %27 : vector<8x128xf32>
    %29 = math.exp %28 : vector<8x128xf32>
    %cst_20 = arith.constant 1.000000e+00 : f32
    %30 = vector.broadcast %cst_20 : f32 to vector<8x128xf32>
    %31 = arith.addf %30, %29 : vector<8x128xf32>
    %32 = arith.divf %30, %31 : vector<8x128xf32>
    %33 = vector.extract_strided_slice %20 {offsets = [0, 256], sizes = [8, 128], strides = [1, 1]} : vector<8x512xf32> to vector<8x128xf32>
    %34 = math.tanh %33 : vector<8x128xf32>
    %35 = vector.extract_strided_slice %20 {offsets = [0, 384], sizes = [8, 128], strides = [1, 1]} : vector<8x512xf32> to vector<8x128xf32>
    %36 = arith.negf %35 : vector<8x128xf32>
    %37 = math.exp %36 : vector<8x128xf32>
    %cst_21 = arith.constant 1.000000e+00 : f32
    %38 = vector.broadcast %cst_21 : f32 to vector<8x128xf32>
    %39 = arith.addf %38, %37 : vector<8x128xf32>
    %40 = arith.divf %38, %39 : vector<8x128xf32>
    %41 = arith.mulf %32, %13 : vector<8x128xf32>
    %42 = arith.mulf %26, %34 : vector<8x128xf32>
    %43 = arith.addf %41, %42 : vector<8x128xf32>
    %44 = math.tanh %43 : vector<8x128xf32>
    %45 = arith.mulf %40, %44 : vector<8x128xf32>
    %46 = arith.index_cast %15 : i32 to index
    %c0_22 = arith.constant 0 : index
    %47 = vector.load %arg11[%46, %c0_22] : memref<32x128xf32, #tpu.memory_space<vmem>>, vector<8x128xf32>
    tpu.vector_store %arg11[%46, %c0_22], %45 {strides = array<i32>} : memref<32x128xf32, #tpu.memory_space<vmem>>, vector<8x128xf32>,
    %c1_i32 = arith.constant 1 : i32
    %c8_i32_23 = arith.constant 8 : i32
    %48 = arith.muli %c1_i32, %c8_i32_23 : i32
    %49 = tpu.assume_multiple %48, 8 : i32
    %50 = arith.index_cast %49 : i32 to index
    %c0_24 = arith.constant 0 : index
    %51 = vector.load %arg12[%50, %c0_24] : memref<32x512xf32, #tpu.memory_space<vmem>>, vector<8x512xf32>
    %c0_25 = arith.constant 0 : index
    %c0_26 = arith.constant 0 : index
    %52 = vector.load %arg4[%c0_25, %c0_26] : memref<128x512xf32, #tpu.memory_space<vmem>>, vector<128x512xf32>
    %cst_27 = arith.constant dense<0.000000e+00> : vector<8x512xf32>
    %53 = tpu.matmul %45, %52, %cst_27 {dimension_numbers = #tpu.dot_dimension_numbers<[1], [0], [0], [1], [0, 0, 1, 1], [], []>} : vector<8x128xf32>, vector<128x512xf32>, vector<8x512xf32> -> vector<8x512xf32>
    %54 = arith.addf %51, %53 : vector<8x512xf32>
    %55 = vector.extract_strided_slice %54 {offsets = [0, 0], sizes = [8, 128], strides = [1, 1]} : vector<8x512xf32> to vector<8x128xf32>
    %56 = arith.negf %55 : vector<8x128xf32>
    %57 = math.exp %56 : vector<8x128xf32>
    %cst_28 = arith.constant 1.000000e+00 : f32
    %58 = vector.broadcast %cst_28 : f32 to vector<8x128xf32>
    %59 = arith.addf %58, %57 : vector<8x128xf32>
    %60 = arith.divf %58, %59 : vector<8x128xf32>
    %61 = vector.extract_strided_slice %54 {offsets = [0, 128], sizes = [8, 128], strides = [1, 1]} : vector<8x512xf32> to vector<8x128xf32>
    %62 = arith.negf %61 : vector<8x128xf32>
    %63 = math.exp %62 : vector<8x128xf32>
    %cst_29 = arith.constant 1.000000e+00 : f32
    %64 = vector.broadcast %cst_29 : f32 to vector<8x128xf32>
    %65 = arith.addf %64, %63 : vector<8x128xf32>
    %66 = arith.divf %64, %65 : vector<8x128xf32>
    %67 = vector.extract_strided_slice %54 {offsets = [0, 256], sizes = [8, 128], strides = [1, 1]} : vector<8x512xf32> to vector<8x128xf32>
    %68 = math.tanh %67 : vector<8x128xf32>
    %69 = vector.extract_strided_slice %54 {offsets = [0, 384], sizes = [8, 128], strides = [1, 1]} : vector<8x512xf32> to vector<8x128xf32>
    %70 = arith.negf %69 : vector<8x128xf32>
    %71 = math.exp %70 : vector<8x128xf32>
    %cst_30 = arith.constant 1.000000e+00 : f32
    %72 = vector.broadcast %cst_30 : f32 to vector<8x128xf32>
    %73 = arith.addf %72, %71 : vector<8x128xf32>
    %74 = arith.divf %72, %73 : vector<8x128xf32>
    %75 = arith.mulf %66, %43 : vector<8x128xf32>
    %76 = arith.mulf %60, %68 : vector<8x128xf32>
    %77 = arith.addf %75, %76 : vector<8x128xf32>
    %78 = math.tanh %77 : vector<8x128xf32>
    %79 = arith.mulf %74, %78 : vector<8x128xf32>
    %80 = arith.index_cast %49 : i32 to index
    %c0_31 = arith.constant 0 : index
    %81 = vector.load %arg11[%80, %c0_31] : memref<32x128xf32, #tpu.memory_space<vmem>>, vector<8x128xf32>
    tpu.vector_store %arg11[%80, %c0_31], %79 {strides = array<i32>} : memref<32x128xf32, #tpu.memory_space<vmem>>, vector<8x128xf32>,
    %c2_i32 = arith.constant 2 : i32
    %c8_i32_32 = arith.constant 8 : i32
    %82 = arith.muli %c2_i32, %c8_i32_32 : i32
    %83 = tpu.assume_multiple %82, 8 : i32
    %84 = arith.index_cast %83 : i32 to index
    %c0_33 = arith.constant 0 : index
    %85 = vector.load %arg12[%84, %c0_33] : memref<32x512xf32, #tpu.memory_space<vmem>>, vector<8x512xf32>
    %c0_34 = arith.constant 0 : index
    %c0_35 = arith.constant 0 : index
    %86 = vector.load %arg4[%c0_34, %c0_35] : memref<128x512xf32, #tpu.memory_space<vmem>>, vector<128x512xf32>
    %cst_36 = arith.constant dense<0.000000e+00> : vector<8x512xf32>
    %87 = tpu.matmul %79, %86, %cst_36 {dimension_numbers = #tpu.dot_dimension_numbers<[1], [0], [0], [1], [0, 0, 1, 1], [], []>} : vector<8x128xf32>, vector<128x512xf32>, vector<8x512xf32> -> vector<8x512xf32>
    %88 = arith.addf %85, %87 : vector<8x512xf32>
    %89 = vector.extract_strided_slice %88 {offsets = [0, 0], sizes = [8, 128], strides = [1, 1]} : vector<8x512xf32> to vector<8x128xf32>
    %90 = arith.negf %89 : vector<8x128xf32>
    %91 = math.exp %90 : vector<8x128xf32>
    %cst_37 = arith.constant 1.000000e+00 : f32
    %92 = vector.broadcast %cst_37 : f32 to vector<8x128xf32>
    %93 = arith.addf %92, %91 : vector<8x128xf32>
    %94 = arith.divf %92, %93 : vector<8x128xf32>
    %95 = vector.extract_strided_slice %88 {offsets = [0, 128], sizes = [8, 128], strides = [1, 1]} : vector<8x512xf32> to vector<8x128xf32>
    %96 = arith.negf %95 : vector<8x128xf32>
    %97 = math.exp %96 : vector<8x128xf32>
    %cst_38 = arith.constant 1.000000e+00 : f32
    %98 = vector.broadcast %cst_38 : f32 to vector<8x128xf32>
    %99 = arith.addf %98, %97 : vector<8x128xf32>
    %100 = arith.divf %98, %99 : vector<8x128xf32>
    %101 = vector.extract_strided_slice %88 {offsets = [0, 256], sizes = [8, 128], strides = [1, 1]} : vector<8x512xf32> to vector<8x128xf32>
    %102 = math.tanh %101 : vector<8x128xf32>
    %103 = vector.extract_strided_slice %88 {offsets = [0, 384], sizes = [8, 128], strides = [1, 1]} : vector<8x512xf32> to vector<8x128xf32>
    %104 = arith.negf %103 : vector<8x128xf32>
    %105 = math.exp %104 : vector<8x128xf32>
    %cst_39 = arith.constant 1.000000e+00 : f32
    %106 = vector.broadcast %cst_39 : f32 to vector<8x128xf32>
    %107 = arith.addf %106, %105 : vector<8x128xf32>
    %108 = arith.divf %106, %107 : vector<8x128xf32>
    %109 = arith.mulf %100, %77 : vector<8x128xf32>
    %110 = arith.mulf %94, %102 : vector<8x128xf32>
    %111 = arith.addf %109, %110 : vector<8x128xf32>
    %112 = math.tanh %111 : vector<8x128xf32>
    %113 = arith.mulf %108, %112 : vector<8x128xf32>
    %114 = arith.index_cast %83 : i32 to index
    %c0_40 = arith.constant 0 : index
    %115 = vector.load %arg11[%114, %c0_40] : memref<32x128xf32, #tpu.memory_space<vmem>>, vector<8x128xf32>
    tpu.vector_store %arg11[%114, %c0_40], %113 {strides = array<i32>} : memref<32x128xf32, #tpu.memory_space<vmem>>, vector<8x128xf32>,
    %c3_i32 = arith.constant 3 : i32
    %c8_i32_41 = arith.constant 8 : i32
    %116 = arith.muli %c3_i32, %c8_i32_41 : i32
    %117 = tpu.assume_multiple %116, 8 : i32
    %118 = arith.index_cast %117 : i32 to index
    %c0_42 = arith.constant 0 : index
    %119 = vector.load %arg12[%118, %c0_42] : memref<32x512xf32, #tpu.memory_space<vmem>>, vector<8x512xf32>
    %c0_43 = arith.constant 0 : index
    %c0_44 = arith.constant 0 : index
    %120 = vector.load %arg4[%c0_43, %c0_44] : memref<128x512xf32, #tpu.memory_space<vmem>>, vector<128x512xf32>
    %cst_45 = arith.constant dense<0.000000e+00> : vector<8x512xf32>
    %121 = tpu.matmul %113, %120, %cst_45 {dimension_numbers = #tpu.dot_dimension_numbers<[1], [0], [0], [1], [0, 0, 1, 1], [], []>} : vector<8x128xf32>, vector<128x512xf32>, vector<8x512xf32> -> vector<8x512xf32>
    %122 = arith.addf %119, %121 : vector<8x512xf32>
    %123 = vector.extract_strided_slice %122 {offsets = [0, 0], sizes = [8, 128], strides = [1, 1]} : vector<8x512xf32> to vector<8x128xf32>
    %124 = arith.negf %123 : vector<8x128xf32>
    %125 = math.exp %124 : vector<8x128xf32>
    %cst_46 = arith.constant 1.000000e+00 : f32
    %126 = vector.broadcast %cst_46 : f32 to vector<8x128xf32>
    %127 = arith.addf %126, %125 : vector<8x128xf32>
    %128 = arith.divf %126, %127 : vector<8x128xf32>
    %129 = vector.extract_strided_slice %122 {offsets = [0, 128], sizes = [8, 128], strides = [1, 1]} : vector<8x512xf32> to vector<8x128xf32>
    %130 = arith.negf %129 : vector<8x128xf32>
    %131 = math.exp %130 : vector<8x128xf32>
    %cst_47 = arith.constant 1.000000e+00 : f32
    %132 = vector.broadcast %cst_47 : f32 to vector<8x128xf32>
    %133 = arith.addf %132, %131 : vector<8x128xf32>
    %134 = arith.divf %132, %133 : vector<8x128xf32>
    %135 = vector.extract_strided_slice %122 {offsets = [0, 256], sizes = [8, 128], strides = [1, 1]} : vector<8x512xf32> to vector<8x128xf32>
    %136 = math.tanh %135 : vector<8x128xf32>
    %137 = vector.extract_strided_slice %122 {offsets = [0, 384], sizes = [8, 128], strides = [1, 1]} : vector<8x512xf32> to vector<8x128xf32>
    %138 = arith.negf %137 : vector<8x128xf32>
    %139 = math.exp %138 : vector<8x128xf32>
    %cst_48 = arith.constant 1.000000e+00 : f32
    %140 = vector.broadcast %cst_48 : f32 to vector<8x128xf32>
    %141 = arith.addf %140, %139 : vector<8x128xf32>
    %142 = arith.divf %140, %141 : vector<8x128xf32>
    %143 = arith.mulf %134, %111 : vector<8x128xf32>
    %144 = arith.mulf %128, %136 : vector<8x128xf32>
    %145 = arith.addf %143, %144 : vector<8x128xf32>
    %146 = math.tanh %145 : vector<8x128xf32>
    %147 = arith.mulf %142, %146 : vector<8x128xf32>
    %148 = arith.index_cast %117 : i32 to index
    %c0_49 = arith.constant 0 : index
    %149 = vector.load %arg11[%148, %c0_49] : memref<32x128xf32, #tpu.memory_space<vmem>>, vector<8x128xf32>
    tpu.vector_store %arg11[%148, %c0_49], %147 {strides = array<i32>} : memref<32x128xf32, #tpu.memory_space<vmem>>, vector<8x128xf32>,
    %c4_i32 = arith.constant 4 : i32
    %c0_50 = arith.constant 0 : index
    %c0_51 = arith.constant 0 : index
    %c0_52 = arith.constant 0 : index
    %150 = vector.load %arg13[%c0_50, %c0_51, %c0_52] : memref<2x8x128xf32, #tpu.memory_space<vmem>>, vector<1x8x128xf32>
    %151 = vector.shape_cast %150 : vector<1x8x128xf32> to vector<8x128xf32>
    %152 = vector.shape_cast %147 : vector<8x128xf32> to vector<1x8x128xf32>
    tpu.vector_store %arg13[%c0_50, %c0_51, %c0_52], %152 {strides = array<i32>} : memref<2x8x128xf32, #tpu.memory_space<vmem>>, vector<1x8x128xf32>,
    %c0_53 = arith.constant 0 : index
    %c0_54 = arith.constant 0 : index
    %c0_55 = arith.constant 0 : index
    %153 = vector.load %arg14[%c0_53, %c0_54, %c0_55] : memref<2x8x128xf32, #tpu.memory_space<vmem>>, vector<1x8x128xf32>
    %154 = vector.shape_cast %153 : vector<1x8x128xf32> to vector<8x128xf32>
    %155 = vector.shape_cast %145 : vector<8x128xf32> to vector<1x8x128xf32>
    tpu.vector_store %arg14[%c0_53, %c0_54, %c0_55], %155 {strides = array<i32>} : memref<2x8x128xf32, #tpu.memory_space<vmem>>, vector<1x8x128xf32>,
    %c0_56 = arith.constant 0 : index
    %c0_57 = arith.constant 0 : index
    %156 = vector.load %arg11[%c0_56, %c0_57] : memref<32x128xf32, #tpu.memory_space<vmem>>, vector<32x128xf32>
    %c0_58 = arith.constant 0 : index
    %c0_59 = arith.constant 0 : index
    %157 = vector.load %arg3[%c0_58, %c0_59] : memref<128x512xf32, #tpu.memory_space<vmem>>, vector<128x512xf32>
    %cst_60 = arith.constant dense<0.000000e+00> : vector<32x512xf32>
    %158 = tpu.matmul %156, %157, %cst_60 {dimension_numbers = #tpu.dot_dimension_numbers<[1], [0], [0], [1], [0, 0, 1, 1], [], []>} : vector<32x128xf32>, vector<128x512xf32>, vector<32x512xf32> -> vector<32x512xf32>
    %c0_61 = arith.constant 0 : index
    %c0_62 = arith.constant 0 : index
    %159 = vector.load %arg7[%c0_61, %c0_62] : memref<1x512xf32, #tpu.memory_space<vmem>>, vector<1x512xf32>
    %160 = vector.broadcast %159 : vector<1x512xf32> to vector<32x512xf32>
    %161 = arith.addf %158, %160 : vector<32x512xf32>
    %c0_63 = arith.constant 0 : index
    %c0_64 = arith.constant 0 : index
    %162 = vector.load %arg12[%c0_63, %c0_64] : memref<32x512xf32, #tpu.memory_space<vmem>>, vector<32x512xf32>
    tpu.vector_store %arg12[%c0_63, %c0_64], %161 {strides = array<i32>} : memref<32x512xf32, #tpu.memory_space<vmem>>, vector<32x512xf32>,
    %c1 = arith.constant 1 : index
    %c0_65 = arith.constant 0 : index
    %c0_66 = arith.constant 0 : index
    %163 = vector.load %arg13[%c1, %c0_65, %c0_66] : memref<2x8x128xf32, #tpu.memory_space<vmem>>, vector<1x8x128xf32>
    %164 = vector.shape_cast %163 : vector<1x8x128xf32> to vector<8x128xf32>
    %c1_67 = arith.constant 1 : index
    %c0_68 = arith.constant 0 : index
    %c0_69 = arith.constant 0 : index
    %165 = vector.load %arg14[%c1_67, %c0_68, %c0_69] : memref<2x8x128xf32, #tpu.memory_space<vmem>>, vector<1x8x128xf32>
    %166 = vector.shape_cast %165 : vector<1x8x128xf32> to vector<8x128xf32>
    %c0_i32_70 = arith.constant 0 : i32
    %c8_i32_71 = arith.constant 8 : i32
    %167 = arith.muli %c0_i32_70, %c8_i32_71 : i32
    %168 = tpu.assume_multiple %167, 8 : i32
    %169 = arith.index_cast %168 : i32 to index
    %c0_72 = arith.constant 0 : index
    %170 = vector.load %arg12[%169, %c0_72] : memref<32x512xf32, #tpu.memory_space<vmem>>, vector<8x512xf32>
    %c0_73 = arith.constant 0 : index
    %c0_74 = arith.constant 0 : index
    %171 = vector.load %arg5[%c0_73, %c0_74] : memref<128x512xf32, #tpu.memory_space<vmem>>, vector<128x512xf32>
    %cst_75 = arith.constant dense<0.000000e+00> : vector<8x512xf32>
    %172 = tpu.matmul %164, %171, %cst_75 {dimension_numbers = #tpu.dot_dimension_numbers<[1], [0], [0], [1], [0, 0, 1, 1], [], []>} : vector<8x128xf32>, vector<128x512xf32>, vector<8x512xf32> -> vector<8x512xf32>
    %173 = arith.addf %170, %172 : vector<8x512xf32>
    %174 = vector.extract_strided_slice %173 {offsets = [0, 0], sizes = [8, 128], strides = [1, 1]} : vector<8x512xf32> to vector<8x128xf32>
    %175 = arith.negf %174 : vector<8x128xf32>
    %176 = math.exp %175 : vector<8x128xf32>
    %cst_76 = arith.constant 1.000000e+00 : f32
    %177 = vector.broadcast %cst_76 : f32 to vector<8x128xf32>
    %178 = arith.addf %177, %176 : vector<8x128xf32>
    %179 = arith.divf %177, %178 : vector<8x128xf32>
    %180 = vector.extract_strided_slice %173 {offsets = [0, 128], sizes = [8, 128], strides = [1, 1]} : vector<8x512xf32> to vector<8x128xf32>
    %181 = arith.negf %180 : vector<8x128xf32>
    %182 = math.exp %181 : vector<8x128xf32>
    %cst_77 = arith.constant 1.000000e+00 : f32
    %183 = vector.broadcast %cst_77 : f32 to vector<8x128xf32>
    %184 = arith.addf %183, %182 : vector<8x128xf32>
    %185 = arith.divf %183, %184 : vector<8x128xf32>
    %186 = vector.extract_strided_slice %173 {offsets = [0, 256], sizes = [8, 128], strides = [1, 1]} : vector<8x512xf32> to vector<8x128xf32>
    %187 = math.tanh %186 : vector<8x128xf32>
    %188 = vector.extract_strided_slice %173 {offsets = [0, 384], sizes = [8, 128], strides = [1, 1]} : vector<8x512xf32> to vector<8x128xf32>
    %189 = arith.negf %188 : vector<8x128xf32>
    %190 = math.exp %189 : vector<8x128xf32>
    %cst_78 = arith.constant 1.000000e+00 : f32
    %191 = vector.broadcast %cst_78 : f32 to vector<8x128xf32>
    %192 = arith.addf %191, %190 : vector<8x128xf32>
    %193 = arith.divf %191, %192 : vector<8x128xf32>
    %194 = arith.mulf %185, %166 : vector<8x128xf32>
    %195 = arith.mulf %179, %187 : vector<8x128xf32>
    %196 = arith.addf %194, %195 : vector<8x128xf32>
    %197 = math.tanh %196 : vector<8x128xf32>
    %198 = arith.mulf %193, %197 : vector<8x128xf32>
    %c1_i32_79 = arith.constant 1 : i32
    %c8_i32_80 = arith.constant 8 : i32
    %199 = arith.muli %c1_i32_79, %c8_i32_80 : i32
    %200 = tpu.assume_multiple %199, 8 : i32
    %201 = arith.index_cast %200 : i32 to index
    %c0_81 = arith.constant 0 : index
    %202 = vector.load %arg12[%201, %c0_81] : memref<32x512xf32, #tpu.memory_space<vmem>>, vector<8x512xf32>
    %c0_82 = arith.constant 0 : index
    %c0_83 = arith.constant 0 : index
    %203 = vector.load %arg5[%c0_82, %c0_83] : memref<128x512xf32, #tpu.memory_space<vmem>>, vector<128x512xf32>
    %cst_84 = arith.constant dense<0.000000e+00> : vector<8x512xf32>
    %204 = tpu.matmul %198, %203, %cst_84 {dimension_numbers = #tpu.dot_dimension_numbers<[1], [0], [0], [1], [0, 0, 1, 1], [], []>} : vector<8x128xf32>, vector<128x512xf32>, vector<8x512xf32> -> vector<8x512xf32>
    %205 = arith.addf %202, %204 : vector<8x512xf32>
    %206 = vector.extract_strided_slice %205 {offsets = [0, 0], sizes = [8, 128], strides = [1, 1]} : vector<8x512xf32> to vector<8x128xf32>
    %207 = arith.negf %206 : vector<8x128xf32>
    %208 = math.exp %207 : vector<8x128xf32>
    %cst_85 = arith.constant 1.000000e+00 : f32
    %209 = vector.broadcast %cst_85 : f32 to vector<8x128xf32>
    %210 = arith.addf %209, %208 : vector<8x128xf32>
    %211 = arith.divf %209, %210 : vector<8x128xf32>
    %212 = vector.extract_strided_slice %205 {offsets = [0, 128], sizes = [8, 128], strides = [1, 1]} : vector<8x512xf32> to vector<8x128xf32>
    %213 = arith.negf %212 : vector<8x128xf32>
    %214 = math.exp %213 : vector<8x128xf32>
    %cst_86 = arith.constant 1.000000e+00 : f32
    %215 = vector.broadcast %cst_86 : f32 to vector<8x128xf32>
    %216 = arith.addf %215, %214 : vector<8x128xf32>
    %217 = arith.divf %215, %216 : vector<8x128xf32>
    %218 = vector.extract_strided_slice %205 {offsets = [0, 256], sizes = [8, 128], strides = [1, 1]} : vector<8x512xf32> to vector<8x128xf32>
    %219 = math.tanh %218 : vector<8x128xf32>
    %220 = vector.extract_strided_slice %205 {offsets = [0, 384], sizes = [8, 128], strides = [1, 1]} : vector<8x512xf32> to vector<8x128xf32>
    %221 = arith.negf %220 : vector<8x128xf32>
    %222 = math.exp %221 : vector<8x128xf32>
    %cst_87 = arith.constant 1.000000e+00 : f32
    %223 = vector.broadcast %cst_87 : f32 to vector<8x128xf32>
    %224 = arith.addf %223, %222 : vector<8x128xf32>
    %225 = arith.divf %223, %224 : vector<8x128xf32>
    %226 = arith.mulf %217, %196 : vector<8x128xf32>
    %227 = arith.mulf %211, %219 : vector<8x128xf32>
    %228 = arith.addf %226, %227 : vector<8x128xf32>
    %229 = math.tanh %228 : vector<8x128xf32>
    %230 = arith.mulf %225, %229 : vector<8x128xf32>
    %c2_i32_88 = arith.constant 2 : i32
    %c8_i32_89 = arith.constant 8 : i32
    %231 = arith.muli %c2_i32_88, %c8_i32_89 : i32
    %232 = tpu.assume_multiple %231, 8 : i32
    %233 = arith.index_cast %232 : i32 to index
    %c0_90 = arith.constant 0 : index
    %234 = vector.load %arg12[%233, %c0_90] : memref<32x512xf32, #tpu.memory_space<vmem>>, vector<8x512xf32>
    %c0_91 = arith.constant 0 : index
    %c0_92 = arith.constant 0 : index
    %235 = vector.load %arg5[%c0_91, %c0_92] : memref<128x512xf32, #tpu.memory_space<vmem>>, vector<128x512xf32>
    %cst_93 = arith.constant dense<0.000000e+00> : vector<8x512xf32>
    %236 = tpu.matmul %230, %235, %cst_93 {dimension_numbers = #tpu.dot_dimension_numbers<[1], [0], [0], [1], [0, 0, 1, 1], [], []>} : vector<8x128xf32>, vector<128x512xf32>, vector<8x512xf32> -> vector<8x512xf32>
    %237 = arith.addf %234, %236 : vector<8x512xf32>
    %238 = vector.extract_strided_slice %237 {offsets = [0, 0], sizes = [8, 128], strides = [1, 1]} : vector<8x512xf32> to vector<8x128xf32>
    %239 = arith.negf %238 : vector<8x128xf32>
    %240 = math.exp %239 : vector<8x128xf32>
    %cst_94 = arith.constant 1.000000e+00 : f32
    %241 = vector.broadcast %cst_94 : f32 to vector<8x128xf32>
    %242 = arith.addf %241, %240 : vector<8x128xf32>
    %243 = arith.divf %241, %242 : vector<8x128xf32>
    %244 = vector.extract_strided_slice %237 {offsets = [0, 128], sizes = [8, 128], strides = [1, 1]} : vector<8x512xf32> to vector<8x128xf32>
    %245 = arith.negf %244 : vector<8x128xf32>
    %246 = math.exp %245 : vector<8x128xf32>
    %cst_95 = arith.constant 1.000000e+00 : f32
    %247 = vector.broadcast %cst_95 : f32 to vector<8x128xf32>
    %248 = arith.addf %247, %246 : vector<8x128xf32>
    %249 = arith.divf %247, %248 : vector<8x128xf32>
    %250 = vector.extract_strided_slice %237 {offsets = [0, 256], sizes = [8, 128], strides = [1, 1]} : vector<8x512xf32> to vector<8x128xf32>
    %251 = math.tanh %250 : vector<8x128xf32>
    %252 = vector.extract_strided_slice %237 {offsets = [0, 384], sizes = [8, 128], strides = [1, 1]} : vector<8x512xf32> to vector<8x128xf32>
    %253 = arith.negf %252 : vector<8x128xf32>
    %254 = math.exp %253 : vector<8x128xf32>
    %cst_96 = arith.constant 1.000000e+00 : f32
    %255 = vector.broadcast %cst_96 : f32 to vector<8x128xf32>
    %256 = arith.addf %255, %254 : vector<8x128xf32>
    %257 = arith.divf %255, %256 : vector<8x128xf32>
    %258 = arith.mulf %249, %228 : vector<8x128xf32>
    %259 = arith.mulf %243, %251 : vector<8x128xf32>
    %260 = arith.addf %258, %259 : vector<8x128xf32>
    %261 = math.tanh %260 : vector<8x128xf32>
    %262 = arith.mulf %257, %261 : vector<8x128xf32>
    %c3_i32_97 = arith.constant 3 : i32
    %c8_i32_98 = arith.constant 8 : i32
    %263 = arith.muli %c3_i32_97, %c8_i32_98 : i32
    %264 = tpu.assume_multiple %263, 8 : i32
    %265 = arith.index_cast %264 : i32 to index
    %c0_99 = arith.constant 0 : index
    %266 = vector.load %arg12[%265, %c0_99] : memref<32x512xf32, #tpu.memory_space<vmem>>, vector<8x512xf32>
    %c0_100 = arith.constant 0 : index
    %c0_101 = arith.constant 0 : index
    %267 = vector.load %arg5[%c0_100, %c0_101] : memref<128x512xf32, #tpu.memory_space<vmem>>, vector<128x512xf32>
    %cst_102 = arith.constant dense<0.000000e+00> : vector<8x512xf32>
    %268 = tpu.matmul %262, %267, %cst_102 {dimension_numbers = #tpu.dot_dimension_numbers<[1], [0], [0], [1], [0, 0, 1, 1], [], []>} : vector<8x128xf32>, vector<128x512xf32>, vector<8x512xf32> -> vector<8x512xf32>
    %269 = arith.addf %266, %268 : vector<8x512xf32>
    %270 = vector.extract_strided_slice %269 {offsets = [0, 0], sizes = [8, 128], strides = [1, 1]} : vector<8x512xf32> to vector<8x128xf32>
    %271 = arith.negf %270 : vector<8x128xf32>
    %272 = math.exp %271 : vector<8x128xf32>
    %cst_103 = arith.constant 1.000000e+00 : f32
    %273 = vector.broadcast %cst_103 : f32 to vector<8x128xf32>
    %274 = arith.addf %273, %272 : vector<8x128xf32>
    %275 = arith.divf %273, %274 : vector<8x128xf32>
    %276 = vector.extract_strided_slice %269 {offsets = [0, 128], sizes = [8, 128], strides = [1, 1]} : vector<8x512xf32> to vector<8x128xf32>
    %277 = arith.negf %276 : vector<8x128xf32>
    %278 = math.exp %277 : vector<8x128xf32>
    %cst_104 = arith.constant 1.000000e+00 : f32
    %279 = vector.broadcast %cst_104 : f32 to vector<8x128xf32>
    %280 = arith.addf %279, %278 : vector<8x128xf32>
    %281 = arith.divf %279, %280 : vector<8x128xf32>
    %282 = vector.extract_strided_slice %269 {offsets = [0, 256], sizes = [8, 128], strides = [1, 1]} : vector<8x512xf32> to vector<8x128xf32>
    %283 = math.tanh %282 : vector<8x128xf32>
    %284 = vector.extract_strided_slice %269 {offsets = [0, 384], sizes = [8, 128], strides = [1, 1]} : vector<8x512xf32> to vector<8x128xf32>
    %285 = arith.negf %284 : vector<8x128xf32>
    %286 = math.exp %285 : vector<8x128xf32>
    %cst_105 = arith.constant 1.000000e+00 : f32
    %287 = vector.broadcast %cst_105 : f32 to vector<8x128xf32>
    %288 = arith.addf %287, %286 : vector<8x128xf32>
    %289 = arith.divf %287, %288 : vector<8x128xf32>
    %290 = arith.mulf %281, %260 : vector<8x128xf32>
    %291 = arith.mulf %275, %283 : vector<8x128xf32>
    %292 = arith.addf %290, %291 : vector<8x128xf32>
    %293 = math.tanh %292 : vector<8x128xf32>
    %294 = arith.mulf %289, %293 : vector<8x128xf32>
    %c4_i32_106 = arith.constant 4 : i32
    %c1_107 = arith.constant 1 : index
    %c0_108 = arith.constant 0 : index
    %c0_109 = arith.constant 0 : index
    %295 = vector.load %arg13[%c1_107, %c0_108, %c0_109] : memref<2x8x128xf32, #tpu.memory_space<vmem>>, vector<1x8x128xf32>
    %296 = vector.shape_cast %295 : vector<1x8x128xf32> to vector<8x128xf32>
    %297 = vector.shape_cast %294 : vector<8x128xf32> to vector<1x8x128xf32>
    tpu.vector_store %arg13[%c1_107, %c0_108, %c0_109], %297 {strides = array<i32>} : memref<2x8x128xf32, #tpu.memory_space<vmem>>, vector<1x8x128xf32>,
    %c1_110 = arith.constant 1 : index
    %c0_111 = arith.constant 0 : index
    %c0_112 = arith.constant 0 : index
    %298 = vector.load %arg14[%c1_110, %c0_111, %c0_112] : memref<2x8x128xf32, #tpu.memory_space<vmem>>, vector<1x8x128xf32>
    %299 = vector.shape_cast %298 : vector<1x8x128xf32> to vector<8x128xf32>
    %300 = vector.shape_cast %292 : vector<8x128xf32> to vector<1x8x128xf32>
    tpu.vector_store %arg14[%c1_110, %c0_111, %c0_112], %300 {strides = array<i32>} : memref<2x8x128xf32, #tpu.memory_space<vmem>>, vector<1x8x128xf32>,
    %c1_i32_113 = arith.constant 1 : i32
    %301 = arith.cmpi eq, %arg0, %c1_i32_113 : i32
    %302 = arith.extui %301 : i1 to i32
    %c0_i32_114 = arith.constant 0 : i32
    %303 = arith.cmpi ne, %302, %c0_i32_114 : i32
    scf.if %303 {
      %c0_115 = arith.constant 0 : index
      %c0_116 = arith.constant 0 : index
      %304 = vector.load %arg8[%c0_115, %c0_116] : memref<128x128xf32, #tpu.memory_space<vmem>>, vector<128x128xf32>
      %cst_117 = arith.constant dense<0.000000e+00> : vector<8x128xf32>
      %305 = tpu.matmul %294, %304, %cst_117 {dimension_numbers = #tpu.dot_dimension_numbers<[1], [0], [0], [1], [0, 0, 1, 1], [], []>} : vector<8x128xf32>, vector<128x128xf32>, vector<8x128xf32> -> vector<8x128xf32>
      %c0_118 = arith.constant 0 : index
      %c0_119 = arith.constant 0 : index
      %306 = vector.load %arg9[%c0_118, %c0_119] : memref<1x128xf32, #tpu.memory_space<vmem>>, vector<1x128xf32>
      %307 = vector.broadcast %306 : vector<1x128xf32> to vector<8x128xf32>
      %308 = arith.addf %305, %307 : vector<8x128xf32>
      %c0_120 = arith.constant 0 : index
      %c0_121 = arith.constant 0 : index
      %309 = vector.load %arg10[%c0_120, %c0_121] : memref<8x128xf32, #tpu.memory_space<vmem>>, vector<8x128xf32>
      tpu.vector_store %arg10[%c0_120, %c0_121], %308 {strides = array<i32>} : memref<8x128xf32, #tpu.memory_space<vmem>>, vector<8x128xf32>,
    } else {
    }
    return
  }
  func.func @transform_0(%arg0: i32) -> (i32, i32) {
    %c0_i32 = arith.constant 0 : i32
    %c0_i32_0 = arith.constant 0 : i32
    return %arg0, %c0_i32 : i32, i32
  }
  func.func @transform_1(%arg0: i32) -> (i32, i32) {
    %c0_i32 = arith.constant 0 : i32
    %c0_i32_0 = arith.constant 0 : i32
    %c0_i32_1 = arith.constant 0 : i32
    return %c0_i32, %c0_i32_0 : i32, i32
  }
  func.func @transform_2(%arg0: i32) -> (i32, i32) {
    %c0_i32 = arith.constant 0 : i32
    %c0_i32_0 = arith.constant 0 : i32
    %c0_i32_1 = arith.constant 0 : i32
    return %c0_i32, %c0_i32_0 : i32, i32
  }
  func.func @transform_3(%arg0: i32) -> (i32, i32) {
    %c0_i32 = arith.constant 0 : i32
    %c0_i32_0 = arith.constant 0 : i32
    %c0_i32_1 = arith.constant 0 : i32
    return %c0_i32, %c0_i32_0 : i32, i32
  }
  func.func @transform_4(%arg0: i32) -> (i32, i32) {
    %c0_i32 = arith.constant 0 : i32
    %c0_i32_0 = arith.constant 0 : i32
    %c0_i32_1 = arith.constant 0 : i32
    return %c0_i32, %c0_i32_0 : i32, i32
  }
  func.func @transform_5(%arg0: i32) -> (i32, i32) {
    %c0_i32 = arith.constant 0 : i32
    %c0_i32_0 = arith.constant 0 : i32
    %c0_i32_1 = arith.constant 0 : i32
    return %c0_i32, %c0_i32_0 : i32, i32
  }
  func.func @transform_6(%arg0: i32) -> (i32, i32) {
    %c0_i32 = arith.constant 0 : i32
    %c0_i32_0 = arith.constant 0 : i32
    %c0_i32_1 = arith.constant 0 : i32
    return %c0_i32, %c0_i32_0 : i32, i32
  }
  func.func @transform_7(%arg0: i32) -> (i32, i32) {
    %c0_i32 = arith.constant 0 : i32
    %c0_i32_0 = arith.constant 0 : i32
    %c0_i32_1 = arith.constant 0 : i32
    return %c0_i32, %c0_i32_0 : i32, i32
  }
  func.func @transform_8(%arg0: i32) -> (i32, i32) {
    %c0_i32 = arith.constant 0 : i32
    %c0_i32_0 = arith.constant 0 : i32
    %c0_i32_1 = arith.constant 0 : i32
    return %c0_i32, %c0_i32_0 : i32, i32
  }
  func.func @transform_9(%arg0: i32) -> (i32, i32) {
    %c0_i32 = arith.constant 0 : i32
    %c0_i32_0 = arith.constant 0 : i32
    %c0_i32_1 = arith.constant 0 : i32
    return %c0_i32, %c0_i32_0 : i32, i32
  }
}

</mosaic_0001>

<llo_original>
// kernel: lstm_forward.1
$region0: #{lstm_forward.1}
  #allocation0 [shape = 'u32[]', space=smem, size = 0x4, offset = 0x4, fixed_abs, tag = 'smem constant byte address 0x4 - core index']
  #allocation1 [shape = 'u32[144,128]{1,0:T(1,128)}', space=vmem, size = 0x12000, scoped, tag = 'internal scratch']
  #allocation2 [shape = 'f32[32,128]{1,0:T(8,128)}', space=vmem, size = 0x4000, scoped, tag = 'scratch operand']
  #allocation3 [shape = 'f32[32,512]{1,0:T(8,128)}', space=vmem, size = 0x10000, scoped, tag = 'scratch operand']
  #allocation4 [shape = 'f32[2,8,128]{2,1,0:T(8,128)}', space=vmem, size = 0x2000, scoped, tag = 'scratch operand']
  #allocation5 [shape = 'f32[2,8,128]{2,1,0:T(8,128)}', space=vmem, size = 0x2000, scoped, tag = 'scratch operand']
  %s0 = inlined_call_operand.vmem [shape: f32[64,4], index: 0, kind: input, shape index: {}]
  %s1 = inlined_call_operand.vmem [shape: f32[4,512], index: 1, kind: input, shape index: {}]
  %s2 = inlined_call_operand.vmem [shape: f32[128,512], index: 2, kind: input, shape index: {}]
  %s3 = inlined_call_operand.vmem [shape: f32[128,512], index: 3, kind: input, shape index: {}]
  %s4 = inlined_call_operand.vmem [shape: f32[128,512], index: 4, kind: input, shape index: {}]
  %s5 = inlined_call_operand.vmem [shape: f32[1,512], index: 5, kind: input, shape index: {}]
  %s6 = inlined_call_operand.vmem [shape: f32[1,512], index: 6, kind: input, shape index: {}]
  %s7 = inlined_call_operand.vmem [shape: f32[128,128], index: 7, kind: input, shape index: {}]
  %s8 = inlined_call_operand.vmem [shape: f32[1,128], index: 8, kind: input, shape index: {}]
  %s9 = inlined_call_operand.vmem [shape: f32[8,128], index: 9, kind: output, shape index: {}]
  %s10 = sld [smem:[#allocation0]]
  $region77: #{lstm_forward.1} parent=0
    _
  %s12 = ssub.s32 1, %s10
  %s13 = scalar_select 0, %s12, %s10
  loop: start=0, step=1, limit=4
  $region2: #{lstm_forward.1} parent=0 // loop_pre_header
    _
  $region3: #{lstm_forward.1} parent=0 // loop_header
    %s15 = sphi 0, %s19
    %p16 = scmp.ge.s32.totalorder %s15, 4
    %s25 = sphi 0, %s27
    %s28 = sphi 0, %s25
    %s29 = sphi 0, %s28
    %s45 = sphi 0, %s29
    %s49 = sphi 0, %s49
    %s51 = sphi 0, %s49
    %s52 = sphi 0, %s51
    %s66 = sphi 0, %s52
    %s70 = sphi 0, %s70
    %s72 = sphi 0, %s70
    %s73 = sphi 0, %s72
    %s87 = sphi 0, %s73
    %s91 = sphi 0, %s91
    %s93 = sphi 0, %s91
    %s94 = sphi 0, %s93
    %s108 = sphi 0, %s94
    %s112 = sphi 0, %s112
    %s114 = sphi 0, %s112
    %s115 = sphi 0, %s114
    %s129 = sphi 0, %s115
    %s133 = sphi 0, %s133
    %s135 = sphi 0, %s133
    %s136 = sphi 0, %s135
    %s150 = sphi 0, %s136
    %s154 = sphi 0, %s154
    %s156 = sphi 0, %s154
    %s157 = sphi 0, %s156
    %s171 = sphi 0, %s157
    %s175 = sphi 0, %s175
    %s177 = sphi 0, %s175
    %s178 = sphi 0, %s177
    %s192 = sphi 0, %s178
    %s196 = sphi 0, %s196
    %s198 = sphi 0, %s196
    %s199 = sphi 0, %s198
    %s213 = sphi 0, %s199
    %s217 = sphi 0, %s217
    %s219 = sphi 0, %s217
    %s220 = sphi 0, %s219
    %s234 = sphi 0, %s220
  $region4: #{lstm_forward.1} parent=0 // loop_header_branch
    %18 = sbr.rel (%p16) target = $region8
  $region5: #{lstm_forward.1} parent=0 // loop_body
    %s20 = ssub.s32 %s15, 1
    %s21 = ssub.s32 %s15, 2
    %s22 = sadd.s32 %s15, 1
    %s23 = ssub.s32 %s15, %s22
    %p24 = scmp.eq.s32.totalorder %s23, 0
    %s26 = sadd.s32 %s25, 1
    %s27 = scalar_select %p24, %s25, %s26
    %p30 = pneg %p24
    %p31 = scmp.eq.s32.totalorder %s15, 1
    %p32 = por %p30, %p31
    %p33 = scmp.ne.s32.totalorder %s25, %s28
    %p34 = scmp.eq.s32.totalorder %s15, 0
    %p35 = por %p33, %p34
    %p36 = scmp.ne.s32.totalorder %s25, %s28
    %p37 = scmp.eq.s32.totalorder %s20, 1
    %p38 = por %p36, %p37
    %p39 = scmp.ne.s32.totalorder %s28, %s29
    %p40 = scmp.eq.s32.totalorder %s20, 0
    %p41 = por %p39, %p40
    %p42 = scmp.ne.s32.totalorder %s28, %s29
    %p43 = scmp.eq.s32.totalorder %s21, 1
    %p44 = por %p42, %p43
    %p46 = scmp.ne.s32.totalorder %s29, %s45
    %p47 = scmp.eq.s32.totalorder %s21, 0
    %p48 = por %p46, %p47
    %s50 = sadd.s32 %s49, 1
    %p53 = scmp.eq.s32.totalorder %s15, 1
    %p54 = scmp.ne.s32.totalorder %s49, %s51
    %p55 = scmp.eq.s32.totalorder %s15, 0
    %p56 = por %p54, %p55
    %p57 = scmp.ne.s32.totalorder %s49, %s51
    %p58 = scmp.eq.s32.totalorder %s20, 1
    %p59 = por %p57, %p58
    %p60 = scmp.ne.s32.totalorder %s51, %s52
    %p61 = scmp.eq.s32.totalorder %s20, 0
    %p62 = por %p60, %p61
    %p63 = scmp.ne.s32.totalorder %s51, %s52
    %p64 = scmp.eq.s32.totalorder %s21, 1
    %p65 = por %p63, %p64
    %p67 = scmp.ne.s32.totalorder %s52, %s66
    %p68 = scmp.eq.s32.totalorder %s21, 0
    %p69 = por %p67, %p68
    %s71 = sadd.s32 %s70, 1
    %p74 = scmp.eq.s32.totalorder %s15, 1
    %p75 = scmp.ne.s32.totalorder %s70, %s72
    %p76 = scmp.eq.s32.totalorder %s15, 0
    %p77 = por %p75, %p76
    %p78 = scmp.ne.s32.totalorder %s70, %s72
    %p79 = scmp.eq.s32.totalorder %s20, 1
    %p80 = por %p78, %p79
    %p81 = scmp.ne.s32.totalorder %s72, %s73
    %p82 = scmp.eq.s32.totalorder %s20, 0
    %p83 = por %p81, %p82
    %p84 = scmp.ne.s32.totalorder %s72, %s73
    %p85 = scmp.eq.s32.totalorder %s21, 1
    %p86 = por %p84, %p85
    %p88 = scmp.ne.s32.totalorder %s73, %s87
    %p89 = scmp.eq.s32.totalorder %s21, 0
    %p90 = por %p88, %p89
    %s92 = sadd.s32 %s91, 1
    %p95 = scmp.eq.s32.totalorder %s15, 1
    %p96 = scmp.ne.s32.totalorder %s91, %s93
    %p97 = scmp.eq.s32.totalorder %s15, 0
    %p98 = por %p96, %p97
    %p99 = scmp.ne.s32.totalorder %s91, %s93
    %p100 = scmp.eq.s32.totalorder %s20, 1
    %p101 = por %p99, %p100
    %p102 = scmp.ne.s32.totalorder %s93, %s94
    %p103 = scmp.eq.s32.totalorder %s20, 0
    %p104 = por %p102, %p103
    %p105 = scmp.ne.s32.totalorder %s93, %s94
    %p106 = scmp.eq.s32.totalorder %s21, 1
    %p107 = por %p105, %p106
    %p109 = scmp.ne.s32.totalorder %s94, %s108
    %p110 = scmp.eq.s32.totalorder %s21, 0
    %p111 = por %p109, %p110
    %s113 = sadd.s32 %s112, 1
    %p116 = scmp.eq.s32.totalorder %s15, 1
    %p117 = scmp.ne.s32.totalorder %s112, %s114
    %p118 = scmp.eq.s32.totalorder %s15, 0
    %p119 = por %p117, %p118
    %p120 = scmp.ne.s32.totalorder %s112, %s114
    %p121 = scmp.eq.s32.totalorder %s20, 1
    %p122 = por %p120, %p121
    %p123 = scmp.ne.s32.totalorder %s114, %s115
    %p124 = scmp.eq.s32.totalorder %s20, 0
    %p125 = por %p123, %p124
    %p126 = scmp.ne.s32.totalorder %s114, %s115
    %p127 = scmp.eq.s32.totalorder %s21, 1
    %p128 = por %p126, %p127
    %p130 = scmp.ne.s32.totalorder %s115, %s129
    %p131 = scmp.eq.s32.totalorder %s21, 0
    %p132 = por %p130, %p131
    %s134 = sadd.s32 %s133, 1
    %p137 = scmp.eq.s32.totalorder %s15, 1
    %p138 = scmp.ne.s32.totalorder %s133, %s135
    %p139 = scmp.eq.s32.totalorder %s15, 0
    %p140 = por %p138, %p139
    %p141 = scmp.ne.s32.totalorder %s133, %s135
    %p142 = scmp.eq.s32.totalorder %s20, 1
    %p143 = por %p141, %p142
    %p144 = scmp.ne.s32.totalorder %s135, %s136
    %p145 = scmp.eq.s32.totalorder %s20, 0
    %p146 = por %p144, %p145
    %p147 = scmp.ne.s32.totalorder %s135, %s136
    %p148 = scmp.eq.s32.totalorder %s21, 1
    %p149 = por %p147, %p148
    %p151 = scmp.ne.s32.totalorder %s136, %s150
    %p152 = scmp.eq.s32.totalorder %s21, 0
    %p153 = por %p151, %p152
    %s155 = sadd.s32 %s154, 1
    %p158 = scmp.eq.s32.totalorder %s15, 1
    %p159 = scmp.ne.s32.totalorder %s154, %s156
    %p160 = scmp.eq.s32.totalorder %s15, 0
    %p161 = por %p159, %p160
    %p162 = scmp.ne.s32.totalorder %s154, %s156
    %p163 = scmp.eq.s32.totalorder %s20, 1
    %p164 = por %p162, %p163
    %p165 = scmp.ne.s32.totalorder %s156, %s157
    %p166 = scmp.eq.s32.totalorder %s20, 0
    %p167 = por %p165, %p166
    %p168 = scmp.ne.s32.totalorder %s156, %s157
    %p169 = scmp.eq.s32.totalorder %s21, 1
    %p170 = por %p168, %p169
    %p172 = scmp.ne.s32.totalorder %s157, %s171
    %p173 = scmp.eq.s32.totalorder %s21, 0
    %p174 = por %p172, %p173
    %s176 = sadd.s32 %s175, 1
    %p179 = scmp.eq.s32.totalorder %s15, 1
    %p180 = scmp.ne.s32.totalorder %s175, %s177
    %p181 = scmp.eq.s32.totalorder %s15, 0
    %p182 = por %p180, %p181
    %p183 = scmp.ne.s32.totalorder %s175, %s177
    %p184 = scmp.eq.s32.totalorder %s20, 1
    %p185 = por %p183, %p184
    %p186 = scmp.ne.s32.totalorder %s177, %s178
    %p187 = scmp.eq.s32.totalorder %s20, 0
    %p188 = por %p186, %p187
    %p189 = scmp.ne.s32.totalorder %s177, %s178
    %p190 = scmp.eq.s32.totalorder %s21, 1
    %p191 = por %p189, %p190
    %p193 = scmp.ne.s32.totalorder %s178, %s192
    %p194 = scmp.eq.s32.totalorder %s21, 0
    %p195 = por %p193, %p194
    %s197 = sadd.s32 %s196, 1
    %p200 = scmp.eq.s32.totalorder %s15, 1
    %p201 = scmp.ne.s32.totalorder %s196, %s198
    %p202 = scmp.eq.s32.totalorder %s15, 0
    %p203 = por %p201, %p202
    %p204 = scmp.ne.s32.totalorder %s196, %s198
    %p205 = scmp.eq.s32.totalorder %s20, 1
    %p206 = por %p204, %p205
    %p207 = scmp.ne.s32.totalorder %s198, %s199
    %p208 = scmp.eq.s32.totalorder %s20, 0
    %p209 = por %p207, %p208
    %p210 = scmp.ne.s32.totalorder %s198, %s199
    %p211 = scmp.eq.s32.totalorder %s21, 1
    %p212 = por %p210, %p211
    %p214 = scmp.ne.s32.totalorder %s199, %s213
    %p215 = scmp.eq.s32.totalorder %s21, 0
    %p216 = por %p214, %p215
    %s218 = sadd.s32 %s217, 1
    %p221 = scmp.eq.s32.totalorder %s15, 1
    %p222 = scmp.ne.s32.totalorder %s217, %s219
    %p223 = scmp.eq.s32.totalorder %s15, 0
    %p224 = por %p222, %p223
    %p225 = scmp.ne.s32.totalorder %s217, %s219
    %p226 = scmp.eq.s32.totalorder %s20, 1
    %p227 = por %p225, %p226
    %p228 = scmp.ne.s32.totalorder %s219, %s220
    %p229 = scmp.eq.s32.totalorder %s20, 0
    %p230 = por %p228, %p229
    %p231 = scmp.ne.s32.totalorder %s219, %s220
    %p232 = scmp.eq.s32.totalorder %s21, 1
    %p233 = por %p231, %p232
    %p235 = scmp.ne.s32.totalorder %s220, %s234
    %p236 = scmp.eq.s32.totalorder %s21, 0
    %p237 = por %p235, %p236
    %p238 = scmp.le.s32.totalorder 1, %s15
    %p239 = scmp.lt.s32.totalorder %s15, 3
    %p240 = pnand %p238, %p239
    %p241 = pneg %p240
    // Predicated region
    $region9: #{lstm_forward.1} parent=5 // pred_check
      _
    $region10: #{lstm_forward.1} parent=5 // pred_check_branch
      %243 = sbr.rel (%p240) target = $region12
    $region11: #{lstm_forward.1} parent=5 // pred_region
      %s244 = ssub.s32 %s15, 1
      // Predicated region
      $region13: #{lstm_forward.1} parent=11 // pred_check
        %p245 = pneg %p62
      $region14: #{lstm_forward.1} parent=11 // pred_check_branch
        %247 = sbr.rel (%p245) target = $region16
      $region15: #{lstm_forward.1} parent=11 // pred_region
        _
      $region16: #{lstm_forward.1} parent=11 // pred_fallthru
        _
      // Predicated region
      $region17: #{lstm_forward.1} parent=11 // pred_check
        %p248 = pneg %p83
      $region18: #{lstm_forward.1} parent=11 // pred_check_branch
        %250 = sbr.rel (%p248) target = $region20
      $region19: #{lstm_forward.1} parent=11 // pred_region
        _
      $region20: #{lstm_forward.1} parent=11 // pred_fallthru
        _
      // Predicated region
      $region21: #{lstm_forward.1} parent=11 // pred_check
        %p251 = pneg %p104
      $region22: #{lstm_forward.1} parent=11 // pred_check_branch
        %253 = sbr.rel (%p251) target = $region24
      $region23: #{lstm_forward.1} parent=11 // pred_region
        _
      $region24: #{lstm_forward.1} parent=11 // pred_fallthru
        _
      // Predicated region
      $region25: #{lstm_forward.1} parent=11 // pred_check
        %p254 = pneg %p125
      $region26: #{lstm_forward.1} parent=11 // pred_check_branch
        %256 = sbr.rel (%p254) target = $region28
      $region27: #{lstm_forward.1} parent=11 // pred_region
        _
      $region28: #{lstm_forward.1} parent=11 // pred_fallthru
        _
      // Predicated region
      $region29: #{lstm_forward.1} parent=11 // pred_check
        %p257 = pneg %p146
      $region30: #{lstm_forward.1} parent=11 // pred_check_branch
        %259 = sbr.rel (%p257) target = $region32
      $region31: #{lstm_forward.1} parent=11 // pred_region
        _
      $region32: #{lstm_forward.1} parent=11 // pred_fallthru
        _
      // Predicated region
      $region33: #{lstm_forward.1} parent=11 // pred_check
        %p260 = pneg %p167
      $region34: #{lstm_forward.1} parent=11 // pred_check_branch
        %262 = sbr.rel (%p260) target = $region36
      $region35: #{lstm_forward.1} parent=11 // pred_region
        _
      $region36: #{lstm_forward.1} parent=11 // pred_fallthru
        _
      // Predicated region
      $region37: #{lstm_forward.1} parent=11 // pred_check
        %p263 = pneg %p188
      $region38: #{lstm_forward.1} parent=11 // pred_check_branch
        %265 = sbr.rel (%p263) target = $region40
      $region39: #{lstm_forward.1} parent=11 // pred_region
        _
      $region40: #{lstm_forward.1} parent=11 // pred_fallthru
        _
      // Predicated region
      $region41: #{lstm_forward.1} parent=11 // pred_check
        %p266 = pneg %p209
      $region42: #{lstm_forward.1} parent=11 // pred_check_branch
        %268 = sbr.rel (%p266) target = $region44
      $region43: #{lstm_forward.1} parent=11 // pred_region
        _
      $region44: #{lstm_forward.1} parent=11 // pred_fallthru
        _
    $region12: #{lstm_forward.1} parent=5 // pred_fallthru
      _
    %p269 = scmp.lt.s32.totalorder %s15, 2
    // Predicated region
    $region45: #{lstm_forward.1} parent=5 // pred_check
      %p270 = pneg %p269
    $region46: #{lstm_forward.1} parent=5 // pred_check_branch
      %272 = sbr.rel (%p270) target = $region48
    $region47: #{lstm_forward.1} parent=5 // pred_region
      // Predicated region
      $region49: #{lstm_forward.1} parent=47 // pred_check
        %p273 = pneg %p35
      $region50: #{lstm_forward.1} parent=47 // pred_check_branch
        %275 = sbr.rel (%p273) target = $region52
      $region51: #{lstm_forward.1} parent=47 // pred_region
        %s276 = smul.u32 4, %s15
        %p277 = scmp.lt.s32.totalorder %s276, 7
        %s278 = scalar_select %p277, %s276, 7
        %s279 = smul.addr %s278, 8
        %s280 = scalar_lea.vmem %s0, %s279
        %s281 = smul.u32 4, %s15
      $region52: #{lstm_forward.1} parent=47 // pred_fallthru
        _
    $region48: #{lstm_forward.1} parent=5 // pred_fallthru
      _
    %p282 = scmp.le.s32.totalorder 1, %s15
    %p283 = scmp.lt.s32.totalorder %s15, 3
    %p284 = pnand %p282, %p283
    %p285 = pneg %p284
    // Predicated region
    $region53: #{lstm_forward.1} parent=5 // pred_check
      _
    $region54: #{lstm_forward.1} parent=5 // pred_check_branch
      %287 = sbr.rel (%p284) target = $region56
    $region55: #{lstm_forward.1} parent=5 // pred_region
      %s288 = ssub.s32 %s15, 1
      %s289 = smul.u32 4, %s20
      %p290 = scmp.lt.s32.totalorder %s289, 7
      %s291 = scalar_select %p290, %s289, 7
      %s292 = smul.addr %s291, 8
      %s293 = scalar_lea.vmem %s0, %s292
      %p294 = pneg %p41
      %p295 = pneg %p38
      %p296 = pneg %p62
      %p297 = pneg %p59
      %p298 = pneg %p83
      %p299 = pneg %p80
      %p300 = pneg %p104
      %p301 = pneg %p101
      %p302 = pneg %p125
      %p303 = pneg %p122
      %p304 = pneg %p146
      %p305 = pneg %p143
      %p306 = pneg %p167
      %p307 = pneg %p164
      %p308 = pneg %p188
      %p309 = pneg %p185
      %p310 = pneg %p209
      %p311 = pneg %p206
      %p312 = pneg %p230
      %p313 = pneg %p227
      %s314 = smul.u32 4, %s20
      %p315 = scmp.lt.s32.totalorder %s314, 7
      %s316 = scalar_select %p315, %s314, 7
      %s317 = smul.addr %s316, 8
      %s318 = scalar_lea.vmem %s0, %s317
      %s319 = smul.u32 4, %s20
      %p320 = scmp.eq.s32.totalorder %s20, 0
      // Predicated region
      $region57: #{lstm_forward.1} parent=55 // pred_check
        %p321 = pneg %p320
      $region58: #{lstm_forward.1} parent=55 // pred_check_branch
        %323 = sbr.rel (%p321) target = $region60
      $region59: #{lstm_forward.1} parent=55 // pred_region
        %324 = vst [vmem:[#allocation4] sm:$0xff] 0.0
        %325 = vst [vmem:[#allocation4 + $0x8] sm:$0xff] 0.0
        %326 = vst [vmem:[#allocation5] sm:$0xff] 0.0
        %327 = vst [vmem:[#allocation5 + $0x8] sm:$0xff] 0.0
      $region60: #{lstm_forward.1} parent=55 // pred_fallthru
        _
      %v328 = vld [vmem:[%s318] sm:$0xff]
      %v329 = vld [vmem:[%s318 + $0x8] sm:$0xff]
      %v330 = vld [vmem:[%s318 + $0x10] sm:$0xff]
      %v331 = vld [vmem:[%s318 + $0x18] sm:$0xff]
      %v332 = vld [vmem:[%s1] sm:$0xff]
      %v333 = vld [vmem:[%s1 + $0x8] sm:$0xff]
      %v334 = vld [vmem:[%s5] sm:$0xf]
      %v336 = vlaneseq
      %v337 = vshrl.u32 %v336, 7
      %v338 = vsub.s32 0, %v337
      %v339 = vrot.slane %v334, %v338
      %v340 = vlaneseq
      %v341 = vshrl.u32 %v340, 7
      %v342 = vsub.s32 1, %v341
      %v343 = vrot.slane %v334, %v342
      %v344 = vlaneseq
      %v345 = vshrl.u32 %v344, 7
      %v346 = vsub.s32 2, %v345
      %v347 = vrot.slane %v334, %v346
      %v348 = vlaneseq
      %v349 = vshrl.u32 %v348, 7
      %v350 = vsub.s32 3, %v349
      %v351 = vrot.slane %v334, %v350
      %v358 = vcombine.high %v332, %v332
      %v359 = vcombine.high %v333, %v333
      %vm360 = vcmask 31744
      %v362 = vsel %vm360, %v328, 0
      %v365 = vsel %vm360, %v329, 0
      %v368 = vsel %vm360, %v330, 0
      %v371 = vsel %vm360, %v331, 0
      %vm373 = vcmask 1043456
      %v374 = vsel %vm373, %v332, 0
      %v376 = vsel %vm373, %v358, 0
      %v378 = vsel %vm373, %v333, 0
      %v380 = vsel %vm373, %v359, 0
      %382 = vmatprep.subr.mxu0 0.0
      %383 = vmatpush1.msra.mxu0 0.0
      %384 = vmatprep.subr.mxu0 0.0
      %385 = vmatpush1.msra.mxu0 0.0
      %386 = vmatprep.subr.mxu0 0.0
      %387 = vmatpush1.msra.mxu0 0.0
      %388 = vmatprep.subr.mxu0 0.0
      %389 = vmatpush1.msra.mxu0 0.0
      %390 = vmatprep.subr.mxu0 0.0
      %391 = vmatpush1.msra.mxu0 0.0
      %392 = vmatprep.subr.mxu0 0.0
      %393 = vmatpush1.msra.mxu0 0.0
      %394 = vmatprep.subr.mxu0 0.0
      %395 = vmatpush1.msra.mxu0 0.0
      %396 = vmatprep.subr.mxu0 0.0
      %397 = vmatpush1.msra.mxu0 0.0
      %398 = vmatprep.subr.mxu0 0.0
      %399 = vmatpush1.msra.mxu0 0.0
      %400 = vmatprep.subr.mxu0 0.0
      %401 = vmatpush1.msra.mxu0 0.0
      %402 = vmatprep.subr.mxu0 0.0
      %403 = vmatpush1.msra.mxu0 0.0
      %404 = vmatprep.subr.mxu0 0.0
      %405 = vmatpush1.msra.mxu0 0.0
      %406 = vmatprep.subr.mxu0 0.0
      %407 = vmatpush1.msra.mxu0 0.0
      %408 = vmatprep.subr.mxu0 0.0
      %409 = vmatpush1.msra.mxu0 0.0
      %410 = vmatprep.subr.mxu0 0.0
      %411 = vmatpush1.msra.mxu0 0.0
      %412 = vmatprep.subr.mxu0 %v376
      %413 = vmatpush1.msra.mxu0 %v374
      %414 = vmatprep.subr.mxu0 0.0
      %415 = vmatpush2.msra.mxu0 0.0
      %416 = vmatprep.subr.mxu0 0.0
      %417 = vmatpush2.msra.mxu0 0.0
      %418 = vmatprep.subr.mxu0 0.0
      %419 = vmatpush2.msra.mxu0 0.0
      %420 = vmatprep.subr.mxu0 0.0
      %421 = vmatpush2.msra.mxu0 0.0
      %422 = vmatprep.subr.mxu0 0.0
      %423 = vmatpush2.msra.mxu0 0.0
      %424 = vmatprep.subr.mxu0 0.0
      %425 = vmatpush2.msra.mxu0 0.0
      %426 = vmatprep.subr.mxu0 0.0
      %427 = vmatpush2.msra.mxu0 0.0
      %428 = vmatprep.subr.mxu0 0.0
      %429 = vmatpush2.msra.mxu0 0.0
      %430 = vmatprep.subr.mxu0 0.0
      %431 = vmatpush2.msra.mxu0 0.0
      %432 = vmatprep.subr.mxu0 0.0
      %433 = vmatpush2.msra.mxu0 0.0
      %434 = vmatprep.subr.mxu0 0.0
      %435 = vmatpush2.msra.mxu0 0.0
      %436 = vmatprep.subr.mxu0 0.0
      %437 = vmatpush2.msra.mxu0 0.0
      %438 = vmatprep.subr.mxu0 0.0
      %439 = vmatpush2.msra.mxu0 0.0
      %440 = vmatprep.subr.mxu0 0.0
      %441 = vmatpush2.msra.mxu0 0.0
      %442 = vmatprep.subr.mxu0 0.0
      %443 = vmatpush2.msra.mxu0 0.0
      %444 = vmatprep.subr.mxu0 0.0
      %445 = vmatpush2.msra.mxu0 0.0
      %446 = vmatprep.mubr.f32.mxu0 0.0
      %447 = vmatmul.mubr.f32.gmra.mxu0 %v362
      %v448 = vpop.f32.mrf.mxu0
      %v449 = vadd.f32 %v339, %v448
      %v450 = vpop.f32.mrf.mxu0
      %v451 = vadd.f32 %v343, %v450
      %452 = vmatprep.mubr.f32.mxu0 0.0
      %453 = vmatmul.mubr.f32.gmra.mxu0 %v365
      %v454 = vpop.f32.mrf.mxu0
      %v455 = vadd.f32 %v339, %v454
      %v456 = vpop.f32.mrf.mxu0
      %v457 = vadd.f32 %v343, %v456
      %458 = vmatprep.mubr.f32.mxu0 0.0
      %459 = vmatmul.mubr.f32.gmra.mxu0 %v368
      %v460 = vpop.f32.mrf.mxu0
      %v461 = vadd.f32 %v339, %v460
      %v462 = vpop.f32.mrf.mxu0
      %v463 = vadd.f32 %v343, %v462
      %464 = vmatprep.mubr.f32.mxu0 0.0
      %465 = vmatmul.mubr.f32.gmra.mxu0 %v371
      %v466 = vpop.f32.mrf.mxu0
      %v467 = vadd.f32 %v339, %v466
      %v468 = vpop.f32.mrf.mxu0
      %v469 = vadd.f32 %v343, %v468
      %470 = vdwg.mxu0
      %471 = vmatprep.subr.mxu0 0.0
      %472 = vmatpush1.msra.mxu0 0.0
      %473 = vmatprep.subr.mxu0 0.0
      %474 = vmatpush1.msra.mxu0 0.0
      %475 = vmatprep.subr.mxu0 0.0
      %476 = vmatpush1.msra.mxu0 0.0
      %477 = vmatprep.subr.mxu0 0.0
      %478 = vmatpush1.msra.mxu0 0.0
      %479 = vmatprep.subr.mxu0 0.0
      %480 = vmatpush1.msra.mxu0 0.0
      %481 = vmatprep.subr.mxu0 0.0
      %482 = vmatpush1.msra.mxu0 0.0
      %483 = vmatprep.subr.mxu0 0.0
      %484 = vmatpush1.msra.mxu0 0.0
      %485 = vmatprep.subr.mxu0 0.0
      %486 = vmatpush1.msra.mxu0 0.0
      %487 = vmatprep.subr.mxu0 0.0
      %488 = vmatpush1.msra.mxu0 0.0
      %489 = vmatprep.subr.mxu0 0.0
      %490 = vmatpush1.msra.mxu0 0.0
      %491 = vmatprep.subr.mxu0 0.0
      %492 = vmatpush1.msra.mxu0 0.0
      %493 = vmatprep.subr.mxu0 0.0
      %494 = vmatpush1.msra.mxu0 0.0
      %495 = vmatprep.subr.mxu0 0.0
      %496 = vmatpush1.msra.mxu0 0.0
      %497 = vmatprep.subr.mxu0 0.0
      %498 = vmatpush1.msra.mxu0 0.0
      %499 = vmatprep.subr.mxu0 0.0
      %500 = vmatpush1.msra.mxu0 0.0
      %501 = vmatprep.subr.mxu0 %v380
      %502 = vmatpush1.msra.mxu0 %v378
      %503 = vmatprep.subr.mxu0 0.0
      %504 = vmatpush2.msra.mxu0 0.0
      %505 = vmatprep.subr.mxu0 0.0
      %506 = vmatpush2.msra.mxu0 0.0
      %507 = vmatprep.subr.mxu0 0.0
      %508 = vmatpush2.msra.mxu0 0.0
      %509 = vmatprep.subr.mxu0 0.0
      %510 = vmatpush2.msra.mxu0 0.0
      %511 = vmatprep.subr.mxu0 0.0
      %512 = vmatpush2.msra.mxu0 0.0
      %513 = vmatprep.subr.mxu0 0.0
      %514 = vmatpush2.msra.mxu0 0.0
      %515 = vmatprep.subr.mxu0 0.0
      %516 = vmatpush2.msra.mxu0 0.0
      %517 = vmatprep.subr.mxu0 0.0
      %518 = vmatpush2.msra.mxu0 0.0
      %519 = vmatprep.subr.mxu0 0.0
      %520 = vmatpush2.msra.mxu0 0.0
      %521 = vmatprep.subr.mxu0 0.0
      %522 = vmatpush2.msra.mxu0 0.0
      %523 = vmatprep.subr.mxu0 0.0
      %524 = vmatpush2.msra.mxu0 0.0
      %525 = vmatprep.subr.mxu0 0.0
      %526 = vmatpush2.msra.mxu0 0.0
      %527 = vmatprep.subr.mxu0 0.0
      %528 = vmatpush2.msra.mxu0 0.0
      %529 = vmatprep.subr.mxu0 0.0
      %530 = vmatpush2.msra.mxu0 0.0
      %531 = vmatprep.subr.mxu0 0.0
      %532 = vmatpush2.msra.mxu0 0.0
      %533 = vmatprep.subr.mxu0 0.0
      %534 = vmatpush2.msra.mxu0 0.0
      %535 = vmatprep.mubr.f32.mxu0 0.0
      %536 = vmatmul.mubr.f32.gmra.mxu0 %v362
      %v537 = vpop.f32.mrf.mxu0
      %v538 = vadd.f32 %v347, %v537
      %v539 = vpop.f32.mrf.mxu0
      %v540 = vadd.f32 %v351, %v539
      %541 = vmatprep.mubr.f32.mxu0 0.0
      %542 = vmatmul.mubr.f32.gmra.mxu0 %v365
      %v543 = vpop.f32.mrf.mxu0
      %v544 = vadd.f32 %v347, %v543
      %v545 = vpop.f32.mrf.mxu0
      %v546 = vadd.f32 %v351, %v545
      %547 = vmatprep.mubr.f32.mxu0 0.0
      %548 = vmatmul.mubr.f32.gmra.mxu0 %v368
      %v549 = vpop.f32.mrf.mxu0
      %v550 = vadd.f32 %v347, %v549
      %v551 = vpop.f32.mrf.mxu0
      %v552 = vadd.f32 %v351, %v551
      %553 = vmatprep.mubr.f32.mxu0 0.0
      %554 = vmatmul.mubr.f32.gmra.mxu0 %v371
      %v555 = vpop.f32.mrf.mxu0
      %v556 = vadd.f32 %v347, %v555
      %v557 = vpop.f32.mrf.mxu0
      %v558 = vadd.f32 %v351, %v557
      %559 = vdwg.mxu0
      %560 = vst [vmem:[#allocation3] sm:$0xff] %v449
      %561 = vst [vmem:[#allocation3 + $0x8] sm:$0xff] %v451
      %562 = vst [vmem:[#allocation3 + $0x10] sm:$0xff] %v538
      %563 = vst [vmem:[#allocation3 + $0x18] sm:$0xff] %v540
      %564 = vst [vmem:[#allocation3 + $0x20] sm:$0xff] %v455
      %565 = vst [vmem:[#allocation3 + $0x28] sm:$0xff] %v457
      %566 = vst [vmem:[#allocation3 + $0x30] sm:$0xff] %v544
      %567 = vst [vmem:[#allocation3 + $0x38] sm:$0xff] %v546
      %568 = vst [vmem:[#allocation3 + $0x40] sm:$0xff] %v461
      %569 = vst [vmem:[#allocation3 + $0x48] sm:$0xff] %v463
      %570 = vst [vmem:[#allocation3 + $0x50] sm:$0xff] %v550
      %571 = vst [vmem:[#allocation3 + $0x58] sm:$0xff] %v552
      %572 = vst [vmem:[#allocation3 + $0x60] sm:$0xff] %v467
      %573 = vst [vmem:[#allocation3 + $0x68] sm:$0xff] %v469
      %574 = vst [vmem:[#allocation3 + $0x70] sm:$0xff] %v556
      %575 = vst [vmem:[#allocation3 + $0x78] sm:$0xff] %v558
      %v576 = vld [vmem:[#allocation4] sm:$0xff]
      %v577 = vld [vmem:[#allocation5] sm:$0xff]
      %s578 = smul.u32 0, 4
      %s579 = smul.addr %s578, 8
      %s580 = scalar_lea.vmem [#allocation3], %s579
      %v581 = vld [vmem:[%s580] sm:$0xff]
      %v582 = vld [vmem:[%s580 + $0x8] sm:$0xff]
      %v583 = vld [vmem:[%s580 + $0x10] sm:$0xff]
      %v584 = vld [vmem:[%s580 + $0x18] sm:$0xff]
      %v585 = vld [vmem:[%s3] sm:$0xff]
      %v586 = vld [vmem:[%s3 + $0x8] sm:$0xff]
      %v587 = vld [vmem:[%s3 + $0x10] sm:$0xff]
      %v588 = vld [vmem:[%s3 + $0x18] sm:$0xff]
      %v589 = vld [vmem:[%s3 + $0x20] sm:$0xff]
      %v590 = vld [vmem:[%s3 + $0x28] sm:$0xff]
      %v591 = vld [vmem:[%s3 + $0x30] sm:$0xff]
      %v592 = vld [vmem:[%s3 + $0x38] sm:$0xff]
      %v593 = vld [vmem:[%s3 + $0x40] sm:$0xff]
      %v594 = vld [vmem:[%s3 + $0x48] sm:$0xff]
      %v595 = vld [vmem:[%s3 + $0x50] sm:$0xff]
      %v596 = vld [vmem:[%s3 + $0x58] sm:$0xff]
      %v597 = vld [vmem:[%s3 + $0x60] sm:$0xff]
      %v598 = vld [vmem:[%s3 + $0x68] sm:$0xff]
      %v599 = vld [vmem:[%s3 + $0x70] sm:$0xff]
      %v600 = vld [vmem:[%s3 + $0x78] sm:$0xff]
      %v601 = vld [vmem:[%s3 + $0x80] sm:$0xff]
      %v602 = vld [vmem:[%s3 + $0x88] sm:$0xff]
      %v603 = vld [vmem:[%s3 + $0x90] sm:$0xff]
      %v604 = vld [vmem:[%s3 + $0x98] sm:$0xff]
      %v605 = vld [vmem:[%s3 + $0xa0] sm:$0xff]
      %v606 = vld [vmem:[%s3 + $0xa8] sm:$0xff]
      %v607 = vld [vmem:[%s3 + $0xb0] sm:$0xff]
      %v608 = vld [vmem:[%s3 + $0xb8] sm:$0xff]
      %v609 = vld [vmem:[%s3 + $0xc0] sm:$0xff]
      %v610 = vld [vmem:[%s3 + $0xc8] sm:$0xff]
      %v611 = vld [vmem:[%s3 + $0xd0] sm:$0xff]
      %v612 = vld [vmem:[%s3 + $0xd8] sm:$0xff]
      %v613 = vld [vmem:[%s3 + $0xe0] sm:$0xff]
      %v614 = vld [vmem:[%s3 + $0xe8] sm:$0xff]
      %v615 = vld [vmem:[%s3 + $0xf0] sm:$0xff]
      %v616 = vld [vmem:[%s3 + $0xf8] sm:$0xff]
      %v617 = vld [vmem:[%s3 + $0x100] sm:$0xff]
      %v618 = vld [vmem:[%s3 + $0x108] sm:$0xff]
      %v619 = vld [vmem:[%s3 + $0x110] sm:$0xff]
      %v620 = vld [vmem:[%s3 + $0x118] sm:$0xff]
      %v621 = vld [vmem:[%s3 + $0x120] sm:$0xff]
      %v622 = vld [vmem:[%s3 + $0x128] sm:$0xff]
      %v623 = vld [vmem:[%s3 + $0x130] sm:$0xff]
      %v624 = vld [vmem:[%s3 + $0x138] sm:$0xff]
      %v625 = vld [vmem:[%s3 + $0x140] sm:$0xff]
      %v626 = vld [vmem:[%s3 + $0x148] sm:$0xff]
      %v627 = vld [vmem:[%s3 + $0x150] sm:$0xff]
      %v628 = vld [vmem:[%s3 + $0x158] sm:$0xff]
      %v629 = vld [vmem:[%s3 + $0x160] sm:$0xff]
      %v630 = vld [vmem:[%s3 + $0x168] sm:$0xff]
      %v631 = vld [vmem:[%s3 + $0x170] sm:$0xff]
      %v632 = vld [vmem:[%s3 + $0x178] sm:$0xff]
      %v633 = vld [vmem:[%s3 + $0x180] sm:$0xff]
      %v634 = vld [vmem:[%s3 + $0x188] sm:$0xff]
      %v635 = vld [vmem:[%s3 + $0x190] sm:$0xff]
      %v636 = vld [vmem:[%s3 + $0x198] sm:$0xff]
      %v637 = vld [vmem:[%s3 + $0x1a0] sm:$0xff]
      %v638 = vld [vmem:[%s3 + $0x1a8] sm:$0xff]
      %v639 = vld [vmem:[%s3 + $0x1b0] sm:$0xff]
      %v640 = vld [vmem:[%s3 + $0x1b8] sm:$0xff]
      %v641 = vld [vmem:[%s3 + $0x1c0] sm:$0xff]
      %v642 = vld [vmem:[%s3 + $0x1c8] sm:$0xff]
      %v643 = vld [vmem:[%s3 + $0x1d0] sm:$0xff]
      %v644 = vld [vmem:[%s3 + $0x1d8] sm:$0xff]
      %v645 = vld [vmem:[%s3 + $0x1e0] sm:$0xff]
      %v646 = vld [vmem:[%s3 + $0x1e8] sm:$0xff]
      %v647 = vld [vmem:[%s3 + $0x1f0] sm:$0xff]
      %v648 = vld [vmem:[%s3 + $0x1f8] sm:$0xff]
      %649 = vmatprep.subr.mxu0 %v646
      %650 = vmatpush1.msra.mxu0 %v645
      %651 = vmatprep.subr.mxu0 %v642
      %652 = vmatpush1.msra.mxu0 %v641
      %653 = vmatprep.subr.mxu0 %v638
      %654 = vmatpush1.msra.mxu0 %v637
      %655 = vmatprep.subr.mxu0 %v634
      %656 = vmatpush1.msra.mxu0 %v633
      %657 = vmatprep.subr.mxu0 %v630
      %658 = vmatpush1.msra.mxu0 %v629
      %659 = vmatprep.subr.mxu0 %v626
      %660 = vmatpush1.msra.mxu0 %v625
      %661 = vmatprep.subr.mxu0 %v622
      %662 = vmatpush1.msra.mxu0 %v621
      %663 = vmatprep.subr.mxu0 %v618
      %664 = vmatpush1.msra.mxu0 %v617
      %665 = vmatprep.subr.mxu0 %v614
      %666 = vmatpush1.msra.mxu0 %v613
      %667 = vmatprep.subr.mxu0 %v610
      %668 = vmatpush1.msra.mxu0 %v609
      %669 = vmatprep.subr.mxu0 %v606
      %670 = vmatpush1.msra.mxu0 %v605
      %671 = vmatprep.subr.mxu0 %v602
      %672 = vmatpush1.msra.mxu0 %v601
      %673 = vmatprep.subr.mxu0 %v598
      %674 = vmatpush1.msra.mxu0 %v597
      %675 = vmatprep.subr.mxu0 %v594
      %676 = vmatpush1.msra.mxu0 %v593
      %677 = vmatprep.subr.mxu0 %v590
      %678 = vmatpush1.msra.mxu0 %v589
      %679 = vmatprep.subr.mxu0 %v586
      %680 = vmatpush1.msra.mxu0 %v585
      %681 = vmatprep.subr.mxu0 0.0
      %682 = vmatpush2.msra.mxu0 0.0
      %683 = vmatprep.subr.mxu0 0.0
      %684 = vmatpush2.msra.mxu0 0.0
      %685 = vmatprep.subr.mxu0 0.0
      %686 = vmatpush2.msra.mxu0 0.0
      %687 = vmatprep.subr.mxu0 0.0
      %688 = vmatpush2.msra.mxu0 0.0
      %689 = vmatprep.subr.mxu0 0.0
      %690 = vmatpush2.msra.mxu0 0.0
      %691 = vmatprep.subr.mxu0 0.0
      %692 = vmatpush2.msra.mxu0 0.0
      %693 = vmatprep.subr.mxu0 0.0
      %694 = vmatpush2.msra.mxu0 0.0
      %695 = vmatprep.subr.mxu0 0.0
      %696 = vmatpush2.msra.mxu0 0.0
      %697 = vmatprep.subr.mxu0 0.0
      %698 = vmatpush2.msra.mxu0 0.0
      %699 = vmatprep.subr.mxu0 0.0
      %700 = vmatpush2.msra.mxu0 0.0
      %701 = vmatprep.subr.mxu0 0.0
      %702 = vmatpush2.msra.mxu0 0.0
      %703 = vmatprep.subr.mxu0 0.0
      %704 = vmatpush2.msra.mxu0 0.0
      %705 = vmatprep.subr.mxu0 0.0
      %706 = vmatpush2.msra.mxu0 0.0
      %707 = vmatprep.subr.mxu0 0.0
      %708 = vmatpush2.msra.mxu0 0.0
      %709 = vmatprep.subr.mxu0 0.0
      %710 = vmatpush2.msra.mxu0 0.0
      %711 = vmatprep.subr.mxu0 0.0
      %712 = vmatpush2.msra.mxu0 0.0
      %713 = vmatprep.mubr.f32.mxu0 0.0
      %714 = vmatmul.mubr.f32.gmra.mxu0 %v576
      %v715 = vpop.f32.mrf.mxu0
      %v716 = vadd.f32 0.0, %v715
      %v717 = vpop.f32.mrf.mxu0
      %v718 = vadd.f32 0.0, %v717
      %719 = vdwg.mxu0
      %720 = vmatprep.subr.mxu0 %v648
      %721 = vmatpush1.msra.mxu0 %v647
      %722 = vmatprep.subr.mxu0 %v644
      %723 = vmatpush1.msra.mxu0 %v643
      %724 = vmatprep.subr.mxu0 %v640
      %725 = vmatpush1.msra.mxu0 %v639
      %726 = vmatprep.subr.mxu0 %v636
      %727 = vmatpush1.msra.mxu0 %v635
      %728 = vmatprep.subr.mxu0 %v632
      %729 = vmatpush1.msra.mxu0 %v631
      %730 = vmatprep.subr.mxu0 %v628
      %731 = vmatpush1.msra.mxu0 %v627
      %732 = vmatprep.subr.mxu0 %v624
      %733 = vmatpush1.msra.mxu0 %v623
      %734 = vmatprep.subr.mxu0 %v620
      %735 = vmatpush1.msra.mxu0 %v619
      %736 = vmatprep.subr.mxu0 %v616
      %737 = vmatpush1.msra.mxu0 %v615
      %738 = vmatprep.subr.mxu0 %v612
      %739 = vmatpush1.msra.mxu0 %v611
      %740 = vmatprep.subr.mxu0 %v608
      %741 = vmatpush1.msra.mxu0 %v607
      %742 = vmatprep.subr.mxu0 %v604
      %743 = vmatpush1.msra.mxu0 %v603
      %744 = vmatprep.subr.mxu0 %v600
      %745 = vmatpush1.msra.mxu0 %v599
      %746 = vmatprep.subr.mxu0 %v596
      %747 = vmatpush1.msra.mxu0 %v595
      %748 = vmatprep.subr.mxu0 %v592
      %749 = vmatpush1.msra.mxu0 %v591
      %750 = vmatprep.subr.mxu0 %v588
      %751 = vmatpush1.msra.mxu0 %v587
      %752 = vmatprep.subr.mxu0 0.0
      %753 = vmatpush2.msra.mxu0 0.0
      %754 = vmatprep.subr.mxu0 0.0
      %755 = vmatpush2.msra.mxu0 0.0
      %756 = vmatprep.subr.mxu0 0.0
      %757 = vmatpush2.msra.mxu0 0.0
      %758 = vmatprep.subr.mxu0 0.0
      %759 = vmatpush2.msra.mxu0 0.0
      %760 = vmatprep.subr.mxu0 0.0
      %761 = vmatpush2.msra.mxu0 0.0
      %762 = vmatprep.subr.mxu0 0.0
      %763 = vmatpush2.msra.mxu0 0.0
      %764 = vmatprep.subr.mxu0 0.0
      %765 = vmatpush2.msra.mxu0 0.0
      %766 = vmatprep.subr.mxu0 0.0
      %767 = vmatpush2.msra.mxu0 0.0
      %768 = vmatprep.subr.mxu0 0.0
      %769 = vmatpush2.msra.mxu0 0.0
      %770 = vmatprep.subr.mxu0 0.0
      %771 = vmatpush2.msra.mxu0 0.0
      %772 = vmatprep.subr.mxu0 0.0
      %773 = vmatpush2.msra.mxu0 0.0
      %774 = vmatprep.subr.mxu0 0.0
      %775 = vmatpush2.msra.mxu0 0.0
      %776 = vmatprep.subr.mxu0 0.0
      %777 = vmatpush2.msra.mxu0 0.0
      %778 = vmatprep.subr.mxu0 0.0
      %779 = vmatpush2.msra.mxu0 0.0
      %780 = vmatprep.subr.mxu0 0.0
      %781 = vmatpush2.msra.mxu0 0.0
      %782 = vmatprep.subr.mxu0 0.0
      %783 = vmatpush2.msra.mxu0 0.0
      %784 = vmatprep.mubr.f32.mxu0 0.0
      %785 = vmatmul.mubr.f32.gmra.mxu0 %v576
      %v786 = vpop.f32.mrf.mxu0
      %v787 = vadd.f32 0.0, %v786
      %v788 = vpop.f32.mrf.mxu0
      %v789 = vadd.f32 0.0, %v788
      %790 = vdwg.mxu0
      %v791 = vadd.f32 %v581, %v716
      %v792 = vadd.f32 %v582, %v718
      %v793 = vadd.f32 %v583, %v787
      %v794 = vadd.f32 %v584, %v789
      %v795 = vxor.u32 %v791, 2147483648
      %v796 = vmul.f32 %v795, 1.442695
      %v797 = vpow.pop %v796
      %v798 = vadd.f32 %v797, 1.0
      %v799 = vrcp.pop %v798
      %v800 = vmul.f32 1.0, %v799
      %v801 = vxor.u32 %v792, 2147483648
      %v802 = vmul.f32 %v801, 1.442695
      %v803 = vpow.pop %v802
      %v804 = vadd.f32 %v803, 1.0
      %v805 = vrcp.pop %v804
      %v806 = vmul.f32 1.0, %v805
      %v807 = vtanh.pop %v793
      %v808 = vxor.u32 %v794, 2147483648
      %v809 = vmul.f32 %v808, 1.442695
      %v810 = vpow.pop %v809
      %v811 = vadd.f32 %v810, 1.0
      %v812 = vrcp.pop %v811
      %v813 = vmul.f32 1.0, %v812
      %v814 = vmul.f32 %v806, %v577
      %v815 = vmul.f32 %v800, %v807
      %v816 = vadd.f32 %v814, %v815
      %v817 = vtanh.pop %v816
      %v818 = vmul.f32 %v813, %v817
      %819 = vst [vmem:[#allocation2] sm:$0xff] %v818
      %s820 = smul.u32 1, 4
      %s821 = smul.addr %s820, 8
      %s822 = scalar_lea.vmem [#allocation3], %s821
      %v823 = vld [vmem:[%s822] sm:$0xff]
      %v824 = vld [vmem:[%s822 + $0x8] sm:$0xff]
      %v825 = vld [vmem:[%s822 + $0x10] sm:$0xff]
      %v826 = vld [vmem:[%s822 + $0x18] sm:$0xff]
      %v827 = vld [vmem:[%s3] sm:$0xff]
      %v828 = vld [vmem:[%s3 + $0x8] sm:$0xff]
      %v829 = vld [vmem:[%s3 + $0x10] sm:$0xff]
      %v830 = vld [vmem:[%s3 + $0x18] sm:$0xff]
      %v831 = vld [vmem:[%s3 + $0x20] sm:$0xff]
      %v832 = vld [vmem:[%s3 + $0x28] sm:$0xff]
      %v833 = vld [vmem:[%s3 + $0x30] sm:$0xff]
      %v834 = vld [vmem:[%s3 + $0x38] sm:$0xff]
      %v835 = vld [vmem:[%s3 + $0x40] sm:$0xff]
      %v836 = vld [vmem:[%s3 + $0x48] sm:$0xff]
      %v837 = vld [vmem:[%s3 + $0x50] sm:$0xff]
      %v838 = vld [vmem:[%s3 + $0x58] sm:$0xff]
      %v839 = vld [vmem:[%s3 + $0x60] sm:$0xff]
      %v840 = vld [vmem:[%s3 + $0x68] sm:$0xff]
      %v841 = vld [vmem:[%s3 + $0x70] sm:$0xff]
      %v842 = vld [vmem:[%s3 + $0x78] sm:$0xff]
      %v843 = vld [vmem:[%s3 + $0x80] sm:$0xff]
      %v844 = vld [vmem:[%s3 + $0x88] sm:$0xff]
      %v845 = vld [vmem:[%s3 + $0x90] sm:$0xff]
      %v846 = vld [vmem:[%s3 + $0x98] sm:$0xff]
      %v847 = vld [vmem:[%s3 + $0xa0] sm:$0xff]
      %v848 = vld [vmem:[%s3 + $0xa8] sm:$0xff]
      %v849 = vld [vmem:[%s3 + $0xb0] sm:$0xff]
      %v850 = vld [vmem:[%s3 + $0xb8] sm:$0xff]
      %v851 = vld [vmem:[%s3 + $0xc0] sm:$0xff]
      %v852 = vld [vmem:[%s3 + $0xc8] sm:$0xff]
      %v853 = vld [vmem:[%s3 + $0xd0] sm:$0xff]
      %v854 = vld [vmem:[%s3 + $0xd8] sm:$0xff]
      %v855 = vld [vmem:[%s3 + $0xe0] sm:$0xff]
      %v856 = vld [vmem:[%s3 + $0xe8] sm:$0xff]
      %v857 = vld [vmem:[%s3 + $0xf0] sm:$0xff]
      %v858 = vld [vmem:[%s3 + $0xf8] sm:$0xff]
      %v859 = vld [vmem:[%s3 + $0x100] sm:$0xff]
      %v860 = vld [vmem:[%s3 + $0x108] sm:$0xff]
      %v861 = vld [vmem:[%s3 + $0x110] sm:$0xff]
      %v862 = vld [vmem:[%s3 + $0x118] sm:$0xff]
      %v863 = vld [vmem:[%s3 + $0x120] sm:$0xff]
      %v864 = vld [vmem:[%s3 + $0x128] sm:$0xff]
      %v865 = vld [vmem:[%s3 + $0x130] sm:$0xff]
      %v866 = vld [vmem:[%s3 + $0x138] sm:$0xff]
      %v867 = vld [vmem:[%s3 + $0x140] sm:$0xff]
      %v868 = vld [vmem:[%s3 + $0x148] sm:$0xff]
      %v869 = vld [vmem:[%s3 + $0x150] sm:$0xff]
      %v870 = vld [vmem:[%s3 + $0x158] sm:$0xff]
      %v871 = vld [vmem:[%s3 + $0x160] sm:$0xff]
      %v872 = vld [vmem:[%s3 + $0x168] sm:$0xff]
      %v873 = vld [vmem:[%s3 + $0x170] sm:$0xff]
      %v874 = vld [vmem:[%s3 + $0x178] sm:$0xff]
      %v875 = vld [vmem:[%s3 + $0x180] sm:$0xff]
      %v876 = vld [vmem:[%s3 + $0x188] sm:$0xff]
      %v877 = vld [vmem:[%s3 + $0x190] sm:$0xff]
      %v878 = vld [vmem:[%s3 + $0x198] sm:$0xff]
      %v879 = vld [vmem:[%s3 + $0x1a0] sm:$0xff]
      %v880 = vld [vmem:[%s3 + $0x1a8] sm:$0xff]
      %v881 = vld [vmem:[%s3 + $0x1b0] sm:$0xff]
      %v882 = vld [vmem:[%s3 + $0x1b8] sm:$0xff]
      %v883 = vld [vmem:[%s3 + $0x1c0] sm:$0xff]
      %v884 = vld [vmem:[%s3 + $0x1c8] sm:$0xff]
      %v885 = vld [vmem:[%s3 + $0x1d0] sm:$0xff]
      %v886 = vld [vmem:[%s3 + $0x1d8] sm:$0xff]
      %v887 = vld [vmem:[%s3 + $0x1e0] sm:$0xff]
      %v888 = vld [vmem:[%s3 + $0x1e8] sm:$0xff]
      %v889 = vld [vmem:[%s3 + $0x1f0] sm:$0xff]
      %v890 = vld [vmem:[%s3 + $0x1f8] sm:$0xff]
      %891 = vmatprep.subr.mxu0 %v888
      %892 = vmatpush1.msra.mxu0 %v887
      %893 = vmatprep.subr.mxu0 %v884
      %894 = vmatpush1.msra.mxu0 %v883
      %895 = vmatprep.subr.mxu0 %v880
      %896 = vmatpush1.msra.mxu0 %v879
      %897 = vmatprep.subr.mxu0 %v876
      %898 = vmatpush1.msra.mxu0 %v875
      %899 = vmatprep.subr.mxu0 %v872
      %900 = vmatpush1.msra.mxu0 %v871
      %901 = vmatprep.subr.mxu0 %v868
      %902 = vmatpush1.msra.mxu0 %v867
      %903 = vmatprep.subr.mxu0 %v864
      %904 = vmatpush1.msra.mxu0 %v863
      %905 = vmatprep.subr.mxu0 %v860
      %906 = vmatpush1.msra.mxu0 %v859
      %907 = vmatprep.subr.mxu0 %v856
      %908 = vmatpush1.msra.mxu0 %v855
      %909 = vmatprep.subr.mxu0 %v852
      %910 = vmatpush1.msra.mxu0 %v851
      %911 = vmatprep.subr.mxu0 %v848
      %912 = vmatpush1.msra.mxu0 %v847
      %913 = vmatprep.subr.mxu0 %v844
      %914 = vmatpush1.msra.mxu0 %v843
      %915 = vmatprep.subr.mxu0 %v840
      %916 = vmatpush1.msra.mxu0 %v839
      %917 = vmatprep.subr.mxu0 %v836
      %918 = vmatpush1.msra.mxu0 %v835
      %919 = vmatprep.subr.mxu0 %v832
      %920 = vmatpush1.msra.mxu0 %v831
      %921 = vmatprep.subr.mxu0 %v828
      %922 = vmatpush1.msra.mxu0 %v827
      %923 = vmatprep.subr.mxu0 0.0
      %924 = vmatpush2.msra.mxu0 0.0
      %925 = vmatprep.subr.mxu0 0.0
      %926 = vmatpush2.msra.mxu0 0.0
      %927 = vmatprep.subr.mxu0 0.0
      %928 = vmatpush2.msra.mxu0 0.0
      %929 = vmatprep.subr.mxu0 0.0
      %930 = vmatpush2.msra.mxu0 0.0
      %931 = vmatprep.subr.mxu0 0.0
      %932 = vmatpush2.msra.mxu0 0.0
      %933 = vmatprep.subr.mxu0 0.0
      %934 = vmatpush2.msra.mxu0 0.0
      %935 = vmatprep.subr.mxu0 0.0
      %936 = vmatpush2.msra.mxu0 0.0
      %937 = vmatprep.subr.mxu0 0.0
      %938 = vmatpush2.msra.mxu0 0.0
      %939 = vmatprep.subr.mxu0 0.0
      %940 = vmatpush2.msra.mxu0 0.0
      %941 = vmatprep.subr.mxu0 0.0
      %942 = vmatpush2.msra.mxu0 0.0
      %943 = vmatprep.subr.mxu0 0.0
      %944 = vmatpush2.msra.mxu0 0.0
      %945 = vmatprep.subr.mxu0 0.0
      %946 = vmatpush2.msra.mxu0 0.0
      %947 = vmatprep.subr.mxu0 0.0
      %948 = vmatpush2.msra.mxu0 0.0
      %949 = vmatprep.subr.mxu0 0.0
      %950 = vmatpush2.msra.mxu0 0.0
      %951 = vmatprep.subr.mxu0 0.0
      %952 = vmatpush2.msra.mxu0 0.0
      %953 = vmatprep.subr.mxu0 0.0
      %954 = vmatpush2.msra.mxu0 0.0
      %955 = vmatprep.mubr.f32.mxu0 0.0
      %956 = vmatmul.mubr.f32.gmra.mxu0 %v818
      %v957 = vpop.f32.mrf.mxu0
      %v958 = vadd.f32 0.0, %v957
      %v959 = vpop.f32.mrf.mxu0
      %v960 = vadd.f32 0.0, %v959
      %961 = vdwg.mxu0
      %962 = vmatprep.subr.mxu0 %v890
      %963 = vmatpush1.msra.mxu0 %v889
      %964 = vmatprep.subr.mxu0 %v886
      %965 = vmatpush1.msra.mxu0 %v885
      %966 = vmatprep.subr.mxu0 %v882
      %967 = vmatpush1.msra.mxu0 %v881
      %968 = vmatprep.subr.mxu0 %v878
      %969 = vmatpush1.msra.mxu0 %v877
      %970 = vmatprep.subr.mxu0 %v874
      %971 = vmatpush1.msra.mxu0 %v873
      %972 = vmatprep.subr.mxu0 %v870
      %973 = vmatpush1.msra.mxu0 %v869
      %974 = vmatprep.subr.mxu0 %v866
      %975 = vmatpush1.msra.mxu0 %v865
      %976 = vmatprep.subr.mxu0 %v862
      %977 = vmatpush1.msra.mxu0 %v861
      %978 = vmatprep.subr.mxu0 %v858
      %979 = vmatpush1.msra.mxu0 %v857
      %980 = vmatprep.subr.mxu0 %v854
      %981 = vmatpush1.msra.mxu0 %v853
      %982 = vmatprep.subr.mxu0 %v850
      %983 = vmatpush1.msra.mxu0 %v849
      %984 = vmatprep.subr.mxu0 %v846
      %985 = vmatpush1.msra.mxu0 %v845
      %986 = vmatprep.subr.mxu0 %v842
      %987 = vmatpush1.msra.mxu0 %v841
      %988 = vmatprep.subr.mxu0 %v838
      %989 = vmatpush1.msra.mxu0 %v837
      %990 = vmatprep.subr.mxu0 %v834
      %991 = vmatpush1.msra.mxu0 %v833
      %992 = vmatprep.subr.mxu0 %v830
      %993 = vmatpush1.msra.mxu0 %v829
      %994 = vmatprep.subr.mxu0 0.0
      %995 = vmatpush2.msra.mxu0 0.0
      %996 = vmatprep.subr.mxu0 0.0
      %997 = vmatpush2.msra.mxu0 0.0
      %998 = vmatprep.subr.mxu0 0.0
      %999 = vmatpush2.msra.mxu0 0.0
      %1000 = vmatprep.subr.mxu0 0.0
      %1001 = vmatpush2.msra.mxu0 0.0
      %1002 = vmatprep.subr.mxu0 0.0
      %1003 = vmatpush2.msra.mxu0 0.0
      %1004 = vmatprep.subr.mxu0 0.0
      %1005 = vmatpush2.msra.mxu0 0.0
      %1006 = vmatprep.subr.mxu0 0.0
      %1007 = vmatpush2.msra.mxu0 0.0
      %1008 = vmatprep.subr.mxu0 0.0
      %1009 = vmatpush2.msra.mxu0 0.0
      %1010 = vmatprep.subr.mxu0 0.0
      %1011 = vmatpush2.msra.mxu0 0.0
      %1012 = vmatprep.subr.mxu0 0.0
      %1013 = vmatpush2.msra.mxu0 0.0
      %1014 = vmatprep.subr.mxu0 0.0
      %1015 = vmatpush2.msra.mxu0 0.0
      %1016 = vmatprep.subr.mxu0 0.0
      %1017 = vmatpush2.msra.mxu0 0.0
      %1018 = vmatprep.subr.mxu0 0.0
      %1019 = vmatpush2.msra.mxu0 0.0
      %1020 = vmatprep.subr.mxu0 0.0
      %1021 = vmatpush2.msra.mxu0 0.0
      %1022 = vmatprep.subr.mxu0 0.0
      %1023 = vmatpush2.msra.mxu0 0.0
      %1024 = vmatprep.subr.mxu0 0.0
      %1025 = vmatpush2.msra.mxu0 0.0
      %1026 = vmatprep.mubr.f32.mxu0 0.0
      %1027 = vmatmul.mubr.f32.gmra.mxu0 %v818
      %v1028 = vpop.f32.mrf.mxu0
      %v1029 = vadd.f32 0.0, %v1028
      %v1030 = vpop.f32.mrf.mxu0
      %v1031 = vadd.f32 0.0, %v1030
      %1032 = vdwg.mxu0
      %v1033 = vadd.f32 %v823, %v958
      %v1034 = vadd.f32 %v824, %v960
      %v1035 = vadd.f32 %v825, %v1029
      %v1036 = vadd.f32 %v826, %v1031
      %v1037 = vxor.u32 %v1033, 2147483648
      %v1038 = vmul.f32 %v1037, 1.442695
      %v1039 = vpow.pop %v1038
      %v1040 = vadd.f32 %v1039, 1.0
      %v1041 = vrcp.pop %v1040
      %v1042 = vmul.f32 1.0, %v1041
      %v1043 = vxor.u32 %v1034, 2147483648
      %v1044 = vmul.f32 %v1043, 1.442695
      %v1045 = vpow.pop %v1044
      %v1046 = vadd.f32 %v1045, 1.0
      %v1047 = vrcp.pop %v1046
      %v1048 = vmul.f32 1.0, %v1047
      %v1049 = vtanh.pop %v1035
      %v1050 = vxor.u32 %v1036, 2147483648
      %v1051 = vmul.f32 %v1050, 1.442695
      %v1052 = vpow.pop %v1051
      %v1053 = vadd.f32 %v1052, 1.0
      %v1054 = vrcp.pop %v1053
      %v1055 = vmul.f32 1.0, %v1054
      %v1056 = vmul.f32 %v1048, %v816
      %v1057 = vmul.f32 %v1042, %v1049
      %v1058 = vadd.f32 %v1056, %v1057
      %v1059 = vtanh.pop %v1058
      %v1060 = vmul.f32 %v1055, %v1059
      %s1061 = scalar_lea.vmem [#allocation2], 8
      %1062 = vst [vmem:[%s1061] sm:$0xff] %v1060
      %s1063 = smul.u32 2, 4
      %s1064 = smul.addr %s1063, 8
      %s1065 = scalar_lea.vmem [#allocation3], %s1064
      %v1066 = vld [vmem:[%s1065] sm:$0xff]
      %v1067 = vld [vmem:[%s1065 + $0x8] sm:$0xff]
      %v1068 = vld [vmem:[%s1065 + $0x10] sm:$0xff]
      %v1069 = vld [vmem:[%s1065 + $0x18] sm:$0xff]
      %v1070 = vld [vmem:[%s3] sm:$0xff]
      %v1071 = vld [vmem:[%s3 + $0x8] sm:$0xff]
      %v1072 = vld [vmem:[%s3 + $0x10] sm:$0xff]
      %v1073 = vld [vmem:[%s3 + $0x18] sm:$0xff]
      %v1074 = vld [vmem:[%s3 + $0x20] sm:$0xff]
      %v1075 = vld [vmem:[%s3 + $0x28] sm:$0xff]
      %v1076 = vld [vmem:[%s3 + $0x30] sm:$0xff]
      %v1077 = vld [vmem:[%s3 + $0x38] sm:$0xff]
      %v1078 = vld [vmem:[%s3 + $0x40] sm:$0xff]
      %v1079 = vld [vmem:[%s3 + $0x48] sm:$0xff]
      %v1080 = vld [vmem:[%s3 + $0x50] sm:$0xff]
      %v1081 = vld [vmem:[%s3 + $0x58] sm:$0xff]
      %v1082 = vld [vmem:[%s3 + $0x60] sm:$0xff]
      %v1083 = vld [vmem:[%s3 + $0x68] sm:$0xff]
      %v1084 = vld [vmem:[%s3 + $0x70] sm:$0xff]
      %v1085 = vld [vmem:[%s3 + $0x78] sm:$0xff]
      %v1086 = vld [vmem:[%s3 + $0x80] sm:$0xff]
      %v1087 = vld [vmem:[%s3 + $0x88] sm:$0xff]
      %v1088 = vld [vmem:[%s3 + $0x90] sm:$0xff]
      %v1089 = vld [vmem:[%s3 + $0x98] sm:$0xff]
      %v1090 = vld [vmem:[%s3 + $0xa0] sm:$0xff]
      %v1091 = vld [vmem:[%s3 + $0xa8] sm:$0xff]
      %v1092 = vld [vmem:[%s3 + $0xb0] sm:$0xff]
      %v1093 = vld [vmem:[%s3 + $0xb8] sm:$0xff]
      %v1094 = vld [vmem:[%s3 + $0xc0] sm:$0xff]
      %v1095 = vld [vmem:[%s3 + $0xc8] sm:$0xff]
      %v1096 = vld [vmem:[%s3 + $0xd0] sm:$0xff]
      %v1097 = vld [vmem:[%s3 + $0xd8] sm:$0xff]
      %v1098 = vld [vmem:[%s3 + $0xe0] sm:$0xff]
      %v1099 = vld [vmem:[%s3 + $0xe8] sm:$0xff]
      %v1100 = vld [vmem:[%s3 + $0xf0] sm:$0xff]
      %v1101 = vld [vmem:[%s3 + $0xf8] sm:$0xff]
      %v1102 = vld [vmem:[%s3 + $0x100] sm:$0xff]
      %v1103 = vld [vmem:[%s3 + $0x108] sm:$0xff]
      %v1104 = vld [vmem:[%s3 + $0x110] sm:$0xff]
      %v1105 = vld [vmem:[%s3 + $0x118] sm:$0xff]
      %v1106 = vld [vmem:[%s3 + $0x120] sm:$0xff]
      %v1107 = vld [vmem:[%s3 + $0x128] sm:$0xff]
      %v1108 = vld [vmem:[%s3 + $0x130] sm:$0xff]
      %v1109 = vld [vmem:[%s3 + $0x138] sm:$0xff]
      %v1110 = vld [vmem:[%s3 + $0x140] sm:$0xff]
      %v1111 = vld [vmem:[%s3 + $0x148] sm:$0xff]
      %v1112 = vld [vmem:[%s3 + $0x150] sm:$0xff]
      %v1113 = vld [vmem:[%s3 + $0x158] sm:$0xff]
      %v1114 = vld [vmem:[%s3 + $0x160] sm:$0xff]
      %v1115 = vld [vmem:[%s3 + $0x168] sm:$0xff]
      %v1116 = vld [vmem:[%s3 + $0x170] sm:$0xff]
      %v1117 = vld [vmem:[%s3 + $0x178] sm:$0xff]
      %v1118 = vld [vmem:[%s3 + $0x180] sm:$0xff]
      %v1119 = vld [vmem:[%s3 + $0x188] sm:$0xff]
      %v1120 = vld [vmem:[%s3 + $0x190] sm:$0xff]
      %v1121 = vld [vmem:[%s3 + $0x198] sm:$0xff]
      %v1122 = vld [vmem:[%s3 + $0x1a0] sm:$0xff]
      %v1123 = vld [vmem:[%s3 + $0x1a8] sm:$0xff]
      %v1124 = vld [vmem:[%s3 + $0x1b0] sm:$0xff]
      %v1125 = vld [vmem:[%s3 + $0x1b8] sm:$0xff]
      %v1126 = vld [vmem:[%s3 + $0x1c0] sm:$0xff]
      %v1127 = vld [vmem:[%s3 + $0x1c8] sm:$0xff]
      %v1128 = vld [vmem:[%s3 + $0x1d0] sm:$0xff]
      %v1129 = vld [vmem:[%s3 + $0x1d8] sm:$0xff]
      %v1130 = vld [vmem:[%s3 + $0x1e0] sm:$0xff]
      %v1131 = vld [vmem:[%s3 + $0x1e8] sm:$0xff]
      %v1132 = vld [vmem:[%s3 + $0x1f0] sm:$0xff]
      %v1133 = vld [vmem:[%s3 + $0x1f8] sm:$0xff]
      %1134 = vmatprep.subr.mxu0 %v1131
      %1135 = vmatpush1.msra.mxu0 %v1130
      %1136 = vmatprep.subr.mxu0 %v1127
      %1137 = vmatpush1.msra.mxu0 %v1126
      %1138 = vmatprep.subr.mxu0 %v1123
      %1139 = vmatpush1.msra.mxu0 %v1122
      %1140 = vmatprep.subr.mxu0 %v1119
      %1141 = vmatpush1.msra.mxu0 %v1118
      %1142 = vmatprep.subr.mxu0 %v1115
      %1143 = vmatpush1.msra.mxu0 %v1114
      %1144 = vmatprep.subr.mxu0 %v1111
      %1145 = vmatpush1.msra.mxu0 %v1110
      %1146 = vmatprep.subr.mxu0 %v1107
      %1147 = vmatpush1.msra.mxu0 %v1106
      %1148 = vmatprep.subr.mxu0 %v1103
      %1149 = vmatpush1.msra.mxu0 %v1102
      %1150 = vmatprep.subr.mxu0 %v1099
      %1151 = vmatpush1.msra.mxu0 %v1098
      %1152 = vmatprep.subr.mxu0 %v1095
      %1153 = vmatpush1.msra.mxu0 %v1094
      %1154 = vmatprep.subr.mxu0 %v1091
      %1155 = vmatpush1.msra.mxu0 %v1090
      %1156 = vmatprep.subr.mxu0 %v1087
      %1157 = vmatpush1.msra.mxu0 %v1086
      %1158 = vmatprep.subr.mxu0 %v1083
      %1159 = vmatpush1.msra.mxu0 %v1082
      %1160 = vmatprep.subr.mxu0 %v1079
      %1161 = vmatpush1.msra.mxu0 %v1078
      %1162 = vmatprep.subr.mxu0 %v1075
      %1163 = vmatpush1.msra.mxu0 %v1074
      %1164 = vmatprep.subr.mxu0 %v1071
      %1165 = vmatpush1.msra.mxu0 %v1070
      %1166 = vmatprep.subr.mxu0 0.0
      %1167 = vmatpush2.msra.mxu0 0.0
      %1168 = vmatprep.subr.mxu0 0.0
      %1169 = vmatpush2.msra.mxu0 0.0
      %1170 = vmatprep.subr.mxu0 0.0
      %1171 = vmatpush2.msra.mxu0 0.0
      %1172 = vmatprep.subr.mxu0 0.0
      %1173 = vmatpush2.msra.mxu0 0.0
      %1174 = vmatprep.subr.mxu0 0.0
      %1175 = vmatpush2.msra.mxu0 0.0
      %1176 = vmatprep.subr.mxu0 0.0
      %1177 = vmatpush2.msra.mxu0 0.0
      %1178 = vmatprep.subr.mxu0 0.0
      %1179 = vmatpush2.msra.mxu0 0.0
      %1180 = vmatprep.subr.mxu0 0.0
      %1181 = vmatpush2.msra.mxu0 0.0
      %1182 = vmatprep.subr.mxu0 0.0
      %1183 = vmatpush2.msra.mxu0 0.0
      %1184 = vmatprep.subr.mxu0 0.0
      %1185 = vmatpush2.msra.mxu0 0.0
      %1186 = vmatprep.subr.mxu0 0.0
      %1187 = vmatpush2.msra.mxu0 0.0
      %1188 = vmatprep.subr.mxu0 0.0
      %1189 = vmatpush2.msra.mxu0 0.0
      %1190 = vmatprep.subr.mxu0 0.0
      %1191 = vmatpush2.msra.mxu0 0.0
      %1192 = vmatprep.subr.mxu0 0.0
      %1193 = vmatpush2.msra.mxu0 0.0
      %1194 = vmatprep.subr.mxu0 0.0
      %1195 = vmatpush2.msra.mxu0 0.0
      %1196 = vmatprep.subr.mxu0 0.0
      %1197 = vmatpush2.msra.mxu0 0.0
      %1198 = vmatprep.mubr.f32.mxu0 0.0
      %1199 = vmatmul.mubr.f32.gmra.mxu0 %v1060
      %v1200 = vpop.f32.mrf.mxu0
      %v1201 = vadd.f32 0.0, %v1200
      %v1202 = vpop.f32.mrf.mxu0
      %v1203 = vadd.f32 0.0, %v1202
      %1204 = vdwg.mxu0
      %1205 = vmatprep.subr.mxu0 %v1133
      %1206 = vmatpush1.msra.mxu0 %v1132
      %1207 = vmatprep.subr.mxu0 %v1129
      %1208 = vmatpush1.msra.mxu0 %v1128
      %1209 = vmatprep.subr.mxu0 %v1125
      %1210 = vmatpush1.msra.mxu0 %v1124
      %1211 = vmatprep.subr.mxu0 %v1121
      %1212 = vmatpush1.msra.mxu0 %v1120
      %1213 = vmatprep.subr.mxu0 %v1117
      %1214 = vmatpush1.msra.mxu0 %v1116
      %1215 = vmatprep.subr.mxu0 %v1113
      %1216 = vmatpush1.msra.mxu0 %v1112
      %1217 = vmatprep.subr.mxu0 %v1109
      %1218 = vmatpush1.msra.mxu0 %v1108
      %1219 = vmatprep.subr.mxu0 %v1105
      %1220 = vmatpush1.msra.mxu0 %v1104
      %1221 = vmatprep.subr.mxu0 %v1101
      %1222 = vmatpush1.msra.mxu0 %v1100
      %1223 = vmatprep.subr.mxu0 %v1097
      %1224 = vmatpush1.msra.mxu0 %v1096
      %1225 = vmatprep.subr.mxu0 %v1093
      %1226 = vmatpush1.msra.mxu0 %v1092
      %1227 = vmatprep.subr.mxu0 %v1089
      %1228 = vmatpush1.msra.mxu0 %v1088
      %1229 = vmatprep.subr.mxu0 %v1085
      %1230 = vmatpush1.msra.mxu0 %v1084
      %1231 = vmatprep.subr.mxu0 %v1081
      %1232 = vmatpush1.msra.mxu0 %v1080
      %1233 = vmatprep.subr.mxu0 %v1077
      %1234 = vmatpush1.msra.mxu0 %v1076
      %1235 = vmatprep.subr.mxu0 %v1073
      %1236 = vmatpush1.msra.mxu0 %v1072
      %1237 = vmatprep.subr.mxu0 0.0
      %1238 = vmatpush2.msra.mxu0 0.0
      %1239 = vmatprep.subr.mxu0 0.0
      %1240 = vmatpush2.msra.mxu0 0.0
      %1241 = vmatprep.subr.mxu0 0.0
      %1242 = vmatpush2.msra.mxu0 0.0
      %1243 = vmatprep.subr.mxu0 0.0
      %1244 = vmatpush2.msra.mxu0 0.0
      %1245 = vmatprep.subr.mxu0 0.0
      %1246 = vmatpush2.msra.mxu0 0.0
      %1247 = vmatprep.subr.mxu0 0.0
      %1248 = vmatpush2.msra.mxu0 0.0
      %1249 = vmatprep.subr.mxu0 0.0
      %1250 = vmatpush2.msra.mxu0 0.0
      %1251 = vmatprep.subr.mxu0 0.0
      %1252 = vmatpush2.msra.mxu0 0.0
      %1253 = vmatprep.subr.mxu0 0.0
      %1254 = vmatpush2.msra.mxu0 0.0
      %1255 = vmatprep.subr.mxu0 0.0
      %1256 = vmatpush2.msra.mxu0 0.0
      %1257 = vmatprep.subr.mxu0 0.0
      %1258 = vmatpush2.msra.mxu0 0.0
      %1259 = vmatprep.subr.mxu0 0.0
      %1260 = vmatpush2.msra.mxu0 0.0
      %1261 = vmatprep.subr.mxu0 0.0
      %1262 = vmatpush2.msra.mxu0 0.0
      %1263 = vmatprep.subr.mxu0 0.0
      %1264 = vmatpush2.msra.mxu0 0.0
      %1265 = vmatprep.subr.mxu0 0.0
      %1266 = vmatpush2.msra.mxu0 0.0
      %1267 = vmatprep.subr.mxu0 0.0
      %1268 = vmatpush2.msra.mxu0 0.0
      %1269 = vmatprep.mubr.f32.mxu0 0.0
      %1270 = vmatmul.mubr.f32.gmra.mxu0 %v1060
      %v1271 = vpop.f32.mrf.mxu0
      %v1272 = vadd.f32 0.0, %v1271
      %v1273 = vpop.f32.mrf.mxu0
      %v1274 = vadd.f32 0.0, %v1273
      %1275 = vdwg.mxu0
      %v1276 = vadd.f32 %v1066, %v1201
      %v1277 = vadd.f32 %v1067, %v1203
      %v1278 = vadd.f32 %v1068, %v1272
      %v1279 = vadd.f32 %v1069, %v1274
      %v1280 = vxor.u32 %v1276, 2147483648
      %v1281 = vmul.f32 %v1280, 1.442695
      %v1282 = vpow.pop %v1281
      %v1283 = vadd.f32 %v1282, 1.0
      %v1284 = vrcp.pop %v1283
      %v1285 = vmul.f32 1.0, %v1284
      %v1286 = vxor.u32 %v1277, 2147483648
      %v1287 = vmul.f32 %v1286, 1.442695
      %v1288 = vpow.pop %v1287
      %v1289 = vadd.f32 %v1288, 1.0
      %v1290 = vrcp.pop %v1289
      %v1291 = vmul.f32 1.0, %v1290
      %v1292 = vtanh.pop %v1278
      %v1293 = vxor.u32 %v1279, 2147483648
      %v1294 = vmul.f32 %v1293, 1.442695
      %v1295 = vpow.pop %v1294
      %v1296 = vadd.f32 %v1295, 1.0
      %v1297 = vrcp.pop %v1296
      %v1298 = vmul.f32 1.0, %v1297
      %v1299 = vmul.f32 %v1291, %v1058
      %v1300 = vmul.f32 %v1285, %v1292
      %v1301 = vadd.f32 %v1299, %v1300
      %v1302 = vtanh.pop %v1301
      %v1303 = vmul.f32 %v1298, %v1302
      %s1304 = scalar_lea.vmem [#allocation2], 16
      %1305 = vst [vmem:[%s1304] sm:$0xff] %v1303
      %s1306 = smul.u32 3, 4
      %s1307 = smul.addr %s1306, 8
      %s1308 = scalar_lea.vmem [#allocation3], %s1307
      %v1309 = vld [vmem:[%s1308] sm:$0xff]
      %v1310 = vld [vmem:[%s1308 + $0x8] sm:$0xff]
      %v1311 = vld [vmem:[%s1308 + $0x10] sm:$0xff]
      %v1312 = vld [vmem:[%s1308 + $0x18] sm:$0xff]
      %v1313 = vld [vmem:[%s3] sm:$0xff]
      %v1314 = vld [vmem:[%s3 + $0x8] sm:$0xff]
      %v1315 = vld [vmem:[%s3 + $0x10] sm:$0xff]
      %v1316 = vld [vmem:[%s3 + $0x18] sm:$0xff]
      %v1317 = vld [vmem:[%s3 + $0x20] sm:$0xff]
      %v1318 = vld [vmem:[%s3 + $0x28] sm:$0xff]
      %v1319 = vld [vmem:[%s3 + $0x30] sm:$0xff]
      %v1320 = vld [vmem:[%s3 + $0x38] sm:$0xff]
      %v1321 = vld [vmem:[%s3 + $0x40] sm:$0xff]
      %v1322 = vld [vmem:[%s3 + $0x48] sm:$0xff]
      %v1323 = vld [vmem:[%s3 + $0x50] sm:$0xff]
      %v1324 = vld [vmem:[%s3 + $0x58] sm:$0xff]
      %v1325 = vld [vmem:[%s3 + $0x60] sm:$0xff]
      %v1326 = vld [vmem:[%s3 + $0x68] sm:$0xff]
      %v1327 = vld [vmem:[%s3 + $0x70] sm:$0xff]
      %v1328 = vld [vmem:[%s3 + $0x78] sm:$0xff]
      %v1329 = vld [vmem:[%s3 + $0x80] sm:$0xff]
      %v1330 = vld [vmem:[%s3 + $0x88] sm:$0xff]
      %v1331 = vld [vmem:[%s3 + $0x90] sm:$0xff]
      %v1332 = vld [vmem:[%s3 + $0x98] sm:$0xff]
      %v1333 = vld [vmem:[%s3 + $0xa0] sm:$0xff]
      %v1334 = vld [vmem:[%s3 + $0xa8] sm:$0xff]
      %v1335 = vld [vmem:[%s3 + $0xb0] sm:$0xff]
      %v1336 = vld [vmem:[%s3 + $0xb8] sm:$0xff]
      %v1337 = vld [vmem:[%s3 + $0xc0] sm:$0xff]
      %v1338 = vld [vmem:[%s3 + $0xc8] sm:$0xff]
      %v1339 = vld [vmem:[%s3 + $0xd0] sm:$0xff]
      %v1340 = vld [vmem:[%s3 + $0xd8] sm:$0xff]
      %v1341 = vld [vmem:[%s3 + $0xe0] sm:$0xff]
      %v1342 = vld [vmem:[%s3 + $0xe8] sm:$0xff]
      %v1343 = vld [vmem:[%s3 + $0xf0] sm:$0xff]
      %v1344 = vld [vmem:[%s3 + $0xf8] sm:$0xff]
      %v1345 = vld [vmem:[%s3 + $0x100] sm:$0xff]
      %v1346 = vld [vmem:[%s3 + $0x108] sm:$0xff]
      %v1347 = vld [vmem:[%s3 + $0x110] sm:$0xff]
      %v1348 = vld [vmem:[%s3 + $0x118] sm:$0xff]
      %v1349 = vld [vmem:[%s3 + $0x120] sm:$0xff]
      %v1350 = vld [vmem:[%s3 + $0x128] sm:$0xff]
      %v1351 = vld [vmem:[%s3 + $0x130] sm:$0xff]
      %v1352 = vld [vmem:[%s3 + $0x138] sm:$0xff]
      %v1353 = vld [vmem:[%s3 + $0x140] sm:$0xff]
      %v1354 = vld [vmem:[%s3 + $0x148] sm:$0xff]
      %v1355 = vld [vmem:[%s3 + $0x150] sm:$0xff]
      %v1356 = vld [vmem:[%s3 + $0x158] sm:$0xff]
      %v1357 = vld [vmem:[%s3 + $0x160] sm:$0xff]
      %v1358 = vld [vmem:[%s3 + $0x168] sm:$0xff]
      %v1359 = vld [vmem:[%s3 + $0x170] sm:$0xff]
      %v1360 = vld [vmem:[%s3 + $0x178] sm:$0xff]
      %v1361 = vld [vmem:[%s3 + $0x180] sm:$0xff]
      %v1362 = vld [vmem:[%s3 + $0x188] sm:$0xff]
      %v1363 = vld [vmem:[%s3 + $0x190] sm:$0xff]
      %v1364 = vld [vmem:[%s3 + $0x198] sm:$0xff]
      %v1365 = vld [vmem:[%s3 + $0x1a0] sm:$0xff]
      %v1366 = vld [vmem:[%s3 + $0x1a8] sm:$0xff]
      %v1367 = vld [vmem:[%s3 + $0x1b0] sm:$0xff]
      %v1368 = vld [vmem:[%s3 + $0x1b8] sm:$0xff]
      %v1369 = vld [vmem:[%s3 + $0x1c0] sm:$0xff]
      %v1370 = vld [vmem:[%s3 + $0x1c8] sm:$0xff]
      %v1371 = vld [vmem:[%s3 + $0x1d0] sm:$0xff]
      %v1372 = vld [vmem:[%s3 + $0x1d8] sm:$0xff]
      %v1373 = vld [vmem:[%s3 + $0x1e0] sm:$0xff]
      %v1374 = vld [vmem:[%s3 + $0x1e8] sm:$0xff]
      %v1375 = vld [vmem:[%s3 + $0x1f0] sm:$0xff]
      %v1376 = vld [vmem:[%s3 + $0x1f8] sm:$0xff]
      %1377 = vmatprep.subr.mxu0 %v1374
      %1378 = vmatpush1.msra.mxu0 %v1373
      %1379 = vmatprep.subr.mxu0 %v1370
      %1380 = vmatpush1.msra.mxu0 %v1369
      %1381 = vmatprep.subr.mxu0 %v1366
      %1382 = vmatpush1.msra.mxu0 %v1365
      %1383 = vmatprep.subr.mxu0 %v1362
      %1384 = vmatpush1.msra.mxu0 %v1361
      %1385 = vmatprep.subr.mxu0 %v1358
      %1386 = vmatpush1.msra.mxu0 %v1357
      %1387 = vmatprep.subr.mxu0 %v1354
      %1388 = vmatpush1.msra.mxu0 %v1353
      %1389 = vmatprep.subr.mxu0 %v1350
      %1390 = vmatpush1.msra.mxu0 %v1349
      %1391 = vmatprep.subr.mxu0 %v1346
      %1392 = vmatpush1.msra.mxu0 %v1345
      %1393 = vmatprep.subr.mxu0 %v1342
      %1394 = vmatpush1.msra.mxu0 %v1341
      %1395 = vmatprep.subr.mxu0 %v1338
      %1396 = vmatpush1.msra.mxu0 %v1337
      %1397 = vmatprep.subr.mxu0 %v1334
      %1398 = vmatpush1.msra.mxu0 %v1333
      %1399 = vmatprep.subr.mxu0 %v1330
      %1400 = vmatpush1.msra.mxu0 %v1329
      %1401 = vmatprep.subr.mxu0 %v1326
      %1402 = vmatpush1.msra.mxu0 %v1325
      %1403 = vmatprep.subr.mxu0 %v1322
      %1404 = vmatpush1.msra.mxu0 %v1321
      %1405 = vmatprep.subr.mxu0 %v1318
      %1406 = vmatpush1.msra.mxu0 %v1317
      %1407 = vmatprep.subr.mxu0 %v1314
      %1408 = vmatpush1.msra.mxu0 %v1313
      %1409 = vmatprep.subr.mxu0 0.0
      %1410 = vmatpush2.msra.mxu0 0.0
      %1411 = vmatprep.subr.mxu0 0.0
      %1412 = vmatpush2.msra.mxu0 0.0
      %1413 = vmatprep.subr.mxu0 0.0
      %1414 = vmatpush2.msra.mxu0 0.0
      %1415 = vmatprep.subr.mxu0 0.0
      %1416 = vmatpush2.msra.mxu0 0.0
      %1417 = vmatprep.subr.mxu0 0.0
      %1418 = vmatpush2.msra.mxu0 0.0
      %1419 = vmatprep.subr.mxu0 0.0
      %1420 = vmatpush2.msra.mxu0 0.0
      %1421 = vmatprep.subr.mxu0 0.0
      %1422 = vmatpush2.msra.mxu0 0.0
      %1423 = vmatprep.subr.mxu0 0.0
      %1424 = vmatpush2.msra.mxu0 0.0
      %1425 = vmatprep.subr.mxu0 0.0
      %1426 = vmatpush2.msra.mxu0 0.0
      %1427 = vmatprep.subr.mxu0 0.0
      %1428 = vmatpush2.msra.mxu0 0.0
      %1429 = vmatprep.subr.mxu0 0.0
      %1430 = vmatpush2.msra.mxu0 0.0
      %1431 = vmatprep.subr.mxu0 0.0
      %1432 = vmatpush2.msra.mxu0 0.0
      %1433 = vmatprep.subr.mxu0 0.0
      %1434 = vmatpush2.msra.mxu0 0.0
      %1435 = vmatprep.subr.mxu0 0.0
      %1436 = vmatpush2.msra.mxu0 0.0
      %1437 = vmatprep.subr.mxu0 0.0
      %1438 = vmatpush2.msra.mxu0 0.0
      %1439 = vmatprep.subr.mxu0 0.0
      %1440 = vmatpush2.msra.mxu0 0.0
      %1441 = vmatprep.mubr.f32.mxu0 0.0
      %1442 = vmatmul.mubr.f32.gmra.mxu0 %v1303
      %v1443 = vpop.f32.mrf.mxu0
      %v1444 = vadd.f32 0.0, %v1443
      %v1445 = vpop.f32.mrf.mxu0
      %v1446 = vadd.f32 0.0, %v1445
      %1447 = vdwg.mxu0
      %1448 = vmatprep.subr.mxu0 %v1376
      %1449 = vmatpush1.msra.mxu0 %v1375
      %1450 = vmatprep.subr.mxu0 %v1372
      %1451 = vmatpush1.msra.mxu0 %v1371
      %1452 = vmatprep.subr.mxu0 %v1368
      %1453 = vmatpush1.msra.mxu0 %v1367
      %1454 = vmatprep.subr.mxu0 %v1364
      %1455 = vmatpush1.msra.mxu0 %v1363
      %1456 = vmatprep.subr.mxu0 %v1360
      %1457 = vmatpush1.msra.mxu0 %v1359
      %1458 = vmatprep.subr.mxu0 %v1356
      %1459 = vmatpush1.msra.mxu0 %v1355
      %1460 = vmatprep.subr.mxu0 %v1352
      %1461 = vmatpush1.msra.mxu0 %v1351
      %1462 = vmatprep.subr.mxu0 %v1348
      %1463 = vmatpush1.msra.mxu0 %v1347
      %1464 = vmatprep.subr.mxu0 %v1344
      %1465 = vmatpush1.msra.mxu0 %v1343
      %1466 = vmatprep.subr.mxu0 %v1340
      %1467 = vmatpush1.msra.mxu0 %v1339
      %1468 = vmatprep.subr.mxu0 %v1336
      %1469 = vmatpush1.msra.mxu0 %v1335
      %1470 = vmatprep.subr.mxu0 %v1332
      %1471 = vmatpush1.msra.mxu0 %v1331
      %1472 = vmatprep.subr.mxu0 %v1328
      %1473 = vmatpush1.msra.mxu0 %v1327
      %1474 = vmatprep.subr.mxu0 %v1324
      %1475 = vmatpush1.msra.mxu0 %v1323
      %1476 = vmatprep.subr.mxu0 %v1320
      %1477 = vmatpush1.msra.mxu0 %v1319
      %1478 = vmatprep.subr.mxu0 %v1316
      %1479 = vmatpush1.msra.mxu0 %v1315
      %1480 = vmatprep.subr.mxu0 0.0
      %1481 = vmatpush2.msra.mxu0 0.0
      %1482 = vmatprep.subr.mxu0 0.0
      %1483 = vmatpush2.msra.mxu0 0.0
      %1484 = vmatprep.subr.mxu0 0.0
      %1485 = vmatpush2.msra.mxu0 0.0
      %1486 = vmatprep.subr.mxu0 0.0
      %1487 = vmatpush2.msra.mxu0 0.0
      %1488 = vmatprep.subr.mxu0 0.0
      %1489 = vmatpush2.msra.mxu0 0.0
      %1490 = vmatprep.subr.mxu0 0.0
      %1491 = vmatpush2.msra.mxu0 0.0
      %1492 = vmatprep.subr.mxu0 0.0
      %1493 = vmatpush2.msra.mxu0 0.0
      %1494 = vmatprep.subr.mxu0 0.0
      %1495 = vmatpush2.msra.mxu0 0.0
      %1496 = vmatprep.subr.mxu0 0.0
      %1497 = vmatpush2.msra.mxu0 0.0
      %1498 = vmatprep.subr.mxu0 0.0
      %1499 = vmatpush2.msra.mxu0 0.0
      %1500 = vmatprep.subr.mxu0 0.0
      %1501 = vmatpush2.msra.mxu0 0.0
      %1502 = vmatprep.subr.mxu0 0.0
      %1503 = vmatpush2.msra.mxu0 0.0
      %1504 = vmatprep.subr.mxu0 0.0
      %1505 = vmatpush2.msra.mxu0 0.0
      %1506 = vmatprep.subr.mxu0 0.0
      %1507 = vmatpush2.msra.mxu0 0.0
      %1508 = vmatprep.subr.mxu0 0.0
      %1509 = vmatpush2.msra.mxu0 0.0
      %1510 = vmatprep.subr.mxu0 0.0
      %1511 = vmatpush2.msra.mxu0 0.0
      %1512 = vmatprep.mubr.f32.mxu0 0.0
      %1513 = vmatmul.mubr.f32.gmra.mxu0 %v1303
      %v1514 = vpop.f32.mrf.mxu0
      %v1515 = vadd.f32 0.0, %v1514
      %v1516 = vpop.f32.mrf.mxu0
      %v1517 = vadd.f32 0.0, %v1516
      %1518 = vdwg.mxu0
      %v1519 = vadd.f32 %v1309, %v1444
      %v1520 = vadd.f32 %v1310, %v1446
      %v1521 = vadd.f32 %v1311, %v1515
      %v1522 = vadd.f32 %v1312, %v1517
      %v1523 = vxor.u32 %v1519, 2147483648
      %v1524 = vmul.f32 %v1523, 1.442695
      %v1525 = vpow.pop %v1524
      %v1526 = vadd.f32 %v1525, 1.0
      %v1527 = vrcp.pop %v1526
      %v1528 = vmul.f32 1.0, %v1527
      %v1529 = vxor.u32 %v1520, 2147483648
      %v1530 = vmul.f32 %v1529, 1.442695
      %v1531 = vpow.pop %v1530
      %v1532 = vadd.f32 %v1531, 1.0
      %v1533 = vrcp.pop %v1532
      %v1534 = vmul.f32 1.0, %v1533
      %v1535 = vtanh.pop %v1521
      %v1536 = vxor.u32 %v1522, 2147483648
      %v1537 = vmul.f32 %v1536, 1.442695
      %v1538 = vpow.pop %v1537
      %v1539 = vadd.f32 %v1538, 1.0
      %v1540 = vrcp.pop %v1539
      %v1541 = vmul.f32 1.0, %v1540
      %v1542 = vmul.f32 %v1534, %v1301
      %v1543 = vmul.f32 %v1528, %v1535
      %v1544 = vadd.f32 %v1542, %v1543
      %v1545 = vtanh.pop %v1544
      %v1546 = vmul.f32 %v1541, %v1545
      %s1547 = scalar_lea.vmem [#allocation2], 24
      %1548 = vst [vmem:[%s1547] sm:$0xff] %v1546
      %1549 = vst [vmem:[#allocation4] sm:$0xff] %v1546
      %1550 = vst [vmem:[#allocation5] sm:$0xff] %v1544
      %v1551 = vld [vmem:[#allocation2] sm:$0xff]
      %v1552 = vld [vmem:[#allocation2 + $0x8] sm:$0xff]
      %v1553 = vld [vmem:[#allocation2 + $0x10] sm:$0xff]
      %v1554 = vld [vmem:[#allocation2 + $0x18] sm:$0xff]
      %v1555 = vld [vmem:[%s2] sm:$0xff]
      %v1556 = vld [vmem:[%s2 + $0x8] sm:$0xff]
      %v1557 = vld [vmem:[%s2 + $0x10] sm:$0xff]
      %v1558 = vld [vmem:[%s2 + $0x18] sm:$0xff]
      %v1559 = vld [vmem:[%s2 + $0x20] sm:$0xff]
      %v1560 = vld [vmem:[%s2 + $0x28] sm:$0xff]
      %v1561 = vld [vmem:[%s2 + $0x30] sm:$0xff]
      %v1562 = vld [vmem:[%s2 + $0x38] sm:$0xff]
      %v1563 = vld [vmem:[%s2 + $0x40] sm:$0xff]
      %v1564 = vld [vmem:[%s2 + $0x48] sm:$0xff]
      %v1565 = vld [vmem:[%s2 + $0x50] sm:$0xff]
      %v1566 = vld [vmem:[%s2 + $0x58] sm:$0xff]
      %v1567 = vld [vmem:[%s2 + $0x60] sm:$0xff]
      %v1568 = vld [vmem:[%s2 + $0x68] sm:$0xff]
      %v1569 = vld [vmem:[%s2 + $0x70] sm:$0xff]
      %v1570 = vld [vmem:[%s2 + $0x78] sm:$0xff]
      %v1571 = vld [vmem:[%s2 + $0x80] sm:$0xff]
      %v1572 = vld [vmem:[%s2 + $0x88] sm:$0xff]
      %v1573 = vld [vmem:[%s2 + $0x90] sm:$0xff]
      %v1574 = vld [vmem:[%s2 + $0x98] sm:$0xff]
      %v1575 = vld [vmem:[%s2 + $0xa0] sm:$0xff]
      %v1576 = vld [vmem:[%s2 + $0xa8] sm:$0xff]
      %v1577 = vld [vmem:[%s2 + $0xb0] sm:$0xff]
      %v1578 = vld [vmem:[%s2 + $0xb8] sm:$0xff]
      %v1579 = vld [vmem:[%s2 + $0xc0] sm:$0xff]
      %v1580 = vld [vmem:[%s2 + $0xc8] sm:$0xff]
      %v1581 = vld [vmem:[%s2 + $0xd0] sm:$0xff]
      %v1582 = vld [vmem:[%s2 + $0xd8] sm:$0xff]
      %v1583 = vld [vmem:[%s2 + $0xe0] sm:$0xff]
      %v1584 = vld [vmem:[%s2 + $0xe8] sm:$0xff]
      %v1585 = vld [vmem:[%s2 + $0xf0] sm:$0xff]
      %v1586 = vld [vmem:[%s2 + $0xf8] sm:$0xff]
      %v1587 = vld [vmem:[%s2 + $0x100] sm:$0xff]
      %v1588 = vld [vmem:[%s2 + $0x108] sm:$0xff]
      %v1589 = vld [vmem:[%s2 + $0x110] sm:$0xff]
      %v1590 = vld [vmem:[%s2 + $0x118] sm:$0xff]
      %v1591 = vld [vmem:[%s2 + $0x120] sm:$0xff]
      %v1592 = vld [vmem:[%s2 + $0x128] sm:$0xff]
      %v1593 = vld [vmem:[%s2 + $0x130] sm:$0xff]
      %v1594 = vld [vmem:[%s2 + $0x138] sm:$0xff]
      %v1595 = vld [vmem:[%s2 + $0x140] sm:$0xff]
      %v1596 = vld [vmem:[%s2 + $0x148] sm:$0xff]
      %v1597 = vld [vmem:[%s2 + $0x150] sm:$0xff]
      %v1598 = vld [vmem:[%s2 + $0x158] sm:$0xff]
      %v1599 = vld [vmem:[%s2 + $0x160] sm:$0xff]
      %v1600 = vld [vmem:[%s2 + $0x168] sm:$0xff]
      %v1601 = vld [vmem:[%s2 + $0x170] sm:$0xff]
      %v1602 = vld [vmem:[%s2 + $0x178] sm:$0xff]
      %v1603 = vld [vmem:[%s2 + $0x180] sm:$0xff]
      %v1604 = vld [vmem:[%s2 + $0x188] sm:$0xff]
      %v1605 = vld [vmem:[%s2 + $0x190] sm:$0xff]
      %v1606 = vld [vmem:[%s2 + $0x198] sm:$0xff]
      %v1607 = vld [vmem:[%s2 + $0x1a0] sm:$0xff]
      %v1608 = vld [vmem:[%s2 + $0x1a8] sm:$0xff]
      %v1609 = vld [vmem:[%s2 + $0x1b0] sm:$0xff]
      %v1610 = vld [vmem:[%s2 + $0x1b8] sm:$0xff]
      %v1611 = vld [vmem:[%s2 + $0x1c0] sm:$0xff]
      %v1612 = vld [vmem:[%s2 + $0x1c8] sm:$0xff]
      %v1613 = vld [vmem:[%s2 + $0x1d0] sm:$0xff]
      %v1614 = vld [vmem:[%s2 + $0x1d8] sm:$0xff]
      %v1615 = vld [vmem:[%s2 + $0x1e0] sm:$0xff]
      %v1616 = vld [vmem:[%s2 + $0x1e8] sm:$0xff]
      %v1617 = vld [vmem:[%s2 + $0x1f0] sm:$0xff]
      %v1618 = vld [vmem:[%s2 + $0x1f8] sm:$0xff]
      %v1619 = vld [vmem:[%s6] sm:$0xf]
      %v1621 = vlaneseq
      %v1622 = vshrl.u32 %v1621, 7
      %v1623 = vsub.s32 0, %v1622
      %v1624 = vrot.slane %v1619, %v1623
      %v1625 = vlaneseq
      %v1626 = vshrl.u32 %v1625, 7
      %v1627 = vsub.s32 1, %v1626
      %v1628 = vrot.slane %v1619, %v1627
      %v1629 = vlaneseq
      %v1630 = vshrl.u32 %v1629, 7
      %v1631 = vsub.s32 2, %v1630
      %v1632 = vrot.slane %v1619, %v1631
      %v1633 = vlaneseq
      %v1634 = vshrl.u32 %v1633, 7
      %v1635 = vsub.s32 3, %v1634
      %v1636 = vrot.slane %v1619, %v1635
      %1641 = vmatprep.subr.mxu0 %v1616
      %1642 = vmatpush1.msra.mxu0 %v1615
      %1643 = vmatprep.subr.mxu0 %v1612
      %1644 = vmatpush1.msra.mxu0 %v1611
      %1645 = vmatprep.subr.mxu0 %v1608
      %1646 = vmatpush1.msra.mxu0 %v1607
      %1647 = vmatprep.subr.mxu0 %v1604
      %1648 = vmatpush1.msra.mxu0 %v1603
      %1649 = vmatprep.subr.mxu0 %v1600
      %1650 = vmatpush1.msra.mxu0 %v1599
      %1651 = vmatprep.subr.mxu0 %v1596
      %1652 = vmatpush1.msra.mxu0 %v1595
      %1653 = vmatprep.subr.mxu0 %v1592
      %1654 = vmatpush1.msra.mxu0 %v1591
      %1655 = vmatprep.subr.mxu0 %v1588
      %1656 = vmatpush1.msra.mxu0 %v1587
      %1657 = vmatprep.subr.mxu0 %v1584
      %1658 = vmatpush1.msra.mxu0 %v1583
      %1659 = vmatprep.subr.mxu0 %v1580
      %1660 = vmatpush1.msra.mxu0 %v1579
      %1661 = vmatprep.subr.mxu0 %v1576
      %1662 = vmatpush1.msra.mxu0 %v1575
      %1663 = vmatprep.subr.mxu0 %v1572
      %1664 = vmatpush1.msra.mxu0 %v1571
      %1665 = vmatprep.subr.mxu0 %v1568
      %1666 = vmatpush1.msra.mxu0 %v1567
      %1667 = vmatprep.subr.mxu0 %v1564
      %1668 = vmatpush1.msra.mxu0 %v1563
      %1669 = vmatprep.subr.mxu0 %v1560
      %1670 = vmatpush1.msra.mxu0 %v1559
      %1671 = vmatprep.subr.mxu0 %v1556
      %1672 = vmatpush1.msra.mxu0 %v1555
      %1673 = vmatprep.subr.mxu0 0.0
      %1674 = vmatpush2.msra.mxu0 0.0
      %1675 = vmatprep.subr.mxu0 0.0
      %1676 = vmatpush2.msra.mxu0 0.0
      %1677 = vmatprep.subr.mxu0 0.0
      %1678 = vmatpush2.msra.mxu0 0.0
      %1679 = vmatprep.subr.mxu0 0.0
      %1680 = vmatpush2.msra.mxu0 0.0
      %1681 = vmatprep.subr.mxu0 0.0
      %1682 = vmatpush2.msra.mxu0 0.0
      %1683 = vmatprep.subr.mxu0 0.0
      %1684 = vmatpush2.msra.mxu0 0.0
      %1685 = vmatprep.subr.mxu0 0.0
      %1686 = vmatpush2.msra.mxu0 0.0
      %1687 = vmatprep.subr.mxu0 0.0
      %1688 = vmatpush2.msra.mxu0 0.0
      %1689 = vmatprep.subr.mxu0 0.0
      %1690 = vmatpush2.msra.mxu0 0.0
      %1691 = vmatprep.subr.mxu0 0.0
      %1692 = vmatpush2.msra.mxu0 0.0
      %1693 = vmatprep.subr.mxu0 0.0
      %1694 = vmatpush2.msra.mxu0 0.0
      %1695 = vmatprep.subr.mxu0 0.0
      %1696 = vmatpush2.msra.mxu0 0.0
      %1697 = vmatprep.subr.mxu0 0.0
      %1698 = vmatpush2.msra.mxu0 0.0
      %1699 = vmatprep.subr.mxu0 0.0
      %1700 = vmatpush2.msra.mxu0 0.0
      %1701 = vmatprep.subr.mxu0 0.0
      %1702 = vmatpush2.msra.mxu0 0.0
      %1703 = vmatprep.subr.mxu0 0.0
      %1704 = vmatpush2.msra.mxu0 0.0
      %1705 = vmatprep.mubr.f32.mxu0 0.0
      %1706 = vmatmul.mubr.f32.gmra.mxu0 %v1551
      %v1707 = vpop.f32.mrf.mxu0
      %v1708 = vadd.f32 %v1624, %v1707
      %v1709 = vpop.f32.mrf.mxu0
      %v1710 = vadd.f32 %v1628, %v1709
      %1711 = vmatprep.mubr.f32.mxu0 0.0
      %1712 = vmatmul.mubr.f32.gmra.mxu0 %v1552
      %v1713 = vpop.f32.mrf.mxu0
      %v1714 = vadd.f32 %v1624, %v1713
      %v1715 = vpop.f32.mrf.mxu0
      %v1716 = vadd.f32 %v1628, %v1715
      %1717 = vmatprep.mubr.f32.mxu0 0.0
      %1718 = vmatmul.mubr.f32.gmra.mxu0 %v1553
      %v1719 = vpop.f32.mrf.mxu0
      %v1720 = vadd.f32 %v1624, %v1719
      %v1721 = vpop.f32.mrf.mxu0
      %v1722 = vadd.f32 %v1628, %v1721
      %1723 = vmatprep.mubr.f32.mxu0 0.0
      %1724 = vmatmul.mubr.f32.gmra.mxu0 %v1554
      %v1725 = vpop.f32.mrf.mxu0
      %v1726 = vadd.f32 %v1624, %v1725
      %v1727 = vpop.f32.mrf.mxu0
      %v1728 = vadd.f32 %v1628, %v1727
      %1729 = vdwg.mxu0
      %1730 = vmatprep.subr.mxu0 %v1618
      %1731 = vmatpush1.msra.mxu0 %v1617
      %1732 = vmatprep.subr.mxu0 %v1614
      %1733 = vmatpush1.msra.mxu0 %v1613
      %1734 = vmatprep.subr.mxu0 %v1610
      %1735 = vmatpush1.msra.mxu0 %v1609
      %1736 = vmatprep.subr.mxu0 %v1606
      %1737 = vmatpush1.msra.mxu0 %v1605
      %1738 = vmatprep.subr.mxu0 %v1602
      %1739 = vmatpush1.msra.mxu0 %v1601
      %1740 = vmatprep.subr.mxu0 %v1598
      %1741 = vmatpush1.msra.mxu0 %v1597
      %1742 = vmatprep.subr.mxu0 %v1594
      %1743 = vmatpush1.msra.mxu0 %v1593
      %1744 = vmatprep.subr.mxu0 %v1590
      %1745 = vmatpush1.msra.mxu0 %v1589
      %1746 = vmatprep.subr.mxu0 %v1586
      %1747 = vmatpush1.msra.mxu0 %v1585
      %1748 = vmatprep.subr.mxu0 %v1582
      %1749 = vmatpush1.msra.mxu0 %v1581
      %1750 = vmatprep.subr.mxu0 %v1578
      %1751 = vmatpush1.msra.mxu0 %v1577
      %1752 = vmatprep.subr.mxu0 %v1574
      %1753 = vmatpush1.msra.mxu0 %v1573
      %1754 = vmatprep.subr.mxu0 %v1570
      %1755 = vmatpush1.msra.mxu0 %v1569
      %1756 = vmatprep.subr.mxu0 %v1566
      %1757 = vmatpush1.msra.mxu0 %v1565
      %1758 = vmatprep.subr.mxu0 %v1562
      %1759 = vmatpush1.msra.mxu0 %v1561
      %1760 = vmatprep.subr.mxu0 %v1558
      %1761 = vmatpush1.msra.mxu0 %v1557
      %1762 = vmatprep.subr.mxu0 0.0
      %1763 = vmatpush2.msra.mxu0 0.0
      %1764 = vmatprep.subr.mxu0 0.0
      %1765 = vmatpush2.msra.mxu0 0.0
      %1766 = vmatprep.subr.mxu0 0.0
      %1767 = vmatpush2.msra.mxu0 0.0
      %1768 = vmatprep.subr.mxu0 0.0
      %1769 = vmatpush2.msra.mxu0 0.0
      %1770 = vmatprep.subr.mxu0 0.0
      %1771 = vmatpush2.msra.mxu0 0.0
      %1772 = vmatprep.subr.mxu0 0.0
      %1773 = vmatpush2.msra.mxu0 0.0
      %1774 = vmatprep.subr.mxu0 0.0
      %1775 = vmatpush2.msra.mxu0 0.0
      %1776 = vmatprep.subr.mxu0 0.0
      %1777 = vmatpush2.msra.mxu0 0.0
      %1778 = vmatprep.subr.mxu0 0.0
      %1779 = vmatpush2.msra.mxu0 0.0
      %1780 = vmatprep.subr.mxu0 0.0
      %1781 = vmatpush2.msra.mxu0 0.0
      %1782 = vmatprep.subr.mxu0 0.0
      %1783 = vmatpush2.msra.mxu0 0.0
      %1784 = vmatprep.subr.mxu0 0.0
      %1785 = vmatpush2.msra.mxu0 0.0
      %1786 = vmatprep.subr.mxu0 0.0
      %1787 = vmatpush2.msra.mxu0 0.0
      %1788 = vmatprep.subr.mxu0 0.0
      %1789 = vmatpush2.msra.mxu0 0.0
      %1790 = vmatprep.subr.mxu0 0.0
      %1791 = vmatpush2.msra.mxu0 0.0
      %1792 = vmatprep.subr.mxu0 0.0
      %1793 = vmatpush2.msra.mxu0 0.0
      %1794 = vmatprep.mubr.f32.mxu0 0.0
      %1795 = vmatmul.mubr.f32.gmra.mxu0 %v1551
      %v1796 = vpop.f32.mrf.mxu0
      %v1797 = vadd.f32 %v1632, %v1796
      %v1798 = vpop.f32.mrf.mxu0
      %v1799 = vadd.f32 %v1636, %v1798
      %1800 = vmatprep.mubr.f32.mxu0 0.0
      %1801 = vmatmul.mubr.f32.gmra.mxu0 %v1552
      %v1802 = vpop.f32.mrf.mxu0
      %v1803 = vadd.f32 %v1632, %v1802
      %v1804 = vpop.f32.mrf.mxu0
      %v1805 = vadd.f32 %v1636, %v1804
      %1806 = vmatprep.mubr.f32.mxu0 0.0
      %1807 = vmatmul.mubr.f32.gmra.mxu0 %v1553
      %v1808 = vpop.f32.mrf.mxu0
      %v1809 = vadd.f32 %v1632, %v1808
      %v1810 = vpop.f32.mrf.mxu0
      %v1811 = vadd.f32 %v1636, %v1810
      %1812 = vmatprep.mubr.f32.mxu0 0.0
      %1813 = vmatmul.mubr.f32.gmra.mxu0 %v1554
      %v1814 = vpop.f32.mrf.mxu0
      %v1815 = vadd.f32 %v1632, %v1814
      %v1816 = vpop.f32.mrf.mxu0
      %v1817 = vadd.f32 %v1636, %v1816
      %1818 = vdwg.mxu0
      %1819 = vst [vmem:[#allocation3] sm:$0xff] %v1708
      %1820 = vst [vmem:[#allocation3 + $0x8] sm:$0xff] %v1710
      %1821 = vst [vmem:[#allocation3 + $0x10] sm:$0xff] %v1797
      %1822 = vst [vmem:[#allocation3 + $0x18] sm:$0xff] %v1799
      %1823 = vst [vmem:[#allocation3 + $0x20] sm:$0xff] %v1714
      %1824 = vst [vmem:[#allocation3 + $0x28] sm:$0xff] %v1716
      %1825 = vst [vmem:[#allocation3 + $0x30] sm:$0xff] %v1803
      %1826 = vst [vmem:[#allocation3 + $0x38] sm:$0xff] %v1805
      %1827 = vst [vmem:[#allocation3 + $0x40] sm:$0xff] %v1720
      %1828 = vst [vmem:[#allocation3 + $0x48] sm:$0xff] %v1722
      %1829 = vst [vmem:[#allocation3 + $0x50] sm:$0xff] %v1809
      %1830 = vst [vmem:[#allocation3 + $0x58] sm:$0xff] %v1811
      %1831 = vst [vmem:[#allocation3 + $0x60] sm:$0xff] %v1726
      %1832 = vst [vmem:[#allocation3 + $0x68] sm:$0xff] %v1728
      %1833 = vst [vmem:[#allocation3 + $0x70] sm:$0xff] %v1815
      %1834 = vst [vmem:[#allocation3 + $0x78] sm:$0xff] %v1817
      %s1835 = scalar_lea.vmem [#allocation4], 8
      %v1836 = vld [vmem:[%s1835] sm:$0xff]
      %s1837 = scalar_lea.vmem [#allocation5], 8
      %v1838 = vld [vmem:[%s1837] sm:$0xff]
      %v1839 = vld [vmem:[%s580] sm:$0xff]
      %v1840 = vld [vmem:[%s580 + $0x8] sm:$0xff]
      %v1841 = vld [vmem:[%s580 + $0x10] sm:$0xff]
      %v1842 = vld [vmem:[%s580 + $0x18] sm:$0xff]
      %v1843 = vld [vmem:[%s4] sm:$0xff]
      %v1844 = vld [vmem:[%s4 + $0x8] sm:$0xff]
      %v1845 = vld [vmem:[%s4 + $0x10] sm:$0xff]
      %v1846 = vld [vmem:[%s4 + $0x18] sm:$0xff]
      %v1847 = vld [vmem:[%s4 + $0x20] sm:$0xff]
      %v1848 = vld [vmem:[%s4 + $0x28] sm:$0xff]
      %v1849 = vld [vmem:[%s4 + $0x30] sm:$0xff]
      %v1850 = vld [vmem:[%s4 + $0x38] sm:$0xff]
      %v1851 = vld [vmem:[%s4 + $0x40] sm:$0xff]
      %v1852 = vld [vmem:[%s4 + $0x48] sm:$0xff]
      %v1853 = vld [vmem:[%s4 + $0x50] sm:$0xff]
      %v1854 = vld [vmem:[%s4 + $0x58] sm:$0xff]
      %v1855 = vld [vmem:[%s4 + $0x60] sm:$0xff]
      %v1856 = vld [vmem:[%s4 + $0x68] sm:$0xff]
      %v1857 = vld [vmem:[%s4 + $0x70] sm:$0xff]
      %v1858 = vld [vmem:[%s4 + $0x78] sm:$0xff]
      %v1859 = vld [vmem:[%s4 + $0x80] sm:$0xff]
      %v1860 = vld [vmem:[%s4 + $0x88] sm:$0xff]
      %v1861 = vld [vmem:[%s4 + $0x90] sm:$0xff]
      %v1862 = vld [vmem:[%s4 + $0x98] sm:$0xff]
      %v1863 = vld [vmem:[%s4 + $0xa0] sm:$0xff]
      %v1864 = vld [vmem:[%s4 + $0xa8] sm:$0xff]
      %v1865 = vld [vmem:[%s4 + $0xb0] sm:$0xff]
      %v1866 = vld [vmem:[%s4 + $0xb8] sm:$0xff]
      %v1867 = vld [vmem:[%s4 + $0xc0] sm:$0xff]
      %v1868 = vld [vmem:[%s4 + $0xc8] sm:$0xff]
      %v1869 = vld [vmem:[%s4 + $0xd0] sm:$0xff]
      %v1870 = vld [vmem:[%s4 + $0xd8] sm:$0xff]
      %v1871 = vld [vmem:[%s4 + $0xe0] sm:$0xff]
      %v1872 = vld [vmem:[%s4 + $0xe8] sm:$0xff]
      %v1873 = vld [vmem:[%s4 + $0xf0] sm:$0xff]
      %v1874 = vld [vmem:[%s4 + $0xf8] sm:$0xff]
      %v1875 = vld [vmem:[%s4 + $0x100] sm:$0xff]
      %v1876 = vld [vmem:[%s4 + $0x108] sm:$0xff]
      %v1877 = vld [vmem:[%s4 + $0x110] sm:$0xff]
      %v1878 = vld [vmem:[%s4 + $0x118] sm:$0xff]
      %v1879 = vld [vmem:[%s4 + $0x120] sm:$0xff]
      %v1880 = vld [vmem:[%s4 + $0x128] sm:$0xff]
      %v1881 = vld [vmem:[%s4 + $0x130] sm:$0xff]
      %v1882 = vld [vmem:[%s4 + $0x138] sm:$0xff]
      %v1883 = vld [vmem:[%s4 + $0x140] sm:$0xff]
      %v1884 = vld [vmem:[%s4 + $0x148] sm:$0xff]
      %v1885 = vld [vmem:[%s4 + $0x150] sm:$0xff]
      %v1886 = vld [vmem:[%s4 + $0x158] sm:$0xff]
      %v1887 = vld [vmem:[%s4 + $0x160] sm:$0xff]
      %v1888 = vld [vmem:[%s4 + $0x168] sm:$0xff]
      %v1889 = vld [vmem:[%s4 + $0x170] sm:$0xff]
      %v1890 = vld [vmem:[%s4 + $0x178] sm:$0xff]
      %v1891 = vld [vmem:[%s4 + $0x180] sm:$0xff]
      %v1892 = vld [vmem:[%s4 + $0x188] sm:$0xff]
      %v1893 = vld [vmem:[%s4 + $0x190] sm:$0xff]
      %v1894 = vld [vmem:[%s4 + $0x198] sm:$0xff]
      %v1895 = vld [vmem:[%s4 + $0x1a0] sm:$0xff]
      %v1896 = vld [vmem:[%s4 + $0x1a8] sm:$0xff]
      %v1897 = vld [vmem:[%s4 + $0x1b0] sm:$0xff]
      %v1898 = vld [vmem:[%s4 + $0x1b8] sm:$0xff]
      %v1899 = vld [vmem:[%s4 + $0x1c0] sm:$0xff]
      %v1900 = vld [vmem:[%s4 + $0x1c8] sm:$0xff]
      %v1901 = vld [vmem:[%s4 + $0x1d0] sm:$0xff]
      %v1902 = vld [vmem:[%s4 + $0x1d8] sm:$0xff]
      %v1903 = vld [vmem:[%s4 + $0x1e0] sm:$0xff]
      %v1904 = vld [vmem:[%s4 + $0x1e8] sm:$0xff]
      %v1905 = vld [vmem:[%s4 + $0x1f0] sm:$0xff]
      %v1906 = vld [vmem:[%s4 + $0x1f8] sm:$0xff]
      %1907 = vmatprep.subr.mxu0 %v1904
      %1908 = vmatpush1.msra.mxu0 %v1903
      %1909 = vmatprep.subr.mxu0 %v1900
      %1910 = vmatpush1.msra.mxu0 %v1899
      %1911 = vmatprep.subr.mxu0 %v1896
      %1912 = vmatpush1.msra.mxu0 %v1895
      %1913 = vmatprep.subr.mxu0 %v1892
      %1914 = vmatpush1.msra.mxu0 %v1891
      %1915 = vmatprep.subr.mxu0 %v1888
      %1916 = vmatpush1.msra.mxu0 %v1887
      %1917 = vmatprep.subr.mxu0 %v1884
      %1918 = vmatpush1.msra.mxu0 %v1883
      %1919 = vmatprep.subr.mxu0 %v1880
      %1920 = vmatpush1.msra.mxu0 %v1879
      %1921 = vmatprep.subr.mxu0 %v1876
      %1922 = vmatpush1.msra.mxu0 %v1875
      %1923 = vmatprep.subr.mxu0 %v1872
      %1924 = vmatpush1.msra.mxu0 %v1871
      %1925 = vmatprep.subr.mxu0 %v1868
      %1926 = vmatpush1.msra.mxu0 %v1867
      %1927 = vmatprep.subr.mxu0 %v1864
      %1928 = vmatpush1.msra.mxu0 %v1863
      %1929 = vmatprep.subr.mxu0 %v1860
      %1930 = vmatpush1.msra.mxu0 %v1859
      %1931 = vmatprep.subr.mxu0 %v1856
      %1932 = vmatpush1.msra.mxu0 %v1855
      %1933 = vmatprep.subr.mxu0 %v1852
      %1934 = vmatpush1.msra.mxu0 %v1851
      %1935 = vmatprep.subr.mxu0 %v1848
      %1936 = vmatpush1.msra.mxu0 %v1847
      %1937 = vmatprep.subr.mxu0 %v1844
      %1938 = vmatpush1.msra.mxu0 %v1843
      %1939 = vmatprep.subr.mxu0 0.0
      %1940 = vmatpush2.msra.mxu0 0.0
      %1941 = vmatprep.subr.mxu0 0.0
      %1942 = vmatpush2.msra.mxu0 0.0
      %1943 = vmatprep.subr.mxu0 0.0
      %1944 = vmatpush2.msra.mxu0 0.0
      %1945 = vmatprep.subr.mxu0 0.0
      %1946 = vmatpush2.msra.mxu0 0.0
      %1947 = vmatprep.subr.mxu0 0.0
      %1948 = vmatpush2.msra.mxu0 0.0
      %1949 = vmatprep.subr.mxu0 0.0
      %1950 = vmatpush2.msra.mxu0 0.0
      %1951 = vmatprep.subr.mxu0 0.0
      %1952 = vmatpush2.msra.mxu0 0.0
      %1953 = vmatprep.subr.mxu0 0.0
      %1954 = vmatpush2.msra.mxu0 0.0
      %1955 = vmatprep.subr.mxu0 0.0
      %1956 = vmatpush2.msra.mxu0 0.0
      %1957 = vmatprep.subr.mxu0 0.0
      %1958 = vmatpush2.msra.mxu0 0.0
      %1959 = vmatprep.subr.mxu0 0.0
      %1960 = vmatpush2.msra.mxu0 0.0
      %1961 = vmatprep.subr.mxu0 0.0
      %1962 = vmatpush2.msra.mxu0 0.0
      %1963 = vmatprep.subr.mxu0 0.0
      %1964 = vmatpush2.msra.mxu0 0.0
      %1965 = vmatprep.subr.mxu0 0.0
      %1966 = vmatpush2.msra.mxu0 0.0
      %1967 = vmatprep.subr.mxu0 0.0
      %1968 = vmatpush2.msra.mxu0 0.0
      %1969 = vmatprep.subr.mxu0 0.0
      %1970 = vmatpush2.msra.mxu0 0.0
      %1971 = vmatprep.mubr.f32.mxu0 0.0
      %1972 = vmatmul.mubr.f32.gmra.mxu0 %v1836
      %v1973 = vpop.f32.mrf.mxu0
      %v1974 = vadd.f32 0.0, %v1973
      %v1975 = vpop.f32.mrf.mxu0
      %v1976 = vadd.f32 0.0, %v1975
      %1977 = vdwg.mxu0
      %1978 = vmatprep.subr.mxu0 %v1906
      %1979 = vmatpush1.msra.mxu0 %v1905
      %1980 = vmatprep.subr.mxu0 %v1902
      %1981 = vmatpush1.msra.mxu0 %v1901
      %1982 = vmatprep.subr.mxu0 %v1898
      %1983 = vmatpush1.msra.mxu0 %v1897
      %1984 = vmatprep.subr.mxu0 %v1894
      %1985 = vmatpush1.msra.mxu0 %v1893
      %1986 = vmatprep.subr.mxu0 %v1890
      %1987 = vmatpush1.msra.mxu0 %v1889
      %1988 = vmatprep.subr.mxu0 %v1886
      %1989 = vmatpush1.msra.mxu0 %v1885
      %1990 = vmatprep.subr.mxu0 %v1882
      %1991 = vmatpush1.msra.mxu0 %v1881
      %1992 = vmatprep.subr.mxu0 %v1878
      %1993 = vmatpush1.msra.mxu0 %v1877
      %1994 = vmatprep.subr.mxu0 %v1874
      %1995 = vmatpush1.msra.mxu0 %v1873
      %1996 = vmatprep.subr.mxu0 %v1870
      %1997 = vmatpush1.msra.mxu0 %v1869
      %1998 = vmatprep.subr.mxu0 %v1866
      %1999 = vmatpush1.msra.mxu0 %v1865
      %2000 = vmatprep.subr.mxu0 %v1862
      %2001 = vmatpush1.msra.mxu0 %v1861
      %2002 = vmatprep.subr.mxu0 %v1858
      %2003 = vmatpush1.msra.mxu0 %v1857
      %2004 = vmatprep.subr.mxu0 %v1854
      %2005 = vmatpush1.msra.mxu0 %v1853
      %2006 = vmatprep.subr.mxu0 %v1850
      %2007 = vmatpush1.msra.mxu0 %v1849
      %2008 = vmatprep.subr.mxu0 %v1846
      %2009 = vmatpush1.msra.mxu0 %v1845
      %2010 = vmatprep.subr.mxu0 0.0
      %2011 = vmatpush2.msra.mxu0 0.0
      %2012 = vmatprep.subr.mxu0 0.0
      %2013 = vmatpush2.msra.mxu0 0.0
      %2014 = vmatprep.subr.mxu0 0.0
      %2015 = vmatpush2.msra.mxu0 0.0
      %2016 = vmatprep.subr.mxu0 0.0
      %2017 = vmatpush2.msra.mxu0 0.0
      %2018 = vmatprep.subr.mxu0 0.0
      %2019 = vmatpush2.msra.mxu0 0.0
      %2020 = vmatprep.subr.mxu0 0.0
      %2021 = vmatpush2.msra.mxu0 0.0
      %2022 = vmatprep.subr.mxu0 0.0
      %2023 = vmatpush2.msra.mxu0 0.0
      %2024 = vmatprep.subr.mxu0 0.0
      %2025 = vmatpush2.msra.mxu0 0.0
      %2026 = vmatprep.subr.mxu0 0.0
      %2027 = vmatpush2.msra.mxu0 0.0
      %2028 = vmatprep.subr.mxu0 0.0
      %2029 = vmatpush2.msra.mxu0 0.0
      %2030 = vmatprep.subr.mxu0 0.0
      %2031 = vmatpush2.msra.mxu0 0.0
      %2032 = vmatprep.subr.mxu0 0.0
      %2033 = vmatpush2.msra.mxu0 0.0
      %2034 = vmatprep.subr.mxu0 0.0
      %2035 = vmatpush2.msra.mxu0 0.0
      %2036 = vmatprep.subr.mxu0 0.0
      %2037 = vmatpush2.msra.mxu0 0.0
      %2038 = vmatprep.subr.mxu0 0.0
      %2039 = vmatpush2.msra.mxu0 0.0
      %2040 = vmatprep.subr.mxu0 0.0
      %2041 = vmatpush2.msra.mxu0 0.0
      %2042 = vmatprep.mubr.f32.mxu0 0.0
      %2043 = vmatmul.mubr.f32.gmra.mxu0 %v1836
      %v2044 = vpop.f32.mrf.mxu0
      %v2045 = vadd.f32 0.0, %v2044
      %v2046 = vpop.f32.mrf.mxu0
      %v2047 = vadd.f32 0.0, %v2046
      %2048 = vdwg.mxu0
      %v2049 = vadd.f32 %v1839, %v1974
      %v2050 = vadd.f32 %v1840, %v1976
      %v2051 = vadd.f32 %v1841, %v2045
      %v2052 = vadd.f32 %v1842, %v2047
      %v2053 = vxor.u32 %v2049, 2147483648
      %v2054 = vmul.f32 %v2053, 1.442695
      %v2055 = vpow.pop %v2054
      %v2056 = vadd.f32 %v2055, 1.0
      %v2057 = vrcp.pop %v2056
      %v2058 = vmul.f32 1.0, %v2057
      %v2059 = vxor.u32 %v2050, 2147483648
      %v2060 = vmul.f32 %v2059, 1.442695
      %v2061 = vpow.pop %v2060
      %v2062 = vadd.f32 %v2061, 1.0
      %v2063 = vrcp.pop %v2062
      %v2064 = vmul.f32 1.0, %v2063
      %v2065 = vtanh.pop %v2051
      %v2066 = vxor.u32 %v2052, 2147483648
      %v2067 = vmul.f32 %v2066, 1.442695
      %v2068 = vpow.pop %v2067
      %v2069 = vadd.f32 %v2068, 1.0
      %v2070 = vrcp.pop %v2069
      %v2071 = vmul.f32 1.0, %v2070
      %v2072 = vmul.f32 %v2064, %v1838
      %v2073 = vmul.f32 %v2058, %v2065
      %v2074 = vadd.f32 %v2072, %v2073
      %v2075 = vtanh.pop %v2074
      %v2076 = vmul.f32 %v2071, %v2075
      %v2077 = vld [vmem:[%s822] sm:$0xff]
      %v2078 = vld [vmem:[%s822 + $0x8] sm:$0xff]
      %v2079 = vld [vmem:[%s822 + $0x10] sm:$0xff]
      %v2080 = vld [vmem:[%s822 + $0x18] sm:$0xff]
      %2081 = vmatprep.subr.mxu0 %v1904
      %2082 = vmatpush1.msra.mxu0 %v1903
      %2083 = vmatprep.subr.mxu0 %v1900
      %2084 = vmatpush1.msra.mxu0 %v1899
      %2085 = vmatprep.subr.mxu0 %v1896
      %2086 = vmatpush1.msra.mxu0 %v1895
      %2087 = vmatprep.subr.mxu0 %v1892
      %2088 = vmatpush1.msra.mxu0 %v1891
      %2089 = vmatprep.subr.mxu0 %v1888
      %2090 = vmatpush1.msra.mxu0 %v1887
      %2091 = vmatprep.subr.mxu0 %v1884
      %2092 = vmatpush1.msra.mxu0 %v1883
      %2093 = vmatprep.subr.mxu0 %v1880
      %2094 = vmatpush1.msra.mxu0 %v1879
      %2095 = vmatprep.subr.mxu0 %v1876
      %2096 = vmatpush1.msra.mxu0 %v1875
      %2097 = vmatprep.subr.mxu0 %v1872
      %2098 = vmatpush1.msra.mxu0 %v1871
      %2099 = vmatprep.subr.mxu0 %v1868
      %2100 = vmatpush1.msra.mxu0 %v1867
      %2101 = vmatprep.subr.mxu0 %v1864
      %2102 = vmatpush1.msra.mxu0 %v1863
      %2103 = vmatprep.subr.mxu0 %v1860
      %2104 = vmatpush1.msra.mxu0 %v1859
      %2105 = vmatprep.subr.mxu0 %v1856
      %2106 = vmatpush1.msra.mxu0 %v1855
      %2107 = vmatprep.subr.mxu0 %v1852
      %2108 = vmatpush1.msra.mxu0 %v1851
      %2109 = vmatprep.subr.mxu0 %v1848
      %2110 = vmatpush1.msra.mxu0 %v1847
      %2111 = vmatprep.subr.mxu0 %v1844
      %2112 = vmatpush1.msra.mxu0 %v1843
      %2113 = vmatprep.subr.mxu0 0.0
      %2114 = vmatpush2.msra.mxu0 0.0
      %2115 = vmatprep.subr.mxu0 0.0
      %2116 = vmatpush2.msra.mxu0 0.0
      %2117 = vmatprep.subr.mxu0 0.0
      %2118 = vmatpush2.msra.mxu0 0.0
      %2119 = vmatprep.subr.mxu0 0.0
      %2120 = vmatpush2.msra.mxu0 0.0
      %2121 = vmatprep.subr.mxu0 0.0
      %2122 = vmatpush2.msra.mxu0 0.0
      %2123 = vmatprep.subr.mxu0 0.0
      %2124 = vmatpush2.msra.mxu0 0.0
      %2125 = vmatprep.subr.mxu0 0.0
      %2126 = vmatpush2.msra.mxu0 0.0
      %2127 = vmatprep.subr.mxu0 0.0
      %2128 = vmatpush2.msra.mxu0 0.0
      %2129 = vmatprep.subr.mxu0 0.0
      %2130 = vmatpush2.msra.mxu0 0.0
      %2131 = vmatprep.subr.mxu0 0.0
      %2132 = vmatpush2.msra.mxu0 0.0
      %2133 = vmatprep.subr.mxu0 0.0
      %2134 = vmatpush2.msra.mxu0 0.0
      %2135 = vmatprep.subr.mxu0 0.0
      %2136 = vmatpush2.msra.mxu0 0.0
      %2137 = vmatprep.subr.mxu0 0.0
      %2138 = vmatpush2.msra.mxu0 0.0
      %2139 = vmatprep.subr.mxu0 0.0
      %2140 = vmatpush2.msra.mxu0 0.0
      %2141 = vmatprep.subr.mxu0 0.0
      %2142 = vmatpush2.msra.mxu0 0.0
      %2143 = vmatprep.subr.mxu0 0.0
      %2144 = vmatpush2.msra.mxu0 0.0
      %2145 = vmatprep.mubr.f32.mxu0 0.0
      %2146 = vmatmul.mubr.f32.gmra.mxu0 %v2076
      %v2147 = vpop.f32.mrf.mxu0
      %v2148 = vadd.f32 0.0, %v2147
      %v2149 = vpop.f32.mrf.mxu0
      %v2150 = vadd.f32 0.0, %v2149
      %2151 = vdwg.mxu0
      %2152 = vmatprep.subr.mxu0 %v1906
      %2153 = vmatpush1.msra.mxu0 %v1905
      %2154 = vmatprep.subr.mxu0 %v1902
      %2155 = vmatpush1.msra.mxu0 %v1901
      %2156 = vmatprep.subr.mxu0 %v1898
      %2157 = vmatpush1.msra.mxu0 %v1897
      %2158 = vmatprep.subr.mxu0 %v1894
      %2159 = vmatpush1.msra.mxu0 %v1893
      %2160 = vmatprep.subr.mxu0 %v1890
      %2161 = vmatpush1.msra.mxu0 %v1889
      %2162 = vmatprep.subr.mxu0 %v1886
      %2163 = vmatpush1.msra.mxu0 %v1885
      %2164 = vmatprep.subr.mxu0 %v1882
      %2165 = vmatpush1.msra.mxu0 %v1881
      %2166 = vmatprep.subr.mxu0 %v1878
      %2167 = vmatpush1.msra.mxu0 %v1877
      %2168 = vmatprep.subr.mxu0 %v1874
      %2169 = vmatpush1.msra.mxu0 %v1873
      %2170 = vmatprep.subr.mxu0 %v1870
      %2171 = vmatpush1.msra.mxu0 %v1869
      %2172 = vmatprep.subr.mxu0 %v1866
      %2173 = vmatpush1.msra.mxu0 %v1865
      %2174 = vmatprep.subr.mxu0 %v1862
      %2175 = vmatpush1.msra.mxu0 %v1861
      %2176 = vmatprep.subr.mxu0 %v1858
      %2177 = vmatpush1.msra.mxu0 %v1857
      %2178 = vmatprep.subr.mxu0 %v1854
      %2179 = vmatpush1.msra.mxu0 %v1853
      %2180 = vmatprep.subr.mxu0 %v1850
      %2181 = vmatpush1.msra.mxu0 %v1849
      %2182 = vmatprep.subr.mxu0 %v1846
      %2183 = vmatpush1.msra.mxu0 %v1845
      %2184 = vmatprep.subr.mxu0 0.0
      %2185 = vmatpush2.msra.mxu0 0.0
      %2186 = vmatprep.subr.mxu0 0.0
      %2187 = vmatpush2.msra.mxu0 0.0
      %2188 = vmatprep.subr.mxu0 0.0
      %2189 = vmatpush2.msra.mxu0 0.0
      %2190 = vmatprep.subr.mxu0 0.0
      %2191 = vmatpush2.msra.mxu0 0.0
      %2192 = vmatprep.subr.mxu0 0.0
      %2193 = vmatpush2.msra.mxu0 0.0
      %2194 = vmatprep.subr.mxu0 0.0
      %2195 = vmatpush2.msra.mxu0 0.0
      %2196 = vmatprep.subr.mxu0 0.0
      %2197 = vmatpush2.msra.mxu0 0.0
      %2198 = vmatprep.subr.mxu0 0.0
      %2199 = vmatpush2.msra.mxu0 0.0
      %2200 = vmatprep.subr.mxu0 0.0
      %2201 = vmatpush2.msra.mxu0 0.0
      %2202 = vmatprep.subr.mxu0 0.0
      %2203 = vmatpush2.msra.mxu0 0.0
      %2204 = vmatprep.subr.mxu0 0.0
      %2205 = vmatpush2.msra.mxu0 0.0
      %2206 = vmatprep.subr.mxu0 0.0
      %2207 = vmatpush2.msra.mxu0 0.0
      %2208 = vmatprep.subr.mxu0 0.0
      %2209 = vmatpush2.msra.mxu0 0.0
      %2210 = vmatprep.subr.mxu0 0.0
      %2211 = vmatpush2.msra.mxu0 0.0
      %2212 = vmatprep.subr.mxu0 0.0
      %2213 = vmatpush2.msra.mxu0 0.0
      %2214 = vmatprep.subr.mxu0 0.0
      %2215 = vmatpush2.msra.mxu0 0.0
      %2216 = vmatprep.mubr.f32.mxu0 0.0
      %2217 = vmatmul.mubr.f32.gmra.mxu0 %v2076
      %v2218 = vpop.f32.mrf.mxu0
      %v2219 = vadd.f32 0.0, %v2218
      %v2220 = vpop.f32.mrf.mxu0
      %v2221 = vadd.f32 0.0, %v2220
      %2222 = vdwg.mxu0
      %v2223 = vadd.f32 %v2077, %v2148
      %v2224 = vadd.f32 %v2078, %v2150
      %v2225 = vadd.f32 %v2079, %v2219
      %v2226 = vadd.f32 %v2080, %v2221
      %v2227 = vxor.u32 %v2223, 2147483648
      %v2228 = vmul.f32 %v2227, 1.442695
      %v2229 = vpow.pop %v2228
      %v2230 = vadd.f32 %v2229, 1.0
      %v2231 = vrcp.pop %v2230
      %v2232 = vmul.f32 1.0, %v2231
      %v2233 = vxor.u32 %v2224, 2147483648
      %v2234 = vmul.f32 %v2233, 1.442695
      %v2235 = vpow.pop %v2234
      %v2236 = vadd.f32 %v2235, 1.0
      %v2237 = vrcp.pop %v2236
      %v2238 = vmul.f32 1.0, %v2237
      %v2239 = vtanh.pop %v2225
      %v2240 = vxor.u32 %v2226, 2147483648
      %v2241 = vmul.f32 %v2240, 1.442695
      %v2242 = vpow.pop %v2241
      %v2243 = vadd.f32 %v2242, 1.0
      %v2244 = vrcp.pop %v2243
      %v2245 = vmul.f32 1.0, %v2244
      %v2246 = vmul.f32 %v2238, %v2074
      %v2247 = vmul.f32 %v2232, %v2239
      %v2248 = vadd.f32 %v2246, %v2247
      %v2249 = vtanh.pop %v2248
      %v2250 = vmul.f32 %v2245, %v2249
      %v2251 = vld [vmem:[%s1065] sm:$0xff]
      %v2252 = vld [vmem:[%s1065 + $0x8] sm:$0xff]
      %v2253 = vld [vmem:[%s1065 + $0x10] sm:$0xff]
      %v2254 = vld [vmem:[%s1065 + $0x18] sm:$0xff]
      %2255 = vmatprep.subr.mxu0 %v1904
      %2256 = vmatpush1.msra.mxu0 %v1903
      %2257 = vmatprep.subr.mxu0 %v1900
      %2258 = vmatpush1.msra.mxu0 %v1899
      %2259 = vmatprep.subr.mxu0 %v1896
      %2260 = vmatpush1.msra.mxu0 %v1895
      %2261 = vmatprep.subr.mxu0 %v1892
      %2262 = vmatpush1.msra.mxu0 %v1891
      %2263 = vmatprep.subr.mxu0 %v1888
      %2264 = vmatpush1.msra.mxu0 %v1887
      %2265 = vmatprep.subr.mxu0 %v1884
      %2266 = vmatpush1.msra.mxu0 %v1883
      %2267 = vmatprep.subr.mxu0 %v1880
      %2268 = vmatpush1.msra.mxu0 %v1879
      %2269 = vmatprep.subr.mxu0 %v1876
      %2270 = vmatpush1.msra.mxu0 %v1875
      %2271 = vmatprep.subr.mxu0 %v1872
      %2272 = vmatpush1.msra.mxu0 %v1871
      %2273 = vmatprep.subr.mxu0 %v1868
      %2274 = vmatpush1.msra.mxu0 %v1867
      %2275 = vmatprep.subr.mxu0 %v1864
      %2276 = vmatpush1.msra.mxu0 %v1863
      %2277 = vmatprep.subr.mxu0 %v1860
      %2278 = vmatpush1.msra.mxu0 %v1859
      %2279 = vmatprep.subr.mxu0 %v1856
      %2280 = vmatpush1.msra.mxu0 %v1855
      %2281 = vmatprep.subr.mxu0 %v1852
      %2282 = vmatpush1.msra.mxu0 %v1851
      %2283 = vmatprep.subr.mxu0 %v1848
      %2284 = vmatpush1.msra.mxu0 %v1847
      %2285 = vmatprep.subr.mxu0 %v1844
      %2286 = vmatpush1.msra.mxu0 %v1843
      %2287 = vmatprep.subr.mxu0 0.0
      %2288 = vmatpush2.msra.mxu0 0.0
      %2289 = vmatprep.subr.mxu0 0.0
      %2290 = vmatpush2.msra.mxu0 0.0
      %2291 = vmatprep.subr.mxu0 0.0
      %2292 = vmatpush2.msra.mxu0 0.0
      %2293 = vmatprep.subr.mxu0 0.0
      %2294 = vmatpush2.msra.mxu0 0.0
      %2295 = vmatprep.subr.mxu0 0.0
      %2296 = vmatpush2.msra.mxu0 0.0
      %2297 = vmatprep.subr.mxu0 0.0
      %2298 = vmatpush2.msra.mxu0 0.0
      %2299 = vmatprep.subr.mxu0 0.0
      %2300 = vmatpush2.msra.mxu0 0.0
      %2301 = vmatprep.subr.mxu0 0.0
      %2302 = vmatpush2.msra.mxu0 0.0
      %2303 = vmatprep.subr.mxu0 0.0
      %2304 = vmatpush2.msra.mxu0 0.0
      %2305 = vmatprep.subr.mxu0 0.0
      %2306 = vmatpush2.msra.mxu0 0.0
      %2307 = vmatprep.subr.mxu0 0.0
      %2308 = vmatpush2.msra.mxu0 0.0
      %2309 = vmatprep.subr.mxu0 0.0
      %2310 = vmatpush2.msra.mxu0 0.0
      %2311 = vmatprep.subr.mxu0 0.0
      %2312 = vmatpush2.msra.mxu0 0.0
      %2313 = vmatprep.subr.mxu0 0.0
      %2314 = vmatpush2.msra.mxu0 0.0
      %2315 = vmatprep.subr.mxu0 0.0
      %2316 = vmatpush2.msra.mxu0 0.0
      %2317 = vmatprep.subr.mxu0 0.0
      %2318 = vmatpush2.msra.mxu0 0.0
      %2319 = vmatprep.mubr.f32.mxu0 0.0
      %2320 = vmatmul.mubr.f32.gmra.mxu0 %v2250
      %v2321 = vpop.f32.mrf.mxu0
      %v2322 = vadd.f32 0.0, %v2321
      %v2323 = vpop.f32.mrf.mxu0
      %v2324 = vadd.f32 0.0, %v2323
      %2325 = vdwg.mxu0
      %2326 = vmatprep.subr.mxu0 %v1906
      %2327 = vmatpush1.msra.mxu0 %v1905
      %2328 = vmatprep.subr.mxu0 %v1902
      %2329 = vmatpush1.msra.mxu0 %v1901
      %2330 = vmatprep.subr.mxu0 %v1898
      %2331 = vmatpush1.msra.mxu0 %v1897
      %2332 = vmatprep.subr.mxu0 %v1894
      %2333 = vmatpush1.msra.mxu0 %v1893
      %2334 = vmatprep.subr.mxu0 %v1890
      %2335 = vmatpush1.msra.mxu0 %v1889
      %2336 = vmatprep.subr.mxu0 %v1886
      %2337 = vmatpush1.msra.mxu0 %v1885
      %2338 = vmatprep.subr.mxu0 %v1882
      %2339 = vmatpush1.msra.mxu0 %v1881
      %2340 = vmatprep.subr.mxu0 %v1878
      %2341 = vmatpush1.msra.mxu0 %v1877
      %2342 = vmatprep.subr.mxu0 %v1874
      %2343 = vmatpush1.msra.mxu0 %v1873
      %2344 = vmatprep.subr.mxu0 %v1870
      %2345 = vmatpush1.msra.mxu0 %v1869
      %2346 = vmatprep.subr.mxu0 %v1866
      %2347 = vmatpush1.msra.mxu0 %v1865
      %2348 = vmatprep.subr.mxu0 %v1862
      %2349 = vmatpush1.msra.mxu0 %v1861
      %2350 = vmatprep.subr.mxu0 %v1858
      %2351 = vmatpush1.msra.mxu0 %v1857
      %2352 = vmatprep.subr.mxu0 %v1854
      %2353 = vmatpush1.msra.mxu0 %v1853
      %2354 = vmatprep.subr.mxu0 %v1850
      %2355 = vmatpush1.msra.mxu0 %v1849
      %2356 = vmatprep.subr.mxu0 %v1846
      %2357 = vmatpush1.msra.mxu0 %v1845
      %2358 = vmatprep.subr.mxu0 0.0
      %2359 = vmatpush2.msra.mxu0 0.0
      %2360 = vmatprep.subr.mxu0 0.0
      %2361 = vmatpush2.msra.mxu0 0.0
      %2362 = vmatprep.subr.mxu0 0.0
      %2363 = vmatpush2.msra.mxu0 0.0
      %2364 = vmatprep.subr.mxu0 0.0
      %2365 = vmatpush2.msra.mxu0 0.0
      %2366 = vmatprep.subr.mxu0 0.0
      %2367 = vmatpush2.msra.mxu0 0.0
      %2368 = vmatprep.subr.mxu0 0.0
      %2369 = vmatpush2.msra.mxu0 0.0
      %2370 = vmatprep.subr.mxu0 0.0
      %2371 = vmatpush2.msra.mxu0 0.0
      %2372 = vmatprep.subr.mxu0 0.0
      %2373 = vmatpush2.msra.mxu0 0.0
      %2374 = vmatprep.subr.mxu0 0.0
      %2375 = vmatpush2.msra.mxu0 0.0
      %2376 = vmatprep.subr.mxu0 0.0
      %2377 = vmatpush2.msra.mxu0 0.0
      %2378 = vmatprep.subr.mxu0 0.0
      %2379 = vmatpush2.msra.mxu0 0.0
      %2380 = vmatprep.subr.mxu0 0.0
      %2381 = vmatpush2.msra.mxu0 0.0
      %2382 = vmatprep.subr.mxu0 0.0
      %2383 = vmatpush2.msra.mxu0 0.0
      %2384 = vmatprep.subr.mxu0 0.0
      %2385 = vmatpush2.msra.mxu0 0.0
      %2386 = vmatprep.subr.mxu0 0.0
      %2387 = vmatpush2.msra.mxu0 0.0
      %2388 = vmatprep.subr.mxu0 0.0
      %2389 = vmatpush2.msra.mxu0 0.0
      %2390 = vmatprep.mubr.f32.mxu0 0.0
      %2391 = vmatmul.mubr.f32.gmra.mxu0 %v2250
      %v2392 = vpop.f32.mrf.mxu0
      %v2393 = vadd.f32 0.0, %v2392
      %v2394 = vpop.f32.mrf.mxu0
      %v2395 = vadd.f32 0.0, %v2394
      %2396 = vdwg.mxu0
      %v2397 = vadd.f32 %v2251, %v2322
      %v2398 = vadd.f32 %v2252, %v2324
      %v2399 = vadd.f32 %v2253, %v2393
      %v2400 = vadd.f32 %v2254, %v2395
      %v2401 = vxor.u32 %v2397, 2147483648
      %v2402 = vmul.f32 %v2401, 1.442695
      %v2403 = vpow.pop %v2402
      %v2404 = vadd.f32 %v2403, 1.0
      %v2405 = vrcp.pop %v2404
      %v2406 = vmul.f32 1.0, %v2405
      %v2407 = vxor.u32 %v2398, 2147483648
      %v2408 = vmul.f32 %v2407, 1.442695
      %v2409 = vpow.pop %v2408
      %v2410 = vadd.f32 %v2409, 1.0
      %v2411 = vrcp.pop %v2410
      %v2412 = vmul.f32 1.0, %v2411
      %v2413 = vtanh.pop %v2399
      %v2414 = vxor.u32 %v2400, 2147483648
      %v2415 = vmul.f32 %v2414, 1.442695
      %v2416 = vpow.pop %v2415
      %v2417 = vadd.f32 %v2416, 1.0
      %v2418 = vrcp.pop %v2417
      %v2419 = vmul.f32 1.0, %v2418
      %v2420 = vmul.f32 %v2412, %v2248
      %v2421 = vmul.f32 %v2406, %v2413
      %v2422 = vadd.f32 %v2420, %v2421
      %v2423 = vtanh.pop %v2422
      %v2424 = vmul.f32 %v2419, %v2423
      %v2425 = vld [vmem:[%s1308] sm:$0xff]
      %v2426 = vld [vmem:[%s1308 + $0x8] sm:$0xff]
      %v2427 = vld [vmem:[%s1308 + $0x10] sm:$0xff]
      %v2428 = vld [vmem:[%s1308 + $0x18] sm:$0xff]
      %2429 = vmatprep.subr.mxu0 %v1904
      %2430 = vmatpush1.msra.mxu0 %v1903
      %2431 = vmatprep.subr.mxu0 %v1900
      %2432 = vmatpush1.msra.mxu0 %v1899
      %2433 = vmatprep.subr.mxu0 %v1896
      %2434 = vmatpush1.msra.mxu0 %v1895
      %2435 = vmatprep.subr.mxu0 %v1892
      %2436 = vmatpush1.msra.mxu0 %v1891
      %2437 = vmatprep.subr.mxu0 %v1888
      %2438 = vmatpush1.msra.mxu0 %v1887
      %2439 = vmatprep.subr.mxu0 %v1884
      %2440 = vmatpush1.msra.mxu0 %v1883
      %2441 = vmatprep.subr.mxu0 %v1880
      %2442 = vmatpush1.msra.mxu0 %v1879
      %2443 = vmatprep.subr.mxu0 %v1876
      %2444 = vmatpush1.msra.mxu0 %v1875
      %2445 = vmatprep.subr.mxu0 %v1872
      %2446 = vmatpush1.msra.mxu0 %v1871
      %2447 = vmatprep.subr.mxu0 %v1868
      %2448 = vmatpush1.msra.mxu0 %v1867
      %2449 = vmatprep.subr.mxu0 %v1864
      %2450 = vmatpush1.msra.mxu0 %v1863
      %2451 = vmatprep.subr.mxu0 %v1860
      %2452 = vmatpush1.msra.mxu0 %v1859
      %2453 = vmatprep.subr.mxu0 %v1856
      %2454 = vmatpush1.msra.mxu0 %v1855
      %2455 = vmatprep.subr.mxu0 %v1852
      %2456 = vmatpush1.msra.mxu0 %v1851
      %2457 = vmatprep.subr.mxu0 %v1848
      %2458 = vmatpush1.msra.mxu0 %v1847
      %2459 = vmatprep.subr.mxu0 %v1844
      %2460 = vmatpush1.msra.mxu0 %v1843
      %2461 = vmatprep.subr.mxu0 0.0
      %2462 = vmatpush2.msra.mxu0 0.0
      %2463 = vmatprep.subr.mxu0 0.0
      %2464 = vmatpush2.msra.mxu0 0.0
      %2465 = vmatprep.subr.mxu0 0.0
      %2466 = vmatpush2.msra.mxu0 0.0
      %2467 = vmatprep.subr.mxu0 0.0
      %2468 = vmatpush2.msra.mxu0 0.0
      %2469 = vmatprep.subr.mxu0 0.0
      %2470 = vmatpush2.msra.mxu0 0.0
      %2471 = vmatprep.subr.mxu0 0.0
      %2472 = vmatpush2.msra.mxu0 0.0
      %2473 = vmatprep.subr.mxu0 0.0
      %2474 = vmatpush2.msra.mxu0 0.0
      %2475 = vmatprep.subr.mxu0 0.0
      %2476 = vmatpush2.msra.mxu0 0.0
      %2477 = vmatprep.subr.mxu0 0.0
      %2478 = vmatpush2.msra.mxu0 0.0
      %2479 = vmatprep.subr.mxu0 0.0
      %2480 = vmatpush2.msra.mxu0 0.0
      %2481 = vmatprep.subr.mxu0 0.0
      %2482 = vmatpush2.msra.mxu0 0.0
      %2483 = vmatprep.subr.mxu0 0.0
      %2484 = vmatpush2.msra.mxu0 0.0
      %2485 = vmatprep.subr.mxu0 0.0
      %2486 = vmatpush2.msra.mxu0 0.0
      %2487 = vmatprep.subr.mxu0 0.0
      %2488 = vmatpush2.msra.mxu0 0.0
      %2489 = vmatprep.subr.mxu0 0.0
      %2490 = vmatpush2.msra.mxu0 0.0
      %2491 = vmatprep.subr.mxu0 0.0
      %2492 = vmatpush2.msra.mxu0 0.0
      %2493 = vmatprep.mubr.f32.mxu0 0.0
      %2494 = vmatmul.mubr.f32.gmra.mxu0 %v2424
      %v2495 = vpop.f32.mrf.mxu0
      %v2496 = vadd.f32 0.0, %v2495
      %v2497 = vpop.f32.mrf.mxu0
      %v2498 = vadd.f32 0.0, %v2497
      %2499 = vdwg.mxu0
      %2500 = vmatprep.subr.mxu0 %v1906
      %2501 = vmatpush1.msra.mxu0 %v1905
      %2502 = vmatprep.subr.mxu0 %v1902
      %2503 = vmatpush1.msra.mxu0 %v1901
      %2504 = vmatprep.subr.mxu0 %v1898
      %2505 = vmatpush1.msra.mxu0 %v1897
      %2506 = vmatprep.subr.mxu0 %v1894
      %2507 = vmatpush1.msra.mxu0 %v1893
      %2508 = vmatprep.subr.mxu0 %v1890
      %2509 = vmatpush1.msra.mxu0 %v1889
      %2510 = vmatprep.subr.mxu0 %v1886
      %2511 = vmatpush1.msra.mxu0 %v1885
      %2512 = vmatprep.subr.mxu0 %v1882
      %2513 = vmatpush1.msra.mxu0 %v1881
      %2514 = vmatprep.subr.mxu0 %v1878
      %2515 = vmatpush1.msra.mxu0 %v1877
      %2516 = vmatprep.subr.mxu0 %v1874
      %2517 = vmatpush1.msra.mxu0 %v1873
      %2518 = vmatprep.subr.mxu0 %v1870
      %2519 = vmatpush1.msra.mxu0 %v1869
      %2520 = vmatprep.subr.mxu0 %v1866
      %2521 = vmatpush1.msra.mxu0 %v1865
      %2522 = vmatprep.subr.mxu0 %v1862
      %2523 = vmatpush1.msra.mxu0 %v1861
      %2524 = vmatprep.subr.mxu0 %v1858
      %2525 = vmatpush1.msra.mxu0 %v1857
      %2526 = vmatprep.subr.mxu0 %v1854
      %2527 = vmatpush1.msra.mxu0 %v1853
      %2528 = vmatprep.subr.mxu0 %v1850
      %2529 = vmatpush1.msra.mxu0 %v1849
      %2530 = vmatprep.subr.mxu0 %v1846
      %2531 = vmatpush1.msra.mxu0 %v1845
      %2532 = vmatprep.subr.mxu0 0.0
      %2533 = vmatpush2.msra.mxu0 0.0
      %2534 = vmatprep.subr.mxu0 0.0
      %2535 = vmatpush2.msra.mxu0 0.0
      %2536 = vmatprep.subr.mxu0 0.0
      %2537 = vmatpush2.msra.mxu0 0.0
      %2538 = vmatprep.subr.mxu0 0.0
      %2539 = vmatpush2.msra.mxu0 0.0
      %2540 = vmatprep.subr.mxu0 0.0
      %2541 = vmatpush2.msra.mxu0 0.0
      %2542 = vmatprep.subr.mxu0 0.0
      %2543 = vmatpush2.msra.mxu0 0.0
      %2544 = vmatprep.subr.mxu0 0.0
      %2545 = vmatpush2.msra.mxu0 0.0
      %2546 = vmatprep.subr.mxu0 0.0
      %2547 = vmatpush2.msra.mxu0 0.0
      %2548 = vmatprep.subr.mxu0 0.0
      %2549 = vmatpush2.msra.mxu0 0.0
      %2550 = vmatprep.subr.mxu0 0.0
      %2551 = vmatpush2.msra.mxu0 0.0
      %2552 = vmatprep.subr.mxu0 0.0
      %2553 = vmatpush2.msra.mxu0 0.0
      %2554 = vmatprep.subr.mxu0 0.0
      %2555 = vmatpush2.msra.mxu0 0.0
      %2556 = vmatprep.subr.mxu0 0.0
      %2557 = vmatpush2.msra.mxu0 0.0
      %2558 = vmatprep.subr.mxu0 0.0
      %2559 = vmatpush2.msra.mxu0 0.0
      %2560 = vmatprep.subr.mxu0 0.0
      %2561 = vmatpush2.msra.mxu0 0.0
      %2562 = vmatprep.subr.mxu0 0.0
      %2563 = vmatpush2.msra.mxu0 0.0
      %2564 = vmatprep.mubr.f32.mxu0 0.0
      %2565 = vmatmul.mubr.f32.gmra.mxu0 %v2424
      %v2566 = vpop.f32.mrf.mxu0
      %v2567 = vadd.f32 0.0, %v2566
      %v2568 = vpop.f32.mrf.mxu0
      %v2569 = vadd.f32 0.0, %v2568
      %2570 = vdwg.mxu0
      %v2571 = vadd.f32 %v2425, %v2496
      %v2572 = vadd.f32 %v2426, %v2498
      %v2573 = vadd.f32 %v2427, %v2567
      %v2574 = vadd.f32 %v2428, %v2569
      %v2575 = vxor.u32 %v2571, 2147483648
      %v2576 = vmul.f32 %v2575, 1.442695
      %v2577 = vpow.pop %v2576
      %v2578 = vadd.f32 %v2577, 1.0
      %v2579 = vrcp.pop %v2578
      %v2580 = vmul.f32 1.0, %v2579
      %v2581 = vxor.u32 %v2572, 2147483648
      %v2582 = vmul.f32 %v2581, 1.442695
      %v2583 = vpow.pop %v2582
      %v2584 = vadd.f32 %v2583, 1.0
      %v2585 = vrcp.pop %v2584
      %v2586 = vmul.f32 1.0, %v2585
      %v2587 = vtanh.pop %v2573
      %v2588 = vxor.u32 %v2574, 2147483648
      %v2589 = vmul.f32 %v2588, 1.442695
      %v2590 = vpow.pop %v2589
      %v2591 = vadd.f32 %v2590, 1.0
      %v2592 = vrcp.pop %v2591
      %v2593 = vmul.f32 1.0, %v2592
      %v2594 = vmul.f32 %v2586, %v2422
      %v2595 = vmul.f32 %v2580, %v2587
      %v2596 = vadd.f32 %v2594, %v2595
      %v2597 = vtanh.pop %v2596
      %v2598 = vmul.f32 %v2593, %v2597
      %2599 = vst [vmem:[%s1835] sm:$0xff] %v2598
      %2600 = vst [vmem:[%s1837] sm:$0xff] %v2596
      %p2601 = scmp.eq.s32.totalorder %s20, 1
      // Predicated region
      $region61: #{lstm_forward.1} parent=55 // pred_check
        %p2602 = pneg %p2601
      $region62: #{lstm_forward.1} parent=55 // pred_check_branch
        %2604 = sbr.rel (%p2602) target = $region64
      $region63: #{lstm_forward.1} parent=55 // pred_region
        %v2605 = vld [vmem:[%s7] sm:$0xff]
        %v2606 = vld [vmem:[%s7 + $0x8] sm:$0xff]
        %v2607 = vld [vmem:[%s7 + $0x10] sm:$0xff]
        %v2608 = vld [vmem:[%s7 + $0x18] sm:$0xff]
        %v2609 = vld [vmem:[%s7 + $0x20] sm:$0xff]
        %v2610 = vld [vmem:[%s7 + $0x28] sm:$0xff]
        %v2611 = vld [vmem:[%s7 + $0x30] sm:$0xff]
        %v2612 = vld [vmem:[%s7 + $0x38] sm:$0xff]
        %v2613 = vld [vmem:[%s7 + $0x40] sm:$0xff]
        %v2614 = vld [vmem:[%s7 + $0x48] sm:$0xff]
        %v2615 = vld [vmem:[%s7 + $0x50] sm:$0xff]
        %v2616 = vld [vmem:[%s7 + $0x58] sm:$0xff]
        %v2617 = vld [vmem:[%s7 + $0x60] sm:$0xff]
        %v2618 = vld [vmem:[%s7 + $0x68] sm:$0xff]
        %v2619 = vld [vmem:[%s7 + $0x70] sm:$0xff]
        %v2620 = vld [vmem:[%s7 + $0x78] sm:$0xff]
        %v2621 = vld [vmem:[%s8] sm:$0x1]
        %v2623 = vlaneseq
        %v2624 = vshrl.u32 %v2623, 7
        %v2625 = vsub.s32 0, %v2624
        %v2626 = vrot.slane %v2621, %v2625
        %2628 = vmatprep.subr.mxu0 0.0
        %2629 = vmatpush1.msra.mxu0 %v2620
        %2630 = vmatprep.subr.mxu0 0.0
        %2631 = vmatpush1.msra.mxu0 %v2619
        %2632 = vmatprep.subr.mxu0 0.0
        %2633 = vmatpush1.msra.mxu0 %v2618
        %2634 = vmatprep.subr.mxu0 0.0
        %2635 = vmatpush1.msra.mxu0 %v2617
        %2636 = vmatprep.subr.mxu0 0.0
        %2637 = vmatpush1.msra.mxu0 %v2616
        %2638 = vmatprep.subr.mxu0 0.0
        %2639 = vmatpush1.msra.mxu0 %v2615
        %2640 = vmatprep.subr.mxu0 0.0
        %2641 = vmatpush1.msra.mxu0 %v2614
        %2642 = vmatprep.subr.mxu0 0.0
        %2643 = vmatpush1.msra.mxu0 %v2613
        %2644 = vmatprep.subr.mxu0 0.0
        %2645 = vmatpush1.msra.mxu0 %v2612
        %2646 = vmatprep.subr.mxu0 0.0
        %2647 = vmatpush1.msra.mxu0 %v2611
        %2648 = vmatprep.subr.mxu0 0.0
        %2649 = vmatpush1.msra.mxu0 %v2610
        %2650 = vmatprep.subr.mxu0 0.0
        %2651 = vmatpush1.msra.mxu0 %v2609
        %2652 = vmatprep.subr.mxu0 0.0
        %2653 = vmatpush1.msra.mxu0 %v2608
        %2654 = vmatprep.subr.mxu0 0.0
        %2655 = vmatpush1.msra.mxu0 %v2607
        %2656 = vmatprep.subr.mxu0 0.0
        %2657 = vmatpush1.msra.mxu0 %v2606
        %2658 = vmatprep.subr.mxu0 0.0
        %2659 = vmatpush1.msra.mxu0 %v2605
        %2660 = vmatprep.subr.mxu0 0.0
        %2661 = vmatpush2.msra.mxu0 0.0
        %2662 = vmatprep.subr.mxu0 0.0
        %2663 = vmatpush2.msra.mxu0 0.0
        %2664 = vmatprep.subr.mxu0 0.0
        %2665 = vmatpush2.msra.mxu0 0.0
        %2666 = vmatprep.subr.mxu0 0.0
        %2667 = vmatpush2.msra.mxu0 0.0
        %2668 = vmatprep.subr.mxu0 0.0
        %2669 = vmatpush2.msra.mxu0 0.0
        %2670 = vmatprep.subr.mxu0 0.0
        %2671 = vmatpush2.msra.mxu0 0.0
        %2672 = vmatprep.subr.mxu0 0.0
        %2673 = vmatpush2.msra.mxu0 0.0
        %2674 = vmatprep.subr.mxu0 0.0
        %2675 = vmatpush2.msra.mxu0 0.0
        %2676 = vmatprep.subr.mxu0 0.0
        %2677 = vmatpush2.msra.mxu0 0.0
        %2678 = vmatprep.subr.mxu0 0.0
        %2679 = vmatpush2.msra.mxu0 0.0
        %2680 = vmatprep.subr.mxu0 0.0
        %2681 = vmatpush2.msra.mxu0 0.0
        %2682 = vmatprep.subr.mxu0 0.0
        %2683 = vmatpush2.msra.mxu0 0.0
        %2684 = vmatprep.subr.mxu0 0.0
        %2685 = vmatpush2.msra.mxu0 0.0
        %2686 = vmatprep.subr.mxu0 0.0
        %2687 = vmatpush2.msra.mxu0 0.0
        %2688 = vmatprep.subr.mxu0 0.0
        %2689 = vmatpush2.msra.mxu0 0.0
        %2690 = vmatprep.subr.mxu0 0.0
        %2691 = vmatpush2.msra.mxu0 0.0
        %2692 = vmatprep.mubr.f32.mxu0 0.0
        %2693 = vmatmul.mubr.f32.gmra.mxu0 %v2598
        %v2694 = vpop.f32.mrf.mxu0
        %v2695 = vadd.f32 %v2626, %v2694
        %v2696 = vpop.f32.mrf.mxu0
        %2697 = vdwg.mxu0
        %2698 = vst [vmem:[%s9] sm:$0xff] %v2695
      $region64: #{lstm_forward.1} parent=55 // pred_fallthru
        _
      // Predicated region
      $region65: #{lstm_forward.1} parent=55 // pred_check
        %p2699 = pneg %p227
      $region66: #{lstm_forward.1} parent=55 // pred_check_branch
        %2701 = sbr.rel (%p2699) target = $region68
      $region67: #{lstm_forward.1} parent=55 // pred_region
        _
      $region68: #{lstm_forward.1} parent=55 // pred_fallthru
        _
      // Predicated region
      $region69: #{lstm_forward.1} parent=55 // pred_check
        %p2702 = pneg %p227
      $region70: #{lstm_forward.1} parent=55 // pred_check_branch
        %2704 = sbr.rel (%p2702) target = $region72
      $region71: #{lstm_forward.1} parent=55 // pred_region
        _
      $region72: #{lstm_forward.1} parent=55 // pred_fallthru
        _
    $region56: #{lstm_forward.1} parent=5 // pred_fallthru
      _
    %p2705 = scmp.le.s32.totalorder 2, %s15
    // Predicated region
    $region73: #{lstm_forward.1} parent=5 // pred_check
      %p2706 = pneg %p2705
    $region74: #{lstm_forward.1} parent=5 // pred_check_branch
      %2708 = sbr.rel (%p2706) target = $region76
    $region75: #{lstm_forward.1} parent=5 // pred_region
      %s2709 = ssub.s32 %s15, 2
    $region76: #{lstm_forward.1} parent=5 // pred_fallthru
      _
  $region6: #{lstm_forward.1} parent=0 // loop_footer
    %s19 = sadd.s32 1, %s15
  $region7: #{lstm_forward.1} parent=0 // loop_footer_branch
    %14 = sbr.rel target = $region3
  $region8: #{lstm_forward.1} parent=0 // loop_exit
    _

</llo_original>
